<compile_context>
chip_gen: v5e
topology: v5e:2x2
jax: 0.10.0
libtpu: 0.0.40
codegen_flags: <defaults>
</compile_context>

<pallas_src>
import numpy as np

import jax
import jax.numpy as jnp
from jax.experimental import pallas as pl
from jax.experimental.pallas import tpu as pltpu

NUM_ESTIMATORS = 4
ALPHA = 2
GAMMA = 1
GROUPS = NUM_ESTIMATORS * GAMMA  # groups of every non-first packed layer


# -----------------------------------------------------------------------------
# Fused per-image kernel: conv1+pool1 -> conv2+pool2 -> fc1 -> fc2 -> fc3.
# -----------------------------------------------------------------------------
def _packednet_kernel(x_ref, t1e_ref, t1o_ref, b1_ref, t2e_ref, t2o_ref, b2_ref,
                      wfc1_ref, bfc1_ref, wfc2_ref, bfc2_ref, wfc3_ref, bfc3_ref,
                      out_ref):
    f32, bf16 = jnp.float32, jnp.bfloat16

    # Input rows, parity-split in the wrapper: x_ref is (1, 2, 16, 96) where
    # [0, p, a, :] is image row 2a+p flattened as (W=32, Cin=3) -> 96 lanes.
    # R[m] (14, 96) holds image rows {m + 2r, r = 0..13}.
    def rows(parity, start):
        return x_ref[0, parity, start:start + 14, :].astype(bf16)

    R = [rows(0, 0), rows(1, 0), rows(0, 1), rows(1, 1), rows(0, 2), rows(1, 2)]

    # ---- conv1 (5x5, 3->12) + bias + ReLU + 2x2 maxpool, fused -------------
    # a_xy[r, k*12 + c] = raw conv1 at (oh = 2r + x, ow = 2k + y, channel c).
    a_ee = jnp.zeros((14, 168), f32)
    a_eo = jnp.zeros((14, 168), f32)
    a_oe = jnp.zeros((14, 168), f32)
    a_oo = jnp.zeros((14, 168), f32)
    for kh in range(5):
        te = t1e_ref[kh]          # (96, 168) bf16, even output columns
        to = t1o_ref[kh]          # (96, 168) bf16, odd output columns
        a_ee += jnp.dot(R[kh], te, preferred_element_type=f32)
        a_eo += jnp.dot(R[kh], to, preferred_element_type=f32)
        a_oe += jnp.dot(R[kh + 1], te, preferred_element_type=f32)
        a_oo += jnp.dot(R[kh + 1], to, preferred_element_type=f32)
    pooled1 = jnp.maximum(jnp.maximum(a_ee, a_eo), jnp.maximum(a_oe, a_oo))
    # pool(relu(conv + b)) == relu(max_window(conv) + b): bias is constant per
    # channel over the 2x2 window and ReLU is monotone.
    pooled1 = jnp.maximum(pooled1 + b1_ref[...], 0.0)       # (14, 14*12) f32

    # ---- conv2 (5x5, 12->32, groups=4 as block-diagonal dense) -------------
    a2e = jnp.zeros((10, 160), f32)
    a2o = jnp.zeros((10, 160), f32)
    for kh in range(5):
        slab = pooled1[kh:kh + 10, :].astype(bf16)          # (10, 168)
        a2e += jnp.dot(slab, t2e_ref[kh], preferred_element_type=f32)
        a2o += jnp.dot(slab, t2o_ref[kh], preferred_element_type=f32)
    wmax2 = jnp.maximum(a2e, a2o)                           # (10, 5*32) f32

    # ---- pool2 rows + bias + ReLU + fc1 (grouped 800->240), fused ----------
    acc = jnp.zeros((1, 240), f32)
    for r in range(5):
        row = jnp.maximum(wmax2[2 * r:2 * r + 1, :],
                          wmax2[2 * r + 1:2 * r + 2, :])    # (1, 160)
        row = jnp.maximum(row + b2_ref[...], 0.0).astype(bf16)
        acc += jnp.dot(row, wfc1_ref[r * 160:(r + 1) * 160, :],
                       preferred_element_type=f32)
    h1 = jnp.maximum(acc + bfc1_ref[...], 0.0).astype(bf16)            # (1, 240)

    # ---- fc2 / fc3 (block-diagonal grouped linears) ------------------------
    h2 = jnp.dot(h1, wfc2_ref[...], preferred_element_type=f32) + bfc2_ref[...]
    h2 = jnp.maximum(h2, 0.0).astype(bf16)                             # (1, 168)
    logits = jnp.dot(h2, wfc3_ref[...], preferred_element_type=f32) + bfc3_ref[...]
    out_ref[0] = logits                                                # (1, 40)


# -----------------------------------------------------------------------------
# Deterministic parameter construction (synthetic, torch-layer semantics).
# -----------------------------------------------------------------------------
def init_params(key):
    ks = jax.random.split(key, 10)

    def w_init(k, shape, fan_in):
        return jax.random.normal(k, shape, jnp.float32) * (1.0 / jnp.sqrt(fan_in))

    p = {}
    # conv1: PackedConv2d(3, 6, 5, first=True) -> dense Conv2d(3, 12, 5)
    p["w_conv1"] = w_init(ks[0], (5, 5, 3, 12), 5 * 5 * 3)
    p["b_conv1"] = w_init(ks[1], (12,), 5 * 5 * 3)
    # conv2: PackedConv2d(6, 16, 5) -> Conv2d(12, 32, 5, groups=4): per-group
    # weights (cin_g=3 -> cout_g=8).
    p["w_conv2"] = w_init(ks[2], (GROUPS, 5, 5, 3, 8), 5 * 5 * 3)
    p["b_conv2"] = w_init(ks[3], (32,), 5 * 5 * 3)
    # fc1: 800 -> 240, 4 groups of 200 -> 60 (torch channel-major input order)
    p["w_fc1"] = w_init(ks[4], (GROUPS, 200, 60), 200)
    p["b_fc1"] = w_init(ks[5], (GROUPS, 60), 200)
    # fc2: 240 -> 168, 4 groups of 60 -> 42
    p["w_fc2"] = w_init(ks[6], (GROUPS, 60, 42), 60)
    p["b_fc2"] = w_init(ks[7], (GROUPS, 42), 60)
    # fc3 (last): 168 -> 40, 4 groups of 42 -> 10
    p["w_fc3"] = w_init(ks[8], (GROUPS, 42, 10), 42)
    p["b_fc3"] = w_init(ks[9], (GROUPS, 10), 42)
    return p


def prepare_kernel_params(p):
    """Convert torch-semantic params into the fused-kernel layout (numpy, once)."""
    f32 = np.float32
    W1 = np.asarray(p["w_conv1"], f32)                  # (5,5,3,12)
    b1 = np.asarray(p["b_conv1"], f32).reshape(12)
    W2g = np.asarray(p["w_conv2"], f32)                 # (4,5,5,3,8)
    b2 = np.asarray(p["b_conv2"], f32).reshape(32)

    # Exact block-diagonal dense equivalent of the grouped conv2.
    W2 = np.zeros((5, 5, 12, 32), f32)
    for g in range(GROUPS):
        W2[:, :, 3 * g:3 * (g + 1), 8 * g:8 * (g + 1)] = W2g[g]

    def toeplitz(W, in_w, cin, cout, n_pool):
        """Width-collapsed im2col weights for even/odd (pre-pool) output cols.

        Te[kh][w*cin+ci, k*cout+co] = W[kh, w-2k,   ci, co] if 0 <= w-2k   < 5
        To[kh][w*cin+ci, k*cout+co] = W[kh, w-2k-1, ci, co] if 0 <= w-2k-1 < 5
        """
        Te = np.zeros((5, in_w * cin, n_pool * cout), f32)
        To = np.zeros((5, in_w * cin, n_pool * cout), f32)
        for kh in range(5):
            for k in range(n_pool):
                for kw in range(5):
                    we = 2 * k + kw
                    wo = 2 * k + 1 + kw
                    Te[kh, we * cin:(we + 1) * cin, k * cout:(k + 1) * cout] = W[kh, kw]
                    To[kh, wo * cin:(wo + 1) * cin, k * cout:(k + 1) * cout] = W[kh, kw]
        return Te, To

    t1e, t1o = toeplitz(W1, 32, 3, 12, 14)              # (5, 96, 168)
    t2e, t2o = toeplitz(W2, 14, 12, 32, 5)              # (5, 168, 160)
    b1t = np.tile(b1, 14)[None, :]                      # (1, 168), lane = w*12+c
    b2t = np.tile(b2, 5)[None, :]                       # (1, 160), lane = w*32+c

    def block_diag(wg):                                 # (G, fin, fout) -> dense
        G, fi, fo = wg.shape
        out = np.zeros((G * fi, G * fo), f32)
        for g in range(G):
            out[g * fi:(g + 1) * fi, g * fo:(g + 1) * fo] = wg[g]
        return out

    # fc1: torch flatten(1) is channel-major (c*25 + h*5 + w); the kernel feeds
    # HWC-flattened pooled features (h*160 + w*32 + c), so permute weight rows.
    wfc1_t = block_diag(np.asarray(p["w_fc1"], f32))    # (800, 240), torch rows
    wfc1 = wfc1_t.reshape(32, 5, 5, 240).transpose(1, 2, 0, 3).reshape(800, 240)
    wfc2 = block_diag(np.asarray(p["w_fc2"], f32))      # (240, 168)
    wfc3 = block_diag(np.asarray(p["w_fc3"], f32))      # (168, 40)
    bfc1 = np.asarray(p["b_fc1"], f32).reshape(1, 240)
    bfc2 = np.asarray(p["b_fc2"], f32).reshape(1, 168)
    bfc3 = np.asarray(p["b_fc3"], f32).reshape(1, 40)

    bf16 = jnp.bfloat16
    return {
        "t1e": jnp.asarray(t1e, bf16), "t1o": jnp.asarray(t1o, bf16),
        "b1t": jnp.asarray(b1t, jnp.float32),
        "t2e": jnp.asarray(t2e, bf16), "t2o": jnp.asarray(t2o, bf16),
        "b2t": jnp.asarray(b2t, jnp.float32),
        "wfc1": jnp.asarray(wfc1, bf16), "bfc1": jnp.asarray(bfc1, jnp.float32),
        "wfc2": jnp.asarray(wfc2, bf16), "bfc2": jnp.asarray(bfc2, jnp.float32),
        "wfc3": jnp.asarray(wfc3, bf16), "bfc3": jnp.asarray(bfc3, jnp.float32),
    }


@jax.jit
def packed_net_forward(kp, x_nchw):
    # x_nchw: (B, 3, 32, 32) float32, same convention as the PyTorch module.
    bsz = x_nchw.shape[0]
    m = NUM_ESTIMATORS
    # NCHW -> NHWC -> (B, 32 rows, W*C=96 lanes) -> parity-split rows (B,2,16,96)
    x = jnp.transpose(x_nchw, (0, 2, 3, 1)).reshape(bsz, 32, 96)
    x = x.reshape(bsz, 16, 2, 96).transpose(0, 2, 1, 3)

    const3 = lambda b: (0, 0, 0)
    const2 = lambda b: (0, 0)
    out = pl.pallas_call(
        _packednet_kernel,
        out_shape=jax.ShapeDtypeStruct((bsz, 1, 40), jnp.float32),
        grid=(bsz,),
        in_specs=[
            pl.BlockSpec((1, 2, 16, 96), lambda b: (b, 0, 0, 0)),   # image
            pl.BlockSpec((5, 96, 168), const3),                     # t1e
            pl.BlockSpec((5, 96, 168), const3),                     # t1o
            pl.BlockSpec((1, 168), const2),                         # b1t
            pl.BlockSpec((5, 168, 160), const3),                    # t2e
            pl.BlockSpec((5, 168, 160), const3),                    # t2o
            pl.BlockSpec((1, 160), const2),                         # b2t
            pl.BlockSpec((800, 240), const2),                       # wfc1
            pl.BlockSpec((1, 240), const2),                         # bfc1
            pl.BlockSpec((240, 168), const2),                       # wfc2
            pl.BlockSpec((1, 168), const2),                         # bfc2
            pl.BlockSpec((168, 40), const2),                        # wfc3
            pl.BlockSpec((1, 40), const2),                          # bfc3
        ],
        out_specs=pl.BlockSpec((1, 1, 40), lambda b: (b, 0, 0)),
        compiler_params=pltpu.CompilerParams(
            dimension_semantics=("parallel",)),
    )(x, kp["t1e"], kp["t1o"], kp["b1t"], kp["t2e"], kp["t2o"], kp["b2t"],
      kp["wfc1"], kp["bfc1"], kp["wfc2"], kp["bfc2"], kp["wfc3"], kp["bfc3"])

    # PackedLinear(last=True) unpacks estimators into the batch:
    # "b (m c) -> (m b) c"
    out = out.reshape(bsz, m, 10)
    return jnp.transpose(out, (1, 0, 2)).reshape(m * bsz, 10)


if __name__ == "__main__":
    params = init_params(jax.random.PRNGKey(42))
    kparams = prepare_kernel_params(params)
    x = jax.random.normal(jax.random.PRNGKey(0), (2, 3, 32, 32), jnp.float32)
    out = packed_net_forward(kparams, x)
    out = jax.block_until_ready(out)
    assert out.shape == (NUM_ESTIMATORS * 2, 10), out.shape
    assert jnp.all(jnp.isfinite(out))
    print("KERNEL_OK")
</pallas_src>

<mosaic_0001>
module attributes {stable_mosaic.version = 11 : i64} {
  func.func @_packednet_kernel(%arg0: i32, %arg1: memref<1x2x16x96xf32, #tpu.memory_space<vmem>>, %arg2: memref<5x96x168xbf16, #tpu.memory_space<vmem>>, %arg3: memref<5x96x168xbf16, #tpu.memory_space<vmem>>, %arg4: memref<1x168xf32, #tpu.memory_space<vmem>>, %arg5: memref<5x168x160xbf16, #tpu.memory_space<vmem>>, %arg6: memref<5x168x160xbf16, #tpu.memory_space<vmem>>, %arg7: memref<1x160xf32, #tpu.memory_space<vmem>>, %arg8: memref<800x240xbf16, #tpu.memory_space<vmem>>, %arg9: memref<1x240xf32, #tpu.memory_space<vmem>>, %arg10: memref<240x168xbf16, #tpu.memory_space<vmem>>, %arg11: memref<1x168xf32, #tpu.memory_space<vmem>>, %arg12: memref<168x40xbf16, #tpu.memory_space<vmem>>, %arg13: memref<1x40xf32, #tpu.memory_space<vmem>>, %arg14: memref<1x1x40xf32, #tpu.memory_space<vmem>>) attributes {dimension_semantics = [#tpu.dimension_semantics<parallel>], iteration_bounds = array<i64: 2>, scalar_prefetch = 0 : i64, scratch_operands = 0 : i64, tpu.core_type = #tpu.core_type<tc>, window_params = [{transform_indices = @transform_0, window_bounds = array<i64: 1, 2, 16, 96>}, {pipeline_mode = #tpu.pipeline_mode<synchronous>, transform_indices = @transform_1, window_bounds = array<i64: 5, 96, 168>}, {pipeline_mode = #tpu.pipeline_mode<synchronous>, transform_indices = @transform_2, window_bounds = array<i64: 5, 96, 168>}, {pipeline_mode = #tpu.pipeline_mode<synchronous>, transform_indices = @transform_3, window_bounds = array<i64: 1, 168>}, {pipeline_mode = #tpu.pipeline_mode<synchronous>, transform_indices = @transform_4, window_bounds = array<i64: 5, 168, 160>}, {pipeline_mode = #tpu.pipeline_mode<synchronous>, transform_indices = @transform_5, window_bounds = array<i64: 5, 168, 160>}, {pipeline_mode = #tpu.pipeline_mode<synchronous>, transform_indices = @transform_6, window_bounds = array<i64: 1, 160>}, {pipeline_mode = #tpu.pipeline_mode<synchronous>, transform_indices = @transform_7, window_bounds = array<i64: 800, 240>}, {pipeline_mode = #tpu.pipeline_mode<synchronous>, transform_indices = @transform_8, window_bounds = array<i64: 1, 240>}, {pipeline_mode = #tpu.pipeline_mode<synchronous>, transform_indices = @transform_9, window_bounds = array<i64: 240, 168>}, {pipeline_mode = #tpu.pipeline_mode<synchronous>, transform_indices = @transform_10, window_bounds = array<i64: 1, 168>}, {pipeline_mode = #tpu.pipeline_mode<synchronous>, transform_indices = @transform_11, window_bounds = array<i64: 168, 40>}, {pipeline_mode = #tpu.pipeline_mode<synchronous>, transform_indices = @transform_12, window_bounds = array<i64: 1, 40>}, {transform_indices = @transform_13, window_bounds = array<i64: 1, 1, 40>}]} {
    %c0 = arith.constant 0 : index
    %c0_0 = arith.constant 0 : index
    %c0_1 = arith.constant 0 : index
    %c0_2 = arith.constant 0 : index
    %0 = vector.load %arg1[%c0, %c0_0, %c0_1, %c0_2] : memref<1x2x16x96xf32, #tpu.memory_space<vmem>>, vector<1x1x14x96xf32>
    %1 = vector.shape_cast %0 : vector<1x1x14x96xf32> to vector<14x96xf32>
    %2 = arith.truncf %1 : vector<14x96xf32> to vector<14x96xbf16>
    %c0_3 = arith.constant 0 : index
    %c1 = arith.constant 1 : index
    %c0_4 = arith.constant 0 : index
    %c0_5 = arith.constant 0 : index
    %3 = vector.load %arg1[%c0_3, %c1, %c0_4, %c0_5] : memref<1x2x16x96xf32, #tpu.memory_space<vmem>>, vector<1x1x14x96xf32>
    %4 = vector.shape_cast %3 : vector<1x1x14x96xf32> to vector<14x96xf32>
    %5 = arith.truncf %4 : vector<14x96xf32> to vector<14x96xbf16>
    %c0_6 = arith.constant 0 : index
    %c0_7 = arith.constant 0 : index
    %c1_8 = arith.constant 1 : index
    %c0_9 = arith.constant 0 : index
    %6 = vector.load %arg1[%c0_6, %c0_7, %c1_8, %c0_9] : memref<1x2x16x96xf32, #tpu.memory_space<vmem>>, vector<1x1x14x96xf32>
    %7 = vector.shape_cast %6 : vector<1x1x14x96xf32> to vector<14x96xf32>
    %8 = arith.truncf %7 : vector<14x96xf32> to vector<14x96xbf16>
    %c0_10 = arith.constant 0 : index
    %c1_11 = arith.constant 1 : index
    %c1_12 = arith.constant 1 : index
    %c0_13 = arith.constant 0 : index
    %9 = vector.load %arg1[%c0_10, %c1_11, %c1_12, %c0_13] : memref<1x2x16x96xf32, #tpu.memory_space<vmem>>, vector<1x1x14x96xf32>
    %10 = vector.shape_cast %9 : vector<1x1x14x96xf32> to vector<14x96xf32>
    %11 = arith.truncf %10 : vector<14x96xf32> to vector<14x96xbf16>
    %c0_14 = arith.constant 0 : index
    %c0_15 = arith.constant 0 : index
    %c2 = arith.constant 2 : index
    %c0_16 = arith.constant 0 : index
    %12 = vector.load %arg1[%c0_14, %c0_15, %c2, %c0_16] : memref<1x2x16x96xf32, #tpu.memory_space<vmem>>, vector<1x1x14x96xf32>
    %13 = vector.shape_cast %12 : vector<1x1x14x96xf32> to vector<14x96xf32>
    %14 = arith.truncf %13 : vector<14x96xf32> to vector<14x96xbf16>
    %c0_17 = arith.constant 0 : index
    %c1_18 = arith.constant 1 : index
    %c2_19 = arith.constant 2 : index
    %c0_20 = arith.constant 0 : index
    %15 = vector.load %arg1[%c0_17, %c1_18, %c2_19, %c0_20] : memref<1x2x16x96xf32, #tpu.memory_space<vmem>>, vector<1x1x14x96xf32>
    %16 = vector.shape_cast %15 : vector<1x1x14x96xf32> to vector<14x96xf32>
    %17 = arith.truncf %16 : vector<14x96xf32> to vector<14x96xbf16>
    %cst = arith.constant 0.000000e+00 : f32
    %18 = vector.broadcast %cst : f32 to vector<14x168xf32>
    %cst_21 = arith.constant 0.000000e+00 : f32
    %19 = vector.broadcast %cst_21 : f32 to vector<14x168xf32>
    %cst_22 = arith.constant 0.000000e+00 : f32
    %20 = vector.broadcast %cst_22 : f32 to vector<14x168xf32>
    %cst_23 = arith.constant 0.000000e+00 : f32
    %21 = vector.broadcast %cst_23 : f32 to vector<14x168xf32>
    %c0_24 = arith.constant 0 : index
    %c0_25 = arith.constant 0 : index
    %c0_26 = arith.constant 0 : index
    %22 = vector.load %arg2[%c0_24, %c0_25, %c0_26] : memref<5x96x168xbf16, #tpu.memory_space<vmem>>, vector<1x96x168xbf16>
    %23 = vector.shape_cast %22 : vector<1x96x168xbf16> to vector<96x168xbf16>
    %c0_27 = arith.constant 0 : index
    %c0_28 = arith.constant 0 : index
    %c0_29 = arith.constant 0 : index
    %24 = vector.load %arg3[%c0_27, %c0_28, %c0_29] : memref<5x96x168xbf16, #tpu.memory_space<vmem>>, vector<1x96x168xbf16>
    %25 = vector.shape_cast %24 : vector<1x96x168xbf16> to vector<96x168xbf16>
    %cst_30 = arith.constant dense<0.000000e+00> : vector<14x168xf32>
    %26 = tpu.matmul %2, %23, %cst_30 {dimension_numbers = #tpu.dot_dimension_numbers<[1], [0], [0], [1], [0, 0, 1, 1], [], []>} : vector<14x96xbf16>, vector<96x168xbf16>, vector<14x168xf32> -> vector<14x168xf32>
    %27 = arith.addf %18, %26 : vector<14x168xf32>
    %cst_31 = arith.constant dense<0.000000e+00> : vector<14x168xf32>
    %28 = tpu.matmul %2, %25, %cst_31 {dimension_numbers = #tpu.dot_dimension_numbers<[1], [0], [0], [1], [0, 0, 1, 1], [], []>} : vector<14x96xbf16>, vector<96x168xbf16>, vector<14x168xf32> -> vector<14x168xf32>
    %29 = arith.addf %19, %28 : vector<14x168xf32>
    %cst_32 = arith.constant dense<0.000000e+00> : vector<14x168xf32>
    %30 = tpu.matmul %5, %23, %cst_32 {dimension_numbers = #tpu.dot_dimension_numbers<[1], [0], [0], [1], [0, 0, 1, 1], [], []>} : vector<14x96xbf16>, vector<96x168xbf16>, vector<14x168xf32> -> vector<14x168xf32>
    %31 = arith.addf %20, %30 : vector<14x168xf32>
    %cst_33 = arith.constant dense<0.000000e+00> : vector<14x168xf32>
    %32 = tpu.matmul %5, %25, %cst_33 {dimension_numbers = #tpu.dot_dimension_numbers<[1], [0], [0], [1], [0, 0, 1, 1], [], []>} : vector<14x96xbf16>, vector<96x168xbf16>, vector<14x168xf32> -> vector<14x168xf32>
    %33 = arith.addf %21, %32 : vector<14x168xf32>
    %c1_34 = arith.constant 1 : index
    %c0_35 = arith.constant 0 : index
    %c0_36 = arith.constant 0 : index
    %34 = vector.load %arg2[%c1_34, %c0_35, %c0_36] : memref<5x96x168xbf16, #tpu.memory_space<vmem>>, vector<1x96x168xbf16>
    %35 = vector.shape_cast %34 : vector<1x96x168xbf16> to vector<96x168xbf16>
    %c1_37 = arith.constant 1 : index
    %c0_38 = arith.constant 0 : index
    %c0_39 = arith.constant 0 : index
    %36 = vector.load %arg3[%c1_37, %c0_38, %c0_39] : memref<5x96x168xbf16, #tpu.memory_space<vmem>>, vector<1x96x168xbf16>
    %37 = vector.shape_cast %36 : vector<1x96x168xbf16> to vector<96x168xbf16>
    %cst_40 = arith.constant dense<0.000000e+00> : vector<14x168xf32>
    %38 = tpu.matmul %5, %35, %cst_40 {dimension_numbers = #tpu.dot_dimension_numbers<[1], [0], [0], [1], [0, 0, 1, 1], [], []>} : vector<14x96xbf16>, vector<96x168xbf16>, vector<14x168xf32> -> vector<14x168xf32>
    %39 = arith.addf %27, %38 : vector<14x168xf32>
    %cst_41 = arith.constant dense<0.000000e+00> : vector<14x168xf32>
    %40 = tpu.matmul %5, %37, %cst_41 {dimension_numbers = #tpu.dot_dimension_numbers<[1], [0], [0], [1], [0, 0, 1, 1], [], []>} : vector<14x96xbf16>, vector<96x168xbf16>, vector<14x168xf32> -> vector<14x168xf32>
    %41 = arith.addf %29, %40 : vector<14x168xf32>
    %cst_42 = arith.constant dense<0.000000e+00> : vector<14x168xf32>
    %42 = tpu.matmul %8, %35, %cst_42 {dimension_numbers = #tpu.dot_dimension_numbers<[1], [0], [0], [1], [0, 0, 1, 1], [], []>} : vector<14x96xbf16>, vector<96x168xbf16>, vector<14x168xf32> -> vector<14x168xf32>
    %43 = arith.addf %31, %42 : vector<14x168xf32>
    %cst_43 = arith.constant dense<0.000000e+00> : vector<14x168xf32>
    %44 = tpu.matmul %8, %37, %cst_43 {dimension_numbers = #tpu.dot_dimension_numbers<[1], [0], [0], [1], [0, 0, 1, 1], [], []>} : vector<14x96xbf16>, vector<96x168xbf16>, vector<14x168xf32> -> vector<14x168xf32>
    %45 = arith.addf %33, %44 : vector<14x168xf32>
    %c2_44 = arith.constant 2 : index
    %c0_45 = arith.constant 0 : index
    %c0_46 = arith.constant 0 : index
    %46 = vector.load %arg2[%c2_44, %c0_45, %c0_46] : memref<5x96x168xbf16, #tpu.memory_space<vmem>>, vector<1x96x168xbf16>
    %47 = vector.shape_cast %46 : vector<1x96x168xbf16> to vector<96x168xbf16>
    %c2_47 = arith.constant 2 : index
    %c0_48 = arith.constant 0 : index
    %c0_49 = arith.constant 0 : index
    %48 = vector.load %arg3[%c2_47, %c0_48, %c0_49] : memref<5x96x168xbf16, #tpu.memory_space<vmem>>, vector<1x96x168xbf16>
    %49 = vector.shape_cast %48 : vector<1x96x168xbf16> to vector<96x168xbf16>
    %cst_50 = arith.constant dense<0.000000e+00> : vector<14x168xf32>
    %50 = tpu.matmul %8, %47, %cst_50 {dimension_numbers = #tpu.dot_dimension_numbers<[1], [0], [0], [1], [0, 0, 1, 1], [], []>} : vector<14x96xbf16>, vector<96x168xbf16>, vector<14x168xf32> -> vector<14x168xf32>
    %51 = arith.addf %39, %50 : vector<14x168xf32>
    %cst_51 = arith.constant dense<0.000000e+00> : vector<14x168xf32>
    %52 = tpu.matmul %8, %49, %cst_51 {dimension_numbers = #tpu.dot_dimension_numbers<[1], [0], [0], [1], [0, 0, 1, 1], [], []>} : vector<14x96xbf16>, vector<96x168xbf16>, vector<14x168xf32> -> vector<14x168xf32>
    %53 = arith.addf %41, %52 : vector<14x168xf32>
    %cst_52 = arith.constant dense<0.000000e+00> : vector<14x168xf32>
    %54 = tpu.matmul %11, %47, %cst_52 {dimension_numbers = #tpu.dot_dimension_numbers<[1], [0], [0], [1], [0, 0, 1, 1], [], []>} : vector<14x96xbf16>, vector<96x168xbf16>, vector<14x168xf32> -> vector<14x168xf32>
    %55 = arith.addf %43, %54 : vector<14x168xf32>
    %cst_53 = arith.constant dense<0.000000e+00> : vector<14x168xf32>
    %56 = tpu.matmul %11, %49, %cst_53 {dimension_numbers = #tpu.dot_dimension_numbers<[1], [0], [0], [1], [0, 0, 1, 1], [], []>} : vector<14x96xbf16>, vector<96x168xbf16>, vector<14x168xf32> -> vector<14x168xf32>
    %57 = arith.addf %45, %56 : vector<14x168xf32>
    %c3 = arith.constant 3 : index
    %c0_54 = arith.constant 0 : index
    %c0_55 = arith.constant 0 : index
    %58 = vector.load %arg2[%c3, %c0_54, %c0_55] : memref<5x96x168xbf16, #tpu.memory_space<vmem>>, vector<1x96x168xbf16>
    %59 = vector.shape_cast %58 : vector<1x96x168xbf16> to vector<96x168xbf16>
    %c3_56 = arith.constant 3 : index
    %c0_57 = arith.constant 0 : index
    %c0_58 = arith.constant 0 : index
    %60 = vector.load %arg3[%c3_56, %c0_57, %c0_58] : memref<5x96x168xbf16, #tpu.memory_space<vmem>>, vector<1x96x168xbf16>
    %61 = vector.shape_cast %60 : vector<1x96x168xbf16> to vector<96x168xbf16>
    %cst_59 = arith.constant dense<0.000000e+00> : vector<14x168xf32>
    %62 = tpu.matmul %11, %59, %cst_59 {dimension_numbers = #tpu.dot_dimension_numbers<[1], [0], [0], [1], [0, 0, 1, 1], [], []>} : vector<14x96xbf16>, vector<96x168xbf16>, vector<14x168xf32> -> vector<14x168xf32>
    %63 = arith.addf %51, %62 : vector<14x168xf32>
    %cst_60 = arith.constant dense<0.000000e+00> : vector<14x168xf32>
    %64 = tpu.matmul %11, %61, %cst_60 {dimension_numbers = #tpu.dot_dimension_numbers<[1], [0], [0], [1], [0, 0, 1, 1], [], []>} : vector<14x96xbf16>, vector<96x168xbf16>, vector<14x168xf32> -> vector<14x168xf32>
    %65 = arith.addf %53, %64 : vector<14x168xf32>
    %cst_61 = arith.constant dense<0.000000e+00> : vector<14x168xf32>
    %66 = tpu.matmul %14, %59, %cst_61 {dimension_numbers = #tpu.dot_dimension_numbers<[1], [0], [0], [1], [0, 0, 1, 1], [], []>} : vector<14x96xbf16>, vector<96x168xbf16>, vector<14x168xf32> -> vector<14x168xf32>
    %67 = arith.addf %55, %66 : vector<14x168xf32>
    %cst_62 = arith.constant dense<0.000000e+00> : vector<14x168xf32>
    %68 = tpu.matmul %14, %61, %cst_62 {dimension_numbers = #tpu.dot_dimension_numbers<[1], [0], [0], [1], [0, 0, 1, 1], [], []>} : vector<14x96xbf16>, vector<96x168xbf16>, vector<14x168xf32> -> vector<14x168xf32>
    %69 = arith.addf %57, %68 : vector<14x168xf32>
    %c4 = arith.constant 4 : index
    %c0_63 = arith.constant 0 : index
    %c0_64 = arith.constant 0 : index
    %70 = vector.load %arg2[%c4, %c0_63, %c0_64] : memref<5x96x168xbf16, #tpu.memory_space<vmem>>, vector<1x96x168xbf16>
    %71 = vector.shape_cast %70 : vector<1x96x168xbf16> to vector<96x168xbf16>
    %c4_65 = arith.constant 4 : index
    %c0_66 = arith.constant 0 : index
    %c0_67 = arith.constant 0 : index
    %72 = vector.load %arg3[%c4_65, %c0_66, %c0_67] : memref<5x96x168xbf16, #tpu.memory_space<vmem>>, vector<1x96x168xbf16>
    %73 = vector.shape_cast %72 : vector<1x96x168xbf16> to vector<96x168xbf16>
    %cst_68 = arith.constant dense<0.000000e+00> : vector<14x168xf32>
    %74 = tpu.matmul %14, %71, %cst_68 {dimension_numbers = #tpu.dot_dimension_numbers<[1], [0], [0], [1], [0, 0, 1, 1], [], []>} : vector<14x96xbf16>, vector<96x168xbf16>, vector<14x168xf32> -> vector<14x168xf32>
    %75 = arith.addf %63, %74 : vector<14x168xf32>
    %cst_69 = arith.constant dense<0.000000e+00> : vector<14x168xf32>
    %76 = tpu.matmul %14, %73, %cst_69 {dimension_numbers = #tpu.dot_dimension_numbers<[1], [0], [0], [1], [0, 0, 1, 1], [], []>} : vector<14x96xbf16>, vector<96x168xbf16>, vector<14x168xf32> -> vector<14x168xf32>
    %77 = arith.addf %65, %76 : vector<14x168xf32>
    %cst_70 = arith.constant dense<0.000000e+00> : vector<14x168xf32>
    %78 = tpu.matmul %17, %71, %cst_70 {dimension_numbers = #tpu.dot_dimension_numbers<[1], [0], [0], [1], [0, 0, 1, 1], [], []>} : vector<14x96xbf16>, vector<96x168xbf16>, vector<14x168xf32> -> vector<14x168xf32>
    %79 = arith.addf %67, %78 : vector<14x168xf32>
    %cst_71 = arith.constant dense<0.000000e+00> : vector<14x168xf32>
    %80 = tpu.matmul %17, %73, %cst_71 {dimension_numbers = #tpu.dot_dimension_numbers<[1], [0], [0], [1], [0, 0, 1, 1], [], []>} : vector<14x96xbf16>, vector<96x168xbf16>, vector<14x168xf32> -> vector<14x168xf32>
    %81 = arith.addf %69, %80 : vector<14x168xf32>
    %82 = arith.maximumf %75, %77 : vector<14x168xf32>
    %83 = arith.maximumf %79, %81 : vector<14x168xf32>
    %84 = arith.maximumf %82, %83 : vector<14x168xf32>
    %c0_72 = arith.constant 0 : index
    %c0_73 = arith.constant 0 : index
    %85 = vector.load %arg4[%c0_72, %c0_73] : memref<1x168xf32, #tpu.memory_space<vmem>>, vector<1x168xf32>
    %86 = vector.broadcast %85 : vector<1x168xf32> to vector<14x168xf32>
    %87 = arith.addf %84, %86 : vector<14x168xf32>
    %cst_74 = arith.constant 0.000000e+00 : f32
    %88 = vector.broadcast %cst_74 : f32 to vector<14x168xf32>
    %89 = arith.maximumf %87, %88 : vector<14x168xf32>
    %cst_75 = arith.constant 0.000000e+00 : f32
    %90 = vector.broadcast %cst_75 : f32 to vector<10x160xf32>
    %cst_76 = arith.constant 0.000000e+00 : f32
    %91 = vector.broadcast %cst_76 : f32 to vector<10x160xf32>
    %92 = vector.extract_strided_slice %89 {offsets = [0, 0], sizes = [10, 168], strides = [1, 1]} : vector<14x168xf32> to vector<10x168xf32>
    %93 = arith.truncf %92 : vector<10x168xf32> to vector<10x168xbf16>
    %c0_77 = arith.constant 0 : index
    %c0_78 = arith.constant 0 : index
    %c0_79 = arith.constant 0 : index
    %94 = vector.load %arg5[%c0_77, %c0_78, %c0_79] : memref<5x168x160xbf16, #tpu.memory_space<vmem>>, vector<1x168x160xbf16>
    %95 = vector.shape_cast %94 : vector<1x168x160xbf16> to vector<168x160xbf16>
    %cst_80 = arith.constant dense<0.000000e+00> : vector<10x160xf32>
    %96 = tpu.matmul %93, %95, %cst_80 {dimension_numbers = #tpu.dot_dimension_numbers<[1], [0], [0], [1], [0, 0, 1, 1], [], []>} : vector<10x168xbf16>, vector<168x160xbf16>, vector<10x160xf32> -> vector<10x160xf32>
    %97 = arith.addf %90, %96 : vector<10x160xf32>
    %c0_81 = arith.constant 0 : index
    %c0_82 = arith.constant 0 : index
    %c0_83 = arith.constant 0 : index
    %98 = vector.load %arg6[%c0_81, %c0_82, %c0_83] : memref<5x168x160xbf16, #tpu.memory_space<vmem>>, vector<1x168x160xbf16>
    %99 = vector.shape_cast %98 : vector<1x168x160xbf16> to vector<168x160xbf16>
    %cst_84 = arith.constant dense<0.000000e+00> : vector<10x160xf32>
    %100 = tpu.matmul %93, %99, %cst_84 {dimension_numbers = #tpu.dot_dimension_numbers<[1], [0], [0], [1], [0, 0, 1, 1], [], []>} : vector<10x168xbf16>, vector<168x160xbf16>, vector<10x160xf32> -> vector<10x160xf32>
    %101 = arith.addf %91, %100 : vector<10x160xf32>
    %102 = vector.extract_strided_slice %89 {offsets = [1, 0], sizes = [10, 168], strides = [1, 1]} : vector<14x168xf32> to vector<10x168xf32>
    %103 = arith.truncf %102 : vector<10x168xf32> to vector<10x168xbf16>
    %c1_85 = arith.constant 1 : index
    %c0_86 = arith.constant 0 : index
    %c0_87 = arith.constant 0 : index
    %104 = vector.load %arg5[%c1_85, %c0_86, %c0_87] : memref<5x168x160xbf16, #tpu.memory_space<vmem>>, vector<1x168x160xbf16>
    %105 = vector.shape_cast %104 : vector<1x168x160xbf16> to vector<168x160xbf16>
    %cst_88 = arith.constant dense<0.000000e+00> : vector<10x160xf32>
    %106 = tpu.matmul %103, %105, %cst_88 {dimension_numbers = #tpu.dot_dimension_numbers<[1], [0], [0], [1], [0, 0, 1, 1], [], []>} : vector<10x168xbf16>, vector<168x160xbf16>, vector<10x160xf32> -> vector<10x160xf32>
    %107 = arith.addf %97, %106 : vector<10x160xf32>
    %c1_89 = arith.constant 1 : index
    %c0_90 = arith.constant 0 : index
    %c0_91 = arith.constant 0 : index
    %108 = vector.load %arg6[%c1_89, %c0_90, %c0_91] : memref<5x168x160xbf16, #tpu.memory_space<vmem>>, vector<1x168x160xbf16>
    %109 = vector.shape_cast %108 : vector<1x168x160xbf16> to vector<168x160xbf16>
    %cst_92 = arith.constant dense<0.000000e+00> : vector<10x160xf32>
    %110 = tpu.matmul %103, %109, %cst_92 {dimension_numbers = #tpu.dot_dimension_numbers<[1], [0], [0], [1], [0, 0, 1, 1], [], []>} : vector<10x168xbf16>, vector<168x160xbf16>, vector<10x160xf32> -> vector<10x160xf32>
    %111 = arith.addf %101, %110 : vector<10x160xf32>
    %112 = vector.extract_strided_slice %89 {offsets = [2, 0], sizes = [10, 168], strides = [1, 1]} : vector<14x168xf32> to vector<10x168xf32>
    %113 = arith.truncf %112 : vector<10x168xf32> to vector<10x168xbf16>
    %c2_93 = arith.constant 2 : index
    %c0_94 = arith.constant 0 : index
    %c0_95 = arith.constant 0 : index
    %114 = vector.load %arg5[%c2_93, %c0_94, %c0_95] : memref<5x168x160xbf16, #tpu.memory_space<vmem>>, vector<1x168x160xbf16>
    %115 = vector.shape_cast %114 : vector<1x168x160xbf16> to vector<168x160xbf16>
    %cst_96 = arith.constant dense<0.000000e+00> : vector<10x160xf32>
    %116 = tpu.matmul %113, %115, %cst_96 {dimension_numbers = #tpu.dot_dimension_numbers<[1], [0], [0], [1], [0, 0, 1, 1], [], []>} : vector<10x168xbf16>, vector<168x160xbf16>, vector<10x160xf32> -> vector<10x160xf32>
    %117 = arith.addf %107, %116 : vector<10x160xf32>
    %c2_97 = arith.constant 2 : index
    %c0_98 = arith.constant 0 : index
    %c0_99 = arith.constant 0 : index
    %118 = vector.load %arg6[%c2_97, %c0_98, %c0_99] : memref<5x168x160xbf16, #tpu.memory_space<vmem>>, vector<1x168x160xbf16>
    %119 = vector.shape_cast %118 : vector<1x168x160xbf16> to vector<168x160xbf16>
    %cst_100 = arith.constant dense<0.000000e+00> : vector<10x160xf32>
    %120 = tpu.matmul %113, %119, %cst_100 {dimension_numbers = #tpu.dot_dimension_numbers<[1], [0], [0], [1], [0, 0, 1, 1], [], []>} : vector<10x168xbf16>, vector<168x160xbf16>, vector<10x160xf32> -> vector<10x160xf32>
    %121 = arith.addf %111, %120 : vector<10x160xf32>
    %122 = vector.extract_strided_slice %89 {offsets = [3, 0], sizes = [10, 168], strides = [1, 1]} : vector<14x168xf32> to vector<10x168xf32>
    %123 = arith.truncf %122 : vector<10x168xf32> to vector<10x168xbf16>
    %c3_101 = arith.constant 3 : index
    %c0_102 = arith.constant 0 : index
    %c0_103 = arith.constant 0 : index
    %124 = vector.load %arg5[%c3_101, %c0_102, %c0_103] : memref<5x168x160xbf16, #tpu.memory_space<vmem>>, vector<1x168x160xbf16>
    %125 = vector.shape_cast %124 : vector<1x168x160xbf16> to vector<168x160xbf16>
    %cst_104 = arith.constant dense<0.000000e+00> : vector<10x160xf32>
    %126 = tpu.matmul %123, %125, %cst_104 {dimension_numbers = #tpu.dot_dimension_numbers<[1], [0], [0], [1], [0, 0, 1, 1], [], []>} : vector<10x168xbf16>, vector<168x160xbf16>, vector<10x160xf32> -> vector<10x160xf32>
    %127 = arith.addf %117, %126 : vector<10x160xf32>
    %c3_105 = arith.constant 3 : index
    %c0_106 = arith.constant 0 : index
    %c0_107 = arith.constant 0 : index
    %128 = vector.load %arg6[%c3_105, %c0_106, %c0_107] : memref<5x168x160xbf16, #tpu.memory_space<vmem>>, vector<1x168x160xbf16>
    %129 = vector.shape_cast %128 : vector<1x168x160xbf16> to vector<168x160xbf16>
    %cst_108 = arith.constant dense<0.000000e+00> : vector<10x160xf32>
    %130 = tpu.matmul %123, %129, %cst_108 {dimension_numbers = #tpu.dot_dimension_numbers<[1], [0], [0], [1], [0, 0, 1, 1], [], []>} : vector<10x168xbf16>, vector<168x160xbf16>, vector<10x160xf32> -> vector<10x160xf32>
    %131 = arith.addf %121, %130 : vector<10x160xf32>
    %132 = vector.extract_strided_slice %89 {offsets = [4, 0], sizes = [10, 168], strides = [1, 1]} : vector<14x168xf32> to vector<10x168xf32>
    %133 = arith.truncf %132 : vector<10x168xf32> to vector<10x168xbf16>
    %c4_109 = arith.constant 4 : index
    %c0_110 = arith.constant 0 : index
    %c0_111 = arith.constant 0 : index
    %134 = vector.load %arg5[%c4_109, %c0_110, %c0_111] : memref<5x168x160xbf16, #tpu.memory_space<vmem>>, vector<1x168x160xbf16>
    %135 = vector.shape_cast %134 : vector<1x168x160xbf16> to vector<168x160xbf16>
    %cst_112 = arith.constant dense<0.000000e+00> : vector<10x160xf32>
    %136 = tpu.matmul %133, %135, %cst_112 {dimension_numbers = #tpu.dot_dimension_numbers<[1], [0], [0], [1], [0, 0, 1, 1], [], []>} : vector<10x168xbf16>, vector<168x160xbf16>, vector<10x160xf32> -> vector<10x160xf32>
    %137 = arith.addf %127, %136 : vector<10x160xf32>
    %c4_113 = arith.constant 4 : index
    %c0_114 = arith.constant 0 : index
    %c0_115 = arith.constant 0 : index
    %138 = vector.load %arg6[%c4_113, %c0_114, %c0_115] : memref<5x168x160xbf16, #tpu.memory_space<vmem>>, vector<1x168x160xbf16>
    %139 = vector.shape_cast %138 : vector<1x168x160xbf16> to vector<168x160xbf16>
    %cst_116 = arith.constant dense<0.000000e+00> : vector<10x160xf32>
    %140 = tpu.matmul %133, %139, %cst_116 {dimension_numbers = #tpu.dot_dimension_numbers<[1], [0], [0], [1], [0, 0, 1, 1], [], []>} : vector<10x168xbf16>, vector<168x160xbf16>, vector<10x160xf32> -> vector<10x160xf32>
    %141 = arith.addf %131, %140 : vector<10x160xf32>
    %142 = arith.maximumf %137, %141 : vector<10x160xf32>
    %cst_117 = arith.constant 0.000000e+00 : f32
    %143 = vector.broadcast %cst_117 : f32 to vector<1x240xf32>
    %144 = vector.extract_strided_slice %142 {offsets = [0, 0], sizes = [1, 160], strides = [1, 1]} : vector<10x160xf32> to vector<1x160xf32>
    %145 = vector.extract_strided_slice %142 {offsets = [1, 0], sizes = [1, 160], strides = [1, 1]} : vector<10x160xf32> to vector<1x160xf32>
    %146 = arith.maximumf %144, %145 : vector<1x160xf32>
    %c0_118 = arith.constant 0 : index
    %c0_119 = arith.constant 0 : index
    %147 = vector.load %arg7[%c0_118, %c0_119] : memref<1x160xf32, #tpu.memory_space<vmem>>, vector<1x160xf32>
    %148 = arith.addf %146, %147 : vector<1x160xf32>
    %cst_120 = arith.constant 0.000000e+00 : f32
    %149 = vector.broadcast %cst_120 : f32 to vector<1x160xf32>
    %150 = arith.maximumf %148, %149 : vector<1x160xf32>
    %151 = arith.truncf %150 : vector<1x160xf32> to vector<1x160xbf16>
    %c0_121 = arith.constant 0 : index
    %c0_122 = arith.constant 0 : index
    %152 = vector.load %arg8[%c0_121, %c0_122] : memref<800x240xbf16, #tpu.memory_space<vmem>>, vector<160x240xbf16>
    %cst_123 = arith.constant dense<0.000000e+00> : vector<1x240xf32>
    %153 = tpu.matmul %151, %152, %cst_123 {dimension_numbers = #tpu.dot_dimension_numbers<[1], [0], [0], [1], [0, 0, 1, 1], [], []>} : vector<1x160xbf16>, vector<160x240xbf16>, vector<1x240xf32> -> vector<1x240xf32>
    %154 = arith.addf %143, %153 : vector<1x240xf32>
    %155 = vector.extract_strided_slice %142 {offsets = [2, 0], sizes = [1, 160], strides = [1, 1]} : vector<10x160xf32> to vector<1x160xf32>
    %156 = vector.extract_strided_slice %142 {offsets = [3, 0], sizes = [1, 160], strides = [1, 1]} : vector<10x160xf32> to vector<1x160xf32>
    %157 = arith.maximumf %155, %156 : vector<1x160xf32>
    %c0_124 = arith.constant 0 : index
    %c0_125 = arith.constant 0 : index
    %158 = vector.load %arg7[%c0_124, %c0_125] : memref<1x160xf32, #tpu.memory_space<vmem>>, vector<1x160xf32>
    %159 = arith.addf %157, %158 : vector<1x160xf32>
    %cst_126 = arith.constant 0.000000e+00 : f32
    %160 = vector.broadcast %cst_126 : f32 to vector<1x160xf32>
    %161 = arith.maximumf %159, %160 : vector<1x160xf32>
    %162 = arith.truncf %161 : vector<1x160xf32> to vector<1x160xbf16>
    %c160 = arith.constant 160 : index
    %c0_127 = arith.constant 0 : index
    %163 = vector.load %arg8[%c160, %c0_127] : memref<800x240xbf16, #tpu.memory_space<vmem>>, vector<160x240xbf16>
    %cst_128 = arith.constant dense<0.000000e+00> : vector<1x240xf32>
    %164 = tpu.matmul %162, %163, %cst_128 {dimension_numbers = #tpu.dot_dimension_numbers<[1], [0], [0], [1], [0, 0, 1, 1], [], []>} : vector<1x160xbf16>, vector<160x240xbf16>, vector<1x240xf32> -> vector<1x240xf32>
    %165 = arith.addf %154, %164 : vector<1x240xf32>
    %166 = vector.extract_strided_slice %142 {offsets = [4, 0], sizes = [1, 160], strides = [1, 1]} : vector<10x160xf32> to vector<1x160xf32>
    %167 = vector.extract_strided_slice %142 {offsets = [5, 0], sizes = [1, 160], strides = [1, 1]} : vector<10x160xf32> to vector<1x160xf32>
    %168 = arith.maximumf %166, %167 : vector<1x160xf32>
    %c0_129 = arith.constant 0 : index
    %c0_130 = arith.constant 0 : index
    %169 = vector.load %arg7[%c0_129, %c0_130] : memref<1x160xf32, #tpu.memory_space<vmem>>, vector<1x160xf32>
    %170 = arith.addf %168, %169 : vector<1x160xf32>
    %cst_131 = arith.constant 0.000000e+00 : f32
    %171 = vector.broadcast %cst_131 : f32 to vector<1x160xf32>
    %172 = arith.maximumf %170, %171 : vector<1x160xf32>
    %173 = arith.truncf %172 : vector<1x160xf32> to vector<1x160xbf16>
    %c320 = arith.constant 320 : index
    %c0_132 = arith.constant 0 : index
    %174 = vector.load %arg8[%c320, %c0_132] : memref<800x240xbf16, #tpu.memory_space<vmem>>, vector<160x240xbf16>
    %cst_133 = arith.constant dense<0.000000e+00> : vector<1x240xf32>
    %175 = tpu.matmul %173, %174, %cst_133 {dimension_numbers = #tpu.dot_dimension_numbers<[1], [0], [0], [1], [0, 0, 1, 1], [], []>} : vector<1x160xbf16>, vector<160x240xbf16>, vector<1x240xf32> -> vector<1x240xf32>
    %176 = arith.addf %165, %175 : vector<1x240xf32>
    %177 = vector.extract_strided_slice %142 {offsets = [6, 0], sizes = [1, 160], strides = [1, 1]} : vector<10x160xf32> to vector<1x160xf32>
    %178 = vector.extract_strided_slice %142 {offsets = [7, 0], sizes = [1, 160], strides = [1, 1]} : vector<10x160xf32> to vector<1x160xf32>
    %179 = arith.maximumf %177, %178 : vector<1x160xf32>
    %c0_134 = arith.constant 0 : index
    %c0_135 = arith.constant 0 : index
    %180 = vector.load %arg7[%c0_134, %c0_135] : memref<1x160xf32, #tpu.memory_space<vmem>>, vector<1x160xf32>
    %181 = arith.addf %179, %180 : vector<1x160xf32>
    %cst_136 = arith.constant 0.000000e+00 : f32
    %182 = vector.broadcast %cst_136 : f32 to vector<1x160xf32>
    %183 = arith.maximumf %181, %182 : vector<1x160xf32>
    %184 = arith.truncf %183 : vector<1x160xf32> to vector<1x160xbf16>
    %c480 = arith.constant 480 : index
    %c0_137 = arith.constant 0 : index
    %185 = vector.load %arg8[%c480, %c0_137] : memref<800x240xbf16, #tpu.memory_space<vmem>>, vector<160x240xbf16>
    %cst_138 = arith.constant dense<0.000000e+00> : vector<1x240xf32>
    %186 = tpu.matmul %184, %185, %cst_138 {dimension_numbers = #tpu.dot_dimension_numbers<[1], [0], [0], [1], [0, 0, 1, 1], [], []>} : vector<1x160xbf16>, vector<160x240xbf16>, vector<1x240xf32> -> vector<1x240xf32>
    %187 = arith.addf %176, %186 : vector<1x240xf32>
    %188 = vector.extract_strided_slice %142 {offsets = [8, 0], sizes = [1, 160], strides = [1, 1]} : vector<10x160xf32> to vector<1x160xf32>
    %189 = vector.extract_strided_slice %142 {offsets = [9, 0], sizes = [1, 160], strides = [1, 1]} : vector<10x160xf32> to vector<1x160xf32>
    %190 = arith.maximumf %188, %189 : vector<1x160xf32>
    %c0_139 = arith.constant 0 : index
    %c0_140 = arith.constant 0 : index
    %191 = vector.load %arg7[%c0_139, %c0_140] : memref<1x160xf32, #tpu.memory_space<vmem>>, vector<1x160xf32>
    %192 = arith.addf %190, %191 : vector<1x160xf32>
    %cst_141 = arith.constant 0.000000e+00 : f32
    %193 = vector.broadcast %cst_141 : f32 to vector<1x160xf32>
    %194 = arith.maximumf %192, %193 : vector<1x160xf32>
    %195 = arith.truncf %194 : vector<1x160xf32> to vector<1x160xbf16>
    %c640 = arith.constant 640 : index
    %c0_142 = arith.constant 0 : index
    %196 = vector.load %arg8[%c640, %c0_142] : memref<800x240xbf16, #tpu.memory_space<vmem>>, vector<160x240xbf16>
    %cst_143 = arith.constant dense<0.000000e+00> : vector<1x240xf32>
    %197 = tpu.matmul %195, %196, %cst_143 {dimension_numbers = #tpu.dot_dimension_numbers<[1], [0], [0], [1], [0, 0, 1, 1], [], []>} : vector<1x160xbf16>, vector<160x240xbf16>, vector<1x240xf32> -> vector<1x240xf32>
    %198 = arith.addf %187, %197 : vector<1x240xf32>
    %c0_144 = arith.constant 0 : index
    %c0_145 = arith.constant 0 : index
    %199 = vector.load %arg9[%c0_144, %c0_145] : memref<1x240xf32, #tpu.memory_space<vmem>>, vector<1x240xf32>
    %200 = arith.addf %198, %199 : vector<1x240xf32>
    %cst_146 = arith.constant 0.000000e+00 : f32
    %201 = vector.broadcast %cst_146 : f32 to vector<1x240xf32>
    %202 = arith.maximumf %200, %201 : vector<1x240xf32>
    %203 = arith.truncf %202 : vector<1x240xf32> to vector<1x240xbf16>
    %c0_147 = arith.constant 0 : index
    %c0_148 = arith.constant 0 : index
    %204 = vector.load %arg10[%c0_147, %c0_148] : memref<240x168xbf16, #tpu.memory_space<vmem>>, vector<240x168xbf16>
    %cst_149 = arith.constant dense<0.000000e+00> : vector<1x168xf32>
    %205 = tpu.matmul %203, %204, %cst_149 {dimension_numbers = #tpu.dot_dimension_numbers<[1], [0], [0], [1], [0, 0, 1, 1], [], []>} : vector<1x240xbf16>, vector<240x168xbf16>, vector<1x168xf32> -> vector<1x168xf32>
    %c0_150 = arith.constant 0 : index
    %c0_151 = arith.constant 0 : index
    %206 = vector.load %arg11[%c0_150, %c0_151] : memref<1x168xf32, #tpu.memory_space<vmem>>, vector<1x168xf32>
    %207 = arith.addf %205, %206 : vector<1x168xf32>
    %cst_152 = arith.constant 0.000000e+00 : f32
    %208 = vector.broadcast %cst_152 : f32 to vector<1x168xf32>
    %209 = arith.maximumf %207, %208 : vector<1x168xf32>
    %210 = arith.truncf %209 : vector<1x168xf32> to vector<1x168xbf16>
    %c0_153 = arith.constant 0 : index
    %c0_154 = arith.constant 0 : index
    %211 = vector.load %arg12[%c0_153, %c0_154] : memref<168x40xbf16, #tpu.memory_space<vmem>>, vector<168x40xbf16>
    %cst_155 = arith.constant dense<0.000000e+00> : vector<1x40xf32>
    %212 = tpu.matmul %210, %211, %cst_155 {dimension_numbers = #tpu.dot_dimension_numbers<[1], [0], [0], [1], [0, 0, 1, 1], [], []>} : vector<1x168xbf16>, vector<168x40xbf16>, vector<1x40xf32> -> vector<1x40xf32>
    %c0_156 = arith.constant 0 : index
    %c0_157 = arith.constant 0 : index
    %213 = vector.load %arg13[%c0_156, %c0_157] : memref<1x40xf32, #tpu.memory_space<vmem>>, vector<1x40xf32>
    %214 = arith.addf %212, %213 : vector<1x40xf32>
    %c0_158 = arith.constant 0 : index
    %c0_159 = arith.constant 0 : index
    %c0_160 = arith.constant 0 : index
    %215 = vector.load %arg14[%c0_158, %c0_159, %c0_160] : memref<1x1x40xf32, #tpu.memory_space<vmem>>, vector<1x1x40xf32>
    %216 = vector.shape_cast %215 : vector<1x1x40xf32> to vector<1x40xf32>
    %217 = vector.shape_cast %214 : vector<1x40xf32> to vector<1x1x40xf32>
    tpu.vector_store %arg14[%c0_158, %c0_159, %c0_160], %217 {strides = array<i32>} : memref<1x1x40xf32, #tpu.memory_space<vmem>>, vector<1x1x40xf32>,
    return
  }
  func.func @transform_0(%arg0: i32) -> (i32, i32, i32, i32) {
    %c0_i32 = arith.constant 0 : i32
    %c0_i32_0 = arith.constant 0 : i32
    %c0_i32_1 = arith.constant 0 : i32
    %c0_i32_2 = arith.constant 0 : i32
    return %arg0, %c0_i32, %c0_i32_0, %c0_i32_1 : i32, i32, i32, i32
  }
  func.func @transform_1(%arg0: i32) -> (i32, i32, i32) {
    %c0_i32 = arith.constant 0 : i32
    %c0_i32_0 = arith.constant 0 : i32
    %c0_i32_1 = arith.constant 0 : i32
    %c0_i32_2 = arith.constant 0 : i32
    return %c0_i32, %c0_i32_0, %c0_i32_1 : i32, i32, i32
  }
  func.func @transform_2(%arg0: i32) -> (i32, i32, i32) {
    %c0_i32 = arith.constant 0 : i32
    %c0_i32_0 = arith.constant 0 : i32
    %c0_i32_1 = arith.constant 0 : i32
    %c0_i32_2 = arith.constant 0 : i32
    return %c0_i32, %c0_i32_0, %c0_i32_1 : i32, i32, i32
  }
  func.func @transform_3(%arg0: i32) -> (i32, i32) {
    %c0_i32 = arith.constant 0 : i32
    %c0_i32_0 = arith.constant 0 : i32
    %c0_i32_1 = arith.constant 0 : i32
    return %c0_i32, %c0_i32_0 : i32, i32
  }
  func.func @transform_4(%arg0: i32) -> (i32, i32, i32) {
    %c0_i32 = arith.constant 0 : i32
    %c0_i32_0 = arith.constant 0 : i32
    %c0_i32_1 = arith.constant 0 : i32
    %c0_i32_2 = arith.constant 0 : i32
    return %c0_i32, %c0_i32_0, %c0_i32_1 : i32, i32, i32
  }
  func.func @transform_5(%arg0: i32) -> (i32, i32, i32) {
    %c0_i32 = arith.constant 0 : i32
    %c0_i32_0 = arith.constant 0 : i32
    %c0_i32_1 = arith.constant 0 : i32
    %c0_i32_2 = arith.constant 0 : i32
    return %c0_i32, %c0_i32_0, %c0_i32_1 : i32, i32, i32
  }
  func.func @transform_6(%arg0: i32) -> (i32, i32) {
    %c0_i32 = arith.constant 0 : i32
    %c0_i32_0 = arith.constant 0 : i32
    %c0_i32_1 = arith.constant 0 : i32
    return %c0_i32, %c0_i32_0 : i32, i32
  }
  func.func @transform_7(%arg0: i32) -> (i32, i32) {
    %c0_i32 = arith.constant 0 : i32
    %c0_i32_0 = arith.constant 0 : i32
    %c0_i32_1 = arith.constant 0 : i32
    return %c0_i32, %c0_i32_0 : i32, i32
  }
  func.func @transform_8(%arg0: i32) -> (i32, i32) {
    %c0_i32 = arith.constant 0 : i32
    %c0_i32_0 = arith.constant 0 : i32
    %c0_i32_1 = arith.constant 0 : i32
    return %c0_i32, %c0_i32_0 : i32, i32
  }
  func.func @transform_9(%arg0: i32) -> (i32, i32) {
    %c0_i32 = arith.constant 0 : i32
    %c0_i32_0 = arith.constant 0 : i32
    %c0_i32_1 = arith.constant 0 : i32
    return %c0_i32, %c0_i32_0 : i32, i32
  }
  func.func @transform_10(%arg0: i32) -> (i32, i32) {
    %c0_i32 = arith.constant 0 : i32
    %c0_i32_0 = arith.constant 0 : i32
    %c0_i32_1 = arith.constant 0 : i32
    return %c0_i32, %c0_i32_0 : i32, i32
  }
  func.func @transform_11(%arg0: i32) -> (i32, i32) {
    %c0_i32 = arith.constant 0 : i32
    %c0_i32_0 = arith.constant 0 : i32
    %c0_i32_1 = arith.constant 0 : i32
    return %c0_i32, %c0_i32_0 : i32, i32
  }
  func.func @transform_12(%arg0: i32) -> (i32, i32) {
    %c0_i32 = arith.constant 0 : i32
    %c0_i32_0 = arith.constant 0 : i32
    %c0_i32_1 = arith.constant 0 : i32
    return %c0_i32, %c0_i32_0 : i32, i32
  }
  func.func @transform_13(%arg0: i32) -> (i32, i32, i32) {
    %c0_i32 = arith.constant 0 : i32
    %c0_i32_0 = arith.constant 0 : i32
    %c0_i32_1 = arith.constant 0 : i32
    return %arg0, %c0_i32, %c0_i32_0 : i32, i32, i32
  }
}

</mosaic_0001>

<llo_original>
// kernel: packed_net_forward.1
$region0: #{packed_net_forward.1}
  #allocation0 [shape = 'u32[]', space=smem, size = 0x4, offset = 0x4, fixed_abs, tag = 'smem constant byte address 0x4 - core index']
  #allocation1 [shape = 'u32[72,128]{1,0:T(1,128)}', space=vmem, size = 0x9000, scoped, tag = 'internal scratch']
  %s0 = inlined_call_operand.vmem [shape: f32[2,2,16,96], index: 0, kind: input, shape index: {}]
  %s1 = inlined_call_operand.vmem [shape: bf16[5,96,168], index: 1, kind: input, shape index: {}]
  %s2 = inlined_call_operand.vmem [shape: bf16[5,96,168], index: 2, kind: input, shape index: {}]
  %s3 = inlined_call_operand.vmem [shape: f32[1,168], index: 3, kind: input, shape index: {}]
  %s4 = inlined_call_operand.vmem [shape: bf16[5,168,160], index: 4, kind: input, shape index: {}]
  %s5 = inlined_call_operand.vmem [shape: bf16[5,168,160], index: 5, kind: input, shape index: {}]
  %s6 = inlined_call_operand.vmem [shape: f32[1,160], index: 6, kind: input, shape index: {}]
  %s7 = inlined_call_operand.vmem [shape: bf16[800,240], index: 7, kind: input, shape index: {}]
  %s8 = inlined_call_operand.vmem [shape: f32[1,240], index: 8, kind: input, shape index: {}]
  %s9 = inlined_call_operand.vmem [shape: bf16[240,168], index: 9, kind: input, shape index: {}]
  %s10 = inlined_call_operand.vmem [shape: f32[1,168], index: 10, kind: input, shape index: {}]
  %s11 = inlined_call_operand.vmem [shape: bf16[168,40], index: 11, kind: input, shape index: {}]
  %s12 = inlined_call_operand.vmem [shape: f32[1,40], index: 12, kind: input, shape index: {}]
  %s13 = inlined_call_operand.vmem [shape: f32[2,1,40], index: 13, kind: output, shape index: {}]
  %s14 = sld [smem:[#allocation0]]
  $region85: #{packed_net_forward.1} parent=0
    _
  %s16 = ssub.s32 1, %s14
  %s17 = scalar_select 0, %s16, %s14
  loop: start=0, step=1, limit=4
  $region2: #{packed_net_forward.1} parent=0 // loop_pre_header
    _
  $region3: #{packed_net_forward.1} parent=0 // loop_header
    %s19 = sphi 0, %s23
    %p20 = scmp.ge.s32.totalorder %s19, 4
    %s29 = sphi 0, %s31
    %s32 = sphi 0, %s29
    %s33 = sphi 0, %s32
    %s49 = sphi 0, %s33
    %s53 = sphi 0, %s53
    %s55 = sphi 0, %s53
    %s56 = sphi 0, %s55
    %s70 = sphi 0, %s56
    %s74 = sphi 0, %s74
    %s76 = sphi 0, %s74
    %s77 = sphi 0, %s76
    %s91 = sphi 0, %s77
    %s95 = sphi 0, %s95
    %s97 = sphi 0, %s95
    %s98 = sphi 0, %s97
    %s112 = sphi 0, %s98
    %s116 = sphi 0, %s116
    %s118 = sphi 0, %s116
    %s119 = sphi 0, %s118
    %s133 = sphi 0, %s119
    %s137 = sphi 0, %s137
    %s139 = sphi 0, %s137
    %s140 = sphi 0, %s139
    %s154 = sphi 0, %s140
    %s158 = sphi 0, %s158
    %s160 = sphi 0, %s158
    %s161 = sphi 0, %s160
    %s175 = sphi 0, %s161
    %s179 = sphi 0, %s179
    %s181 = sphi 0, %s179
    %s182 = sphi 0, %s181
    %s196 = sphi 0, %s182
    %s200 = sphi 0, %s200
    %s202 = sphi 0, %s200
    %s203 = sphi 0, %s202
    %s217 = sphi 0, %s203
    %s221 = sphi 0, %s221
    %s223 = sphi 0, %s221
    %s224 = sphi 0, %s223
    %s238 = sphi 0, %s224
    %s242 = sphi 0, %s242
    %s244 = sphi 0, %s242
    %s245 = sphi 0, %s244
    %s259 = sphi 0, %s245
    %s263 = sphi 0, %s263
    %s265 = sphi 0, %s263
    %s266 = sphi 0, %s265
    %s280 = sphi 0, %s266
    %s284 = sphi 0, %s284
    %s286 = sphi 0, %s284
    %s287 = sphi 0, %s286
    %s301 = sphi 0, %s287
    %s307 = sphi 0, %s309
    %s310 = sphi 0, %s307
    %s311 = sphi 0, %s310
    %s327 = sphi 0, %s311
  $region4: #{packed_net_forward.1} parent=0 // loop_header_branch
    %22 = sbr.rel (%p20) target = $region8
  $region5: #{packed_net_forward.1} parent=0 // loop_body
    %s24 = ssub.s32 %s19, 1
    %s25 = ssub.s32 %s19, 2
    %s26 = sadd.s32 %s19, 1
    %s27 = ssub.s32 %s19, %s26
    %p28 = scmp.eq.s32.totalorder %s27, 0
    %s30 = sadd.s32 %s29, 1
    %s31 = scalar_select %p28, %s29, %s30
    %p34 = pneg %p28
    %p35 = scmp.eq.s32.totalorder %s19, 1
    %p36 = por %p34, %p35
    %p37 = scmp.ne.s32.totalorder %s29, %s32
    %p38 = scmp.eq.s32.totalorder %s19, 0
    %p39 = por %p37, %p38
    %p40 = scmp.ne.s32.totalorder %s29, %s32
    %p41 = scmp.eq.s32.totalorder %s24, 1
    %p42 = por %p40, %p41
    %p43 = scmp.ne.s32.totalorder %s32, %s33
    %p44 = scmp.eq.s32.totalorder %s24, 0
    %p45 = por %p43, %p44
    %p46 = scmp.ne.s32.totalorder %s32, %s33
    %p47 = scmp.eq.s32.totalorder %s25, 1
    %p48 = por %p46, %p47
    %p50 = scmp.ne.s32.totalorder %s33, %s49
    %p51 = scmp.eq.s32.totalorder %s25, 0
    %p52 = por %p50, %p51
    %s54 = sadd.s32 %s53, 1
    %p57 = scmp.eq.s32.totalorder %s19, 1
    %p58 = scmp.ne.s32.totalorder %s53, %s55
    %p59 = scmp.eq.s32.totalorder %s19, 0
    %p60 = por %p58, %p59
    %p61 = scmp.ne.s32.totalorder %s53, %s55
    %p62 = scmp.eq.s32.totalorder %s24, 1
    %p63 = por %p61, %p62
    %p64 = scmp.ne.s32.totalorder %s55, %s56
    %p65 = scmp.eq.s32.totalorder %s24, 0
    %p66 = por %p64, %p65
    %p67 = scmp.ne.s32.totalorder %s55, %s56
    %p68 = scmp.eq.s32.totalorder %s25, 1
    %p69 = por %p67, %p68
    %p71 = scmp.ne.s32.totalorder %s56, %s70
    %p72 = scmp.eq.s32.totalorder %s25, 0
    %p73 = por %p71, %p72
    %s75 = sadd.s32 %s74, 1
    %p78 = scmp.eq.s32.totalorder %s19, 1
    %p79 = scmp.ne.s32.totalorder %s74, %s76
    %p80 = scmp.eq.s32.totalorder %s19, 0
    %p81 = por %p79, %p80
    %p82 = scmp.ne.s32.totalorder %s74, %s76
    %p83 = scmp.eq.s32.totalorder %s24, 1
    %p84 = por %p82, %p83
    %p85 = scmp.ne.s32.totalorder %s76, %s77
    %p86 = scmp.eq.s32.totalorder %s24, 0
    %p87 = por %p85, %p86
    %p88 = scmp.ne.s32.totalorder %s76, %s77
    %p89 = scmp.eq.s32.totalorder %s25, 1
    %p90 = por %p88, %p89
    %p92 = scmp.ne.s32.totalorder %s77, %s91
    %p93 = scmp.eq.s32.totalorder %s25, 0
    %p94 = por %p92, %p93
    %s96 = sadd.s32 %s95, 1
    %p99 = scmp.eq.s32.totalorder %s19, 1
    %p100 = scmp.ne.s32.totalorder %s95, %s97
    %p101 = scmp.eq.s32.totalorder %s19, 0
    %p102 = por %p100, %p101
    %p103 = scmp.ne.s32.totalorder %s95, %s97
    %p104 = scmp.eq.s32.totalorder %s24, 1
    %p105 = por %p103, %p104
    %p106 = scmp.ne.s32.totalorder %s97, %s98
    %p107 = scmp.eq.s32.totalorder %s24, 0
    %p108 = por %p106, %p107
    %p109 = scmp.ne.s32.totalorder %s97, %s98
    %p110 = scmp.eq.s32.totalorder %s25, 1
    %p111 = por %p109, %p110
    %p113 = scmp.ne.s32.totalorder %s98, %s112
    %p114 = scmp.eq.s32.totalorder %s25, 0
    %p115 = por %p113, %p114
    %s117 = sadd.s32 %s116, 1
    %p120 = scmp.eq.s32.totalorder %s19, 1
    %p121 = scmp.ne.s32.totalorder %s116, %s118
    %p122 = scmp.eq.s32.totalorder %s19, 0
    %p123 = por %p121, %p122
    %p124 = scmp.ne.s32.totalorder %s116, %s118
    %p125 = scmp.eq.s32.totalorder %s24, 1
    %p126 = por %p124, %p125
    %p127 = scmp.ne.s32.totalorder %s118, %s119
    %p128 = scmp.eq.s32.totalorder %s24, 0
    %p129 = por %p127, %p128
    %p130 = scmp.ne.s32.totalorder %s118, %s119
    %p131 = scmp.eq.s32.totalorder %s25, 1
    %p132 = por %p130, %p131
    %p134 = scmp.ne.s32.totalorder %s119, %s133
    %p135 = scmp.eq.s32.totalorder %s25, 0
    %p136 = por %p134, %p135
    %s138 = sadd.s32 %s137, 1
    %p141 = scmp.eq.s32.totalorder %s19, 1
    %p142 = scmp.ne.s32.totalorder %s137, %s139
    %p143 = scmp.eq.s32.totalorder %s19, 0
    %p144 = por %p142, %p143
    %p145 = scmp.ne.s32.totalorder %s137, %s139
    %p146 = scmp.eq.s32.totalorder %s24, 1
    %p147 = por %p145, %p146
    %p148 = scmp.ne.s32.totalorder %s139, %s140
    %p149 = scmp.eq.s32.totalorder %s24, 0
    %p150 = por %p148, %p149
    %p151 = scmp.ne.s32.totalorder %s139, %s140
    %p152 = scmp.eq.s32.totalorder %s25, 1
    %p153 = por %p151, %p152
    %p155 = scmp.ne.s32.totalorder %s140, %s154
    %p156 = scmp.eq.s32.totalorder %s25, 0
    %p157 = por %p155, %p156
    %s159 = sadd.s32 %s158, 1
    %p162 = scmp.eq.s32.totalorder %s19, 1
    %p163 = scmp.ne.s32.totalorder %s158, %s160
    %p164 = scmp.eq.s32.totalorder %s19, 0
    %p165 = por %p163, %p164
    %p166 = scmp.ne.s32.totalorder %s158, %s160
    %p167 = scmp.eq.s32.totalorder %s24, 1
    %p168 = por %p166, %p167
    %p169 = scmp.ne.s32.totalorder %s160, %s161
    %p170 = scmp.eq.s32.totalorder %s24, 0
    %p171 = por %p169, %p170
    %p172 = scmp.ne.s32.totalorder %s160, %s161
    %p173 = scmp.eq.s32.totalorder %s25, 1
    %p174 = por %p172, %p173
    %p176 = scmp.ne.s32.totalorder %s161, %s175
    %p177 = scmp.eq.s32.totalorder %s25, 0
    %p178 = por %p176, %p177
    %s180 = sadd.s32 %s179, 1
    %p183 = scmp.eq.s32.totalorder %s19, 1
    %p184 = scmp.ne.s32.totalorder %s179, %s181
    %p185 = scmp.eq.s32.totalorder %s19, 0
    %p186 = por %p184, %p185
    %p187 = scmp.ne.s32.totalorder %s179, %s181
    %p188 = scmp.eq.s32.totalorder %s24, 1
    %p189 = por %p187, %p188
    %p190 = scmp.ne.s32.totalorder %s181, %s182
    %p191 = scmp.eq.s32.totalorder %s24, 0
    %p192 = por %p190, %p191
    %p193 = scmp.ne.s32.totalorder %s181, %s182
    %p194 = scmp.eq.s32.totalorder %s25, 1
    %p195 = por %p193, %p194
    %p197 = scmp.ne.s32.totalorder %s182, %s196
    %p198 = scmp.eq.s32.totalorder %s25, 0
    %p199 = por %p197, %p198
    %s201 = sadd.s32 %s200, 1
    %p204 = scmp.eq.s32.totalorder %s19, 1
    %p205 = scmp.ne.s32.totalorder %s200, %s202
    %p206 = scmp.eq.s32.totalorder %s19, 0
    %p207 = por %p205, %p206
    %p208 = scmp.ne.s32.totalorder %s200, %s202
    %p209 = scmp.eq.s32.totalorder %s24, 1
    %p210 = por %p208, %p209
    %p211 = scmp.ne.s32.totalorder %s202, %s203
    %p212 = scmp.eq.s32.totalorder %s24, 0
    %p213 = por %p211, %p212
    %p214 = scmp.ne.s32.totalorder %s202, %s203
    %p215 = scmp.eq.s32.totalorder %s25, 1
    %p216 = por %p214, %p215
    %p218 = scmp.ne.s32.totalorder %s203, %s217
    %p219 = scmp.eq.s32.totalorder %s25, 0
    %p220 = por %p218, %p219
    %s222 = sadd.s32 %s221, 1
    %p225 = scmp.eq.s32.totalorder %s19, 1
    %p226 = scmp.ne.s32.totalorder %s221, %s223
    %p227 = scmp.eq.s32.totalorder %s19, 0
    %p228 = por %p226, %p227
    %p229 = scmp.ne.s32.totalorder %s221, %s223
    %p230 = scmp.eq.s32.totalorder %s24, 1
    %p231 = por %p229, %p230
    %p232 = scmp.ne.s32.totalorder %s223, %s224
    %p233 = scmp.eq.s32.totalorder %s24, 0
    %p234 = por %p232, %p233
    %p235 = scmp.ne.s32.totalorder %s223, %s224
    %p236 = scmp.eq.s32.totalorder %s25, 1
    %p237 = por %p235, %p236
    %p239 = scmp.ne.s32.totalorder %s224, %s238
    %p240 = scmp.eq.s32.totalorder %s25, 0
    %p241 = por %p239, %p240
    %s243 = sadd.s32 %s242, 1
    %p246 = scmp.eq.s32.totalorder %s19, 1
    %p247 = scmp.ne.s32.totalorder %s242, %s244
    %p248 = scmp.eq.s32.totalorder %s19, 0
    %p249 = por %p247, %p248
    %p250 = scmp.ne.s32.totalorder %s242, %s244
    %p251 = scmp.eq.s32.totalorder %s24, 1
    %p252 = por %p250, %p251
    %p253 = scmp.ne.s32.totalorder %s244, %s245
    %p254 = scmp.eq.s32.totalorder %s24, 0
    %p255 = por %p253, %p254
    %p256 = scmp.ne.s32.totalorder %s244, %s245
    %p257 = scmp.eq.s32.totalorder %s25, 1
    %p258 = por %p256, %p257
    %p260 = scmp.ne.s32.totalorder %s245, %s259
    %p261 = scmp.eq.s32.totalorder %s25, 0
    %p262 = por %p260, %p261
    %s264 = sadd.s32 %s263, 1
    %p267 = scmp.eq.s32.totalorder %s19, 1
    %p268 = scmp.ne.s32.totalorder %s263, %s265
    %p269 = scmp.eq.s32.totalorder %s19, 0
    %p270 = por %p268, %p269
    %p271 = scmp.ne.s32.totalorder %s263, %s265
    %p272 = scmp.eq.s32.totalorder %s24, 1
    %p273 = por %p271, %p272
    %p274 = scmp.ne.s32.totalorder %s265, %s266
    %p275 = scmp.eq.s32.totalorder %s24, 0
    %p276 = por %p274, %p275
    %p277 = scmp.ne.s32.totalorder %s265, %s266
    %p278 = scmp.eq.s32.totalorder %s25, 1
    %p279 = por %p277, %p278
    %p281 = scmp.ne.s32.totalorder %s266, %s280
    %p282 = scmp.eq.s32.totalorder %s25, 0
    %p283 = por %p281, %p282
    %s285 = sadd.s32 %s284, 1
    %p288 = scmp.eq.s32.totalorder %s19, 1
    %p289 = scmp.ne.s32.totalorder %s284, %s286
    %p290 = scmp.eq.s32.totalorder %s19, 0
    %p291 = por %p289, %p290
    %p292 = scmp.ne.s32.totalorder %s284, %s286
    %p293 = scmp.eq.s32.totalorder %s24, 1
    %p294 = por %p292, %p293
    %p295 = scmp.ne.s32.totalorder %s286, %s287
    %p296 = scmp.eq.s32.totalorder %s24, 0
    %p297 = por %p295, %p296
    %p298 = scmp.ne.s32.totalorder %s286, %s287
    %p299 = scmp.eq.s32.totalorder %s25, 1
    %p300 = por %p298, %p299
    %p302 = scmp.ne.s32.totalorder %s287, %s301
    %p303 = scmp.eq.s32.totalorder %s25, 0
    %p304 = por %p302, %p303
    %s305 = ssub.s32 %s19, %s26
    %p306 = scmp.eq.s32.totalorder %s305, 0
    %s308 = sadd.s32 %s307, 1
    %s309 = scalar_select %p306, %s307, %s308
    %p312 = pneg %p306
    %p313 = scmp.eq.s32.totalorder %s19, 1
    %p314 = por %p312, %p313
    %p315 = scmp.ne.s32.totalorder %s307, %s310
    %p316 = scmp.eq.s32.totalorder %s19, 0
    %p317 = por %p315, %p316
    %p318 = scmp.ne.s32.totalorder %s307, %s310
    %p319 = scmp.eq.s32.totalorder %s24, 1
    %p320 = por %p318, %p319
    %p321 = scmp.ne.s32.totalorder %s310, %s311
    %p322 = scmp.eq.s32.totalorder %s24, 0
    %p323 = por %p321, %p322
    %p324 = scmp.ne.s32.totalorder %s310, %s311
    %p325 = scmp.eq.s32.totalorder %s25, 1
    %p326 = por %p324, %p325
    %p328 = scmp.ne.s32.totalorder %s311, %s327
    %p329 = scmp.eq.s32.totalorder %s25, 0
    %p330 = por %p328, %p329
    %p331 = scmp.le.s32.totalorder 1, %s19
    %p332 = scmp.lt.s32.totalorder %s19, 3
    %p333 = pnand %p331, %p332
    %p334 = pneg %p333
    // Predicated region
    $region9: #{packed_net_forward.1} parent=5 // pred_check
      _
    $region10: #{packed_net_forward.1} parent=5 // pred_check_branch
      %336 = sbr.rel (%p333) target = $region12
    $region11: #{packed_net_forward.1} parent=5 // pred_region
      %s337 = ssub.s32 %s19, 1
      // Predicated region
      $region13: #{packed_net_forward.1} parent=11 // pred_check
        %p338 = pneg %p66
      $region14: #{packed_net_forward.1} parent=11 // pred_check_branch
        %340 = sbr.rel (%p338) target = $region16
      $region15: #{packed_net_forward.1} parent=11 // pred_region
        _
      $region16: #{packed_net_forward.1} parent=11 // pred_fallthru
        _
      // Predicated region
      $region17: #{packed_net_forward.1} parent=11 // pred_check
        %p341 = pneg %p87
      $region18: #{packed_net_forward.1} parent=11 // pred_check_branch
        %343 = sbr.rel (%p341) target = $region20
      $region19: #{packed_net_forward.1} parent=11 // pred_region
        _
      $region20: #{packed_net_forward.1} parent=11 // pred_fallthru
        _
      // Predicated region
      $region21: #{packed_net_forward.1} parent=11 // pred_check
        %p344 = pneg %p108
      $region22: #{packed_net_forward.1} parent=11 // pred_check_branch
        %346 = sbr.rel (%p344) target = $region24
      $region23: #{packed_net_forward.1} parent=11 // pred_region
        _
      $region24: #{packed_net_forward.1} parent=11 // pred_fallthru
        _
      // Predicated region
      $region25: #{packed_net_forward.1} parent=11 // pred_check
        %p347 = pneg %p129
      $region26: #{packed_net_forward.1} parent=11 // pred_check_branch
        %349 = sbr.rel (%p347) target = $region28
      $region27: #{packed_net_forward.1} parent=11 // pred_region
        _
      $region28: #{packed_net_forward.1} parent=11 // pred_fallthru
        _
      // Predicated region
      $region29: #{packed_net_forward.1} parent=11 // pred_check
        %p350 = pneg %p150
      $region30: #{packed_net_forward.1} parent=11 // pred_check_branch
        %352 = sbr.rel (%p350) target = $region32
      $region31: #{packed_net_forward.1} parent=11 // pred_region
        _
      $region32: #{packed_net_forward.1} parent=11 // pred_fallthru
        _
      // Predicated region
      $region33: #{packed_net_forward.1} parent=11 // pred_check
        %p353 = pneg %p171
      $region34: #{packed_net_forward.1} parent=11 // pred_check_branch
        %355 = sbr.rel (%p353) target = $region36
      $region35: #{packed_net_forward.1} parent=11 // pred_region
        _
      $region36: #{packed_net_forward.1} parent=11 // pred_fallthru
        _
      // Predicated region
      $region37: #{packed_net_forward.1} parent=11 // pred_check
        %p356 = pneg %p192
      $region38: #{packed_net_forward.1} parent=11 // pred_check_branch
        %358 = sbr.rel (%p356) target = $region40
      $region39: #{packed_net_forward.1} parent=11 // pred_region
        _
      $region40: #{packed_net_forward.1} parent=11 // pred_fallthru
        _
      // Predicated region
      $region41: #{packed_net_forward.1} parent=11 // pred_check
        %p359 = pneg %p213
      $region42: #{packed_net_forward.1} parent=11 // pred_check_branch
        %361 = sbr.rel (%p359) target = $region44
      $region43: #{packed_net_forward.1} parent=11 // pred_region
        _
      $region44: #{packed_net_forward.1} parent=11 // pred_fallthru
        _
      // Predicated region
      $region45: #{packed_net_forward.1} parent=11 // pred_check
        %p362 = pneg %p234
      $region46: #{packed_net_forward.1} parent=11 // pred_check_branch
        %364 = sbr.rel (%p362) target = $region48
      $region47: #{packed_net_forward.1} parent=11 // pred_region
        _
      $region48: #{packed_net_forward.1} parent=11 // pred_fallthru
        _
      // Predicated region
      $region49: #{packed_net_forward.1} parent=11 // pred_check
        %p365 = pneg %p255
      $region50: #{packed_net_forward.1} parent=11 // pred_check_branch
        %367 = sbr.rel (%p365) target = $region52
      $region51: #{packed_net_forward.1} parent=11 // pred_region
        _
      $region52: #{packed_net_forward.1} parent=11 // pred_fallthru
        _
      // Predicated region
      $region53: #{packed_net_forward.1} parent=11 // pred_check
        %p368 = pneg %p276
      $region54: #{packed_net_forward.1} parent=11 // pred_check_branch
        %370 = sbr.rel (%p368) target = $region56
      $region55: #{packed_net_forward.1} parent=11 // pred_region
        _
      $region56: #{packed_net_forward.1} parent=11 // pred_fallthru
        _
      // Predicated region
      $region57: #{packed_net_forward.1} parent=11 // pred_check
        %p371 = pneg %p297
      $region58: #{packed_net_forward.1} parent=11 // pred_check_branch
        %373 = sbr.rel (%p371) target = $region60
      $region59: #{packed_net_forward.1} parent=11 // pred_region
        _
      $region60: #{packed_net_forward.1} parent=11 // pred_fallthru
        _
    $region12: #{packed_net_forward.1} parent=5 // pred_fallthru
      _
    %p374 = scmp.lt.s32.totalorder %s19, 2
    // Predicated region
    $region61: #{packed_net_forward.1} parent=5 // pred_check
      %p375 = pneg %p374
    $region62: #{packed_net_forward.1} parent=5 // pred_check_branch
      %377 = sbr.rel (%p375) target = $region64
    $region63: #{packed_net_forward.1} parent=5 // pred_region
      // Predicated region
      $region65: #{packed_net_forward.1} parent=63 // pred_check
        %p378 = pneg %p39
      $region66: #{packed_net_forward.1} parent=63 // pred_check_branch
        %380 = sbr.rel (%p378) target = $region68
      $region67: #{packed_net_forward.1} parent=63 // pred_region
        %p381 = scmp.lt.s32.totalorder %s19, 1
        %s382 = scalar_select %p381, %s19, 1
        %s383 = smul.addr %s382, 4
        %s384 = smul.addr %s383, 8
        %s385 = scalar_lea.vmem %s0, %s384
      $region68: #{packed_net_forward.1} parent=63 // pred_fallthru
        _
    $region64: #{packed_net_forward.1} parent=5 // pred_fallthru
      _
    %p386 = scmp.le.s32.totalorder 1, %s19
    %p387 = scmp.lt.s32.totalorder %s19, 3
    %p388 = pnand %p386, %p387
    %p389 = pneg %p388
    // Predicated region
    $region69: #{packed_net_forward.1} parent=5 // pred_check
      _
    $region70: #{packed_net_forward.1} parent=5 // pred_check_branch
      %391 = sbr.rel (%p388) target = $region72
    $region71: #{packed_net_forward.1} parent=5 // pred_region
      %s392 = ssub.s32 %s19, 1
      %p393 = scmp.lt.s32.totalorder %s24, 1
      %s394 = scalar_select %p393, %s24, 1
      %s395 = smul.addr %s394, 4
      %s396 = smul.addr %s395, 8
      %s397 = scalar_lea.vmem %s0, %s396
      %p398 = pneg %p45
      %p399 = pneg %p42
      %p400 = pneg %p66
      %p401 = pneg %p63
      %p402 = pneg %p87
      %p403 = pneg %p84
      %p404 = pneg %p108
      %p405 = pneg %p105
      %p406 = pneg %p129
      %p407 = pneg %p126
      %p408 = pneg %p150
      %p409 = pneg %p147
      %p410 = pneg %p171
      %p411 = pneg %p168
      %p412 = pneg %p192
      %p413 = pneg %p189
      %p414 = pneg %p213
      %p415 = pneg %p210
      %p416 = pneg %p234
      %p417 = pneg %p231
      %p418 = pneg %p255
      %p419 = pneg %p252
      %p420 = pneg %p276
      %p421 = pneg %p273
      %p422 = pneg %p297
      %p423 = pneg %p294
      %p424 = pneg %p323
      %p425 = pneg %p320
      %p426 = scmp.lt.s32.totalorder %s24, 1
      %s427 = scalar_select %p426, %s24, 1
      %s428 = scalar_lea.vmem %s13, %s427
      %p429 = scmp.lt.s32.totalorder %s24, 1
      %s430 = scalar_select %p429, %s24, 1
      %s431 = smul.addr %s430, 4
      %s432 = smul.addr %s431, 8
      %s433 = scalar_lea.vmem %s0, %s432
      %p434 = scmp.lt.s32.totalorder %s24, 1
      %s435 = scalar_select %p434, %s24, 1
      %s436 = scalar_lea.vmem %s13, %s435
      %v438 = vld [vmem:[%s433] sm:$0xff]
      %v439 = vld [vmem:[%s433 + $0x8] sm:$0x3f]
      %v440 = vpack.c.bf16 %v439, %v438
      %s441 = scalar_lea.vmem %s433, 16
      %v442 = vld [vmem:[%s441] sm:$0xff]
      %v443 = vld [vmem:[%s441 + $0x8] sm:$0x3f]
      %v444 = vpack.c.bf16 %v443, %v442
      %v445 = vld [vmem:[%s433 + $0x1] sm:$0xff]
      %v446 = vld [vmem:[%s433 + $0x9] sm:$0x3f]
      %v447 = vpack.c.bf16 %v446, %v445
      %v448 = vld [vmem:[%s441 + $0x1] sm:$0xff]
      %v449 = vld [vmem:[%s441 + $0x9] sm:$0x3f]
      %v450 = vpack.c.bf16 %v449, %v448
      %v451 = vld [vmem:[%s433 + $0x2] sm:$0xff]
      %v452 = vld [vmem:[%s433 + $0xa] sm:$0x3f]
      %v453 = vpack.c.bf16 %v452, %v451
      %v454 = vld [vmem:[%s441 + $0x2] sm:$0xff]
      %v455 = vld [vmem:[%s441 + $0xa] sm:$0x3f]
      %v456 = vpack.c.bf16 %v455, %v454
      %v457 = vld [vmem:[%s1] sm:$0xff]
      %v458 = vld [vmem:[%s1 + $0x8] sm:$0xff]
      %v459 = vld [vmem:[%s1 + $0x10] sm:$0xff]
      %v460 = vld [vmem:[%s1 + $0x18] sm:$0xff]
      %v461 = vld [vmem:[%s1 + $0x20] sm:$0xff]
      %v462 = vld [vmem:[%s1 + $0x28] sm:$0xff]
      %v463 = vld [vmem:[%s1 + $0x30] sm:$0xff]
      %v464 = vld [vmem:[%s1 + $0x38] sm:$0xff]
      %v465 = vld [vmem:[%s1 + $0x40] sm:$0xff]
      %v466 = vld [vmem:[%s1 + $0x48] sm:$0xff]
      %v467 = vld [vmem:[%s1 + $0x50] sm:$0xff]
      %v468 = vld [vmem:[%s1 + $0x58] sm:$0xff]
      %v469 = vld [vmem:[%s2] sm:$0xff]
      %v470 = vld [vmem:[%s2 + $0x8] sm:$0xff]
      %v471 = vld [vmem:[%s2 + $0x10] sm:$0xff]
      %v472 = vld [vmem:[%s2 + $0x18] sm:$0xff]
      %v473 = vld [vmem:[%s2 + $0x20] sm:$0xff]
      %v474 = vld [vmem:[%s2 + $0x28] sm:$0xff]
      %v475 = vld [vmem:[%s2 + $0x30] sm:$0xff]
      %v476 = vld [vmem:[%s2 + $0x38] sm:$0xff]
      %v477 = vld [vmem:[%s2 + $0x40] sm:$0xff]
      %v478 = vld [vmem:[%s2 + $0x48] sm:$0xff]
      %v479 = vld [vmem:[%s2 + $0x50] sm:$0xff]
      %v480 = vld [vmem:[%s2 + $0x58] sm:$0xff]
      %s481 = scalar_lea.vmem %s1, 96
      %v482 = vld [vmem:[%s481] sm:$0xff]
      %v483 = vld [vmem:[%s481 + $0x8] sm:$0xff]
      %v484 = vld [vmem:[%s481 + $0x10] sm:$0xff]
      %v485 = vld [vmem:[%s481 + $0x18] sm:$0xff]
      %v486 = vld [vmem:[%s481 + $0x20] sm:$0xff]
      %v487 = vld [vmem:[%s481 + $0x28] sm:$0xff]
      %v488 = vld [vmem:[%s481 + $0x30] sm:$0xff]
      %v489 = vld [vmem:[%s481 + $0x38] sm:$0xff]
      %v490 = vld [vmem:[%s481 + $0x40] sm:$0xff]
      %v491 = vld [vmem:[%s481 + $0x48] sm:$0xff]
      %v492 = vld [vmem:[%s481 + $0x50] sm:$0xff]
      %v493 = vld [vmem:[%s481 + $0x58] sm:$0xff]
      %s494 = scalar_lea.vmem %s2, 96
      %v495 = vld [vmem:[%s494] sm:$0xff]
      %v496 = vld [vmem:[%s494 + $0x8] sm:$0xff]
      %v497 = vld [vmem:[%s494 + $0x10] sm:$0xff]
      %v498 = vld [vmem:[%s494 + $0x18] sm:$0xff]
      %v499 = vld [vmem:[%s494 + $0x20] sm:$0xff]
      %v500 = vld [vmem:[%s494 + $0x28] sm:$0xff]
      %v501 = vld [vmem:[%s494 + $0x30] sm:$0xff]
      %v502 = vld [vmem:[%s494 + $0x38] sm:$0xff]
      %v503 = vld [vmem:[%s494 + $0x40] sm:$0xff]
      %v504 = vld [vmem:[%s494 + $0x48] sm:$0xff]
      %v505 = vld [vmem:[%s494 + $0x50] sm:$0xff]
      %v506 = vld [vmem:[%s494 + $0x58] sm:$0xff]
      %v519 = vunpack.c.l.b16 %v482
      %v520 = vunpack.c.h.b16 %v482
      %v521 = vunpack.c.l.b16 %v483
      %v522 = vunpack.c.h.b16 %v483
      %v523 = vunpack.c.l.b16 %v484
      %v524 = vunpack.c.h.b16 %v484
      %v525 = vunpack.c.l.b16 %v485
      %v526 = vunpack.c.h.b16 %v485
      %v527 = vunpack.c.l.b16 %v486
      %v528 = vunpack.c.h.b16 %v486
      %v529 = vunpack.c.l.b16 %v487
      %v530 = vunpack.c.h.b16 %v487
      %v531 = vunpack.c.l.b16 %v488
      %v532 = vunpack.c.h.b16 %v488
      %v533 = vunpack.c.l.b16 %v489
      %v534 = vunpack.c.h.b16 %v489
      %v535 = vunpack.c.l.b16 %v490
      %v536 = vunpack.c.h.b16 %v490
      %v537 = vunpack.c.l.b16 %v491
      %v538 = vunpack.c.h.b16 %v491
      %v539 = vunpack.c.l.b16 %v492
      %v540 = vunpack.c.h.b16 %v492
      %v541 = vunpack.c.l.b16 %v493
      %v542 = vunpack.c.h.b16 %v493
      %v543 = vpack.c.b16 %v521, %v519
      %v544 = vpack.c.b16 %v522, %v520
      %v545 = vpack.c.b16 %v525, %v523
      %v546 = vpack.c.b16 %v526, %v524
      %v547 = vpack.c.b16 %v529, %v527
      %v548 = vpack.c.b16 %v530, %v528
      %v549 = vpack.c.b16 %v533, %v531
      %v550 = vpack.c.b16 %v534, %v532
      %v551 = vpack.c.b16 %v537, %v535
      %v552 = vpack.c.b16 %v538, %v536
      %v553 = vpack.c.b16 %v541, %v539
      %v554 = vpack.c.b16 %v542, %v540
      %vm567 = vcmask 785408
      %v569 = vsel %vm567, %v444, 0
      %571 = vmatpush.bf16.msra.mxu0 0
      %572 = vmatpush.bf16.msra.mxu0 0
      %573 = vmatpush.bf16.msra.mxu0 %v553
      %574 = vmatpush.bf16.msra.mxu0 %v551
      %575 = vmatpush.bf16.msra.mxu0 %v549
      %576 = vmatpush.bf16.msra.mxu0 %v547
      %577 = vmatpush.bf16.msra.mxu0 %v545
      %578 = vmatpush.bf16.msra.mxu0 %v543
      %579 = vmatmul.bf16.gmra.mxu0 %v569
      %v580 = vpop.f32.mrf.mxu0
      %v581 = vadd.f32 0.0, %v580
      %v582 = vpop.f32.mrf.mxu0
      %v583 = vadd.f32 0.0, %v582
      %584 = vdwg.mxu0
      %585 = vmatpush.bf16.msra.mxu0 0
      %586 = vmatpush.bf16.msra.mxu0 0
      %587 = vmatpush.bf16.msra.mxu0 %v554
      %588 = vmatpush.bf16.msra.mxu0 %v552
      %589 = vmatpush.bf16.msra.mxu0 %v550
      %590 = vmatpush.bf16.msra.mxu0 %v548
      %591 = vmatpush.bf16.msra.mxu0 %v546
      %592 = vmatpush.bf16.msra.mxu0 %v544
      %593 = vmatmul.bf16.gmra.mxu0 %v569
      %v594 = vpop.f32.mrf.mxu0
      %v595 = vadd.f32 0.0, %v594
      %v596 = vpop.f32.mrf.mxu0
      %v597 = vadd.f32 0.0, %v596
      %598 = vdwg.mxu0
      %v611 = vunpack.c.l.b16 %v457
      %v612 = vunpack.c.h.b16 %v457
      %v613 = vunpack.c.l.b16 %v458
      %v614 = vunpack.c.h.b16 %v458
      %v615 = vunpack.c.l.b16 %v459
      %v616 = vunpack.c.h.b16 %v459
      %v617 = vunpack.c.l.b16 %v460
      %v618 = vunpack.c.h.b16 %v460
      %v619 = vunpack.c.l.b16 %v461
      %v620 = vunpack.c.h.b16 %v461
      %v621 = vunpack.c.l.b16 %v462
      %v622 = vunpack.c.h.b16 %v462
      %v623 = vunpack.c.l.b16 %v463
      %v624 = vunpack.c.h.b16 %v463
      %v625 = vunpack.c.l.b16 %v464
      %v626 = vunpack.c.h.b16 %v464
      %v627 = vunpack.c.l.b16 %v465
      %v628 = vunpack.c.h.b16 %v465
      %v629 = vunpack.c.l.b16 %v466
      %v630 = vunpack.c.h.b16 %v466
      %v631 = vunpack.c.l.b16 %v467
      %v632 = vunpack.c.h.b16 %v467
      %v633 = vunpack.c.l.b16 %v468
      %v634 = vunpack.c.h.b16 %v468
      %v635 = vpack.c.b16 %v613, %v611
      %v636 = vpack.c.b16 %v614, %v612
      %v637 = vpack.c.b16 %v617, %v615
      %v638 = vpack.c.b16 %v618, %v616
      %v639 = vpack.c.b16 %v621, %v619
      %v640 = vpack.c.b16 %v622, %v620
      %v641 = vpack.c.b16 %v625, %v623
      %v642 = vpack.c.b16 %v626, %v624
      %v643 = vpack.c.b16 %v629, %v627
      %v644 = vpack.c.b16 %v630, %v628
      %v645 = vpack.c.b16 %v633, %v631
      %v646 = vpack.c.b16 %v634, %v632
      %v660 = vsel %vm567, %v440, 0
      %662 = vmatpush.bf16.msra.mxu0 0
      %663 = vmatpush.bf16.msra.mxu0 0
      %664 = vmatpush.bf16.msra.mxu0 %v645
      %665 = vmatpush.bf16.msra.mxu0 %v643
      %666 = vmatpush.bf16.msra.mxu0 %v641
      %667 = vmatpush.bf16.msra.mxu0 %v639
      %668 = vmatpush.bf16.msra.mxu0 %v637
      %669 = vmatpush.bf16.msra.mxu0 %v635
      %670 = vmatmul.bf16.gmra.mxu0 %v660
      %v671 = vpop.f32.mrf.mxu0
      %v672 = vadd.f32 %v581, %v671
      %v673 = vpop.f32.mrf.mxu0
      %v674 = vadd.f32 %v583, %v673
      %675 = vdwg.mxu0
      %676 = vmatpush.bf16.msra.mxu0 0
      %677 = vmatpush.bf16.msra.mxu0 0
      %678 = vmatpush.bf16.msra.mxu0 %v646
      %679 = vmatpush.bf16.msra.mxu0 %v644
      %680 = vmatpush.bf16.msra.mxu0 %v642
      %681 = vmatpush.bf16.msra.mxu0 %v640
      %682 = vmatpush.bf16.msra.mxu0 %v638
      %683 = vmatpush.bf16.msra.mxu0 %v636
      %684 = vmatmul.bf16.gmra.mxu0 %v660
      %v685 = vpop.f32.mrf.mxu0
      %v686 = vadd.f32 %v595, %v685
      %v687 = vpop.f32.mrf.mxu0
      %v688 = vadd.f32 %v597, %v687
      %689 = vdwg.mxu0
      %v702 = vunpack.c.l.b16 %v495
      %v703 = vunpack.c.h.b16 %v495
      %v704 = vunpack.c.l.b16 %v496
      %v705 = vunpack.c.h.b16 %v496
      %v706 = vunpack.c.l.b16 %v497
      %v707 = vunpack.c.h.b16 %v497
      %v708 = vunpack.c.l.b16 %v498
      %v709 = vunpack.c.h.b16 %v498
      %v710 = vunpack.c.l.b16 %v499
      %v711 = vunpack.c.h.b16 %v499
      %v712 = vunpack.c.l.b16 %v500
      %v713 = vunpack.c.h.b16 %v500
      %v714 = vunpack.c.l.b16 %v501
      %v715 = vunpack.c.h.b16 %v501
      %v716 = vunpack.c.l.b16 %v502
      %v717 = vunpack.c.h.b16 %v502
      %v718 = vunpack.c.l.b16 %v503
      %v719 = vunpack.c.h.b16 %v503
      %v720 = vunpack.c.l.b16 %v504
      %v721 = vunpack.c.h.b16 %v504
      %v722 = vunpack.c.l.b16 %v505
      %v723 = vunpack.c.h.b16 %v505
      %v724 = vunpack.c.l.b16 %v506
      %v725 = vunpack.c.h.b16 %v506
      %v726 = vpack.c.b16 %v704, %v702
      %v727 = vpack.c.b16 %v705, %v703
      %v728 = vpack.c.b16 %v708, %v706
      %v729 = vpack.c.b16 %v709, %v707
      %v730 = vpack.c.b16 %v712, %v710
      %v731 = vpack.c.b16 %v713, %v711
      %v732 = vpack.c.b16 %v716, %v714
      %v733 = vpack.c.b16 %v717, %v715
      %v734 = vpack.c.b16 %v720, %v718
      %v735 = vpack.c.b16 %v721, %v719
      %v736 = vpack.c.b16 %v724, %v722
      %v737 = vpack.c.b16 %v725, %v723
      %750 = vmatpush.bf16.msra.mxu0 0
      %751 = vmatpush.bf16.msra.mxu0 0
      %752 = vmatpush.bf16.msra.mxu0 %v736
      %753 = vmatpush.bf16.msra.mxu0 %v734
      %754 = vmatpush.bf16.msra.mxu0 %v732
      %755 = vmatpush.bf16.msra.mxu0 %v730
      %756 = vmatpush.bf16.msra.mxu0 %v728
      %757 = vmatpush.bf16.msra.mxu0 %v726
      %758 = vmatmul.bf16.gmra.mxu0 %v569
      %v759 = vpop.f32.mrf.mxu0
      %v760 = vadd.f32 0.0, %v759
      %v761 = vpop.f32.mrf.mxu0
      %v762 = vadd.f32 0.0, %v761
      %763 = vdwg.mxu0
      %764 = vmatpush.bf16.msra.mxu0 0
      %765 = vmatpush.bf16.msra.mxu0 0
      %766 = vmatpush.bf16.msra.mxu0 %v737
      %767 = vmatpush.bf16.msra.mxu0 %v735
      %768 = vmatpush.bf16.msra.mxu0 %v733
      %769 = vmatpush.bf16.msra.mxu0 %v731
      %770 = vmatpush.bf16.msra.mxu0 %v729
      %771 = vmatpush.bf16.msra.mxu0 %v727
      %772 = vmatmul.bf16.gmra.mxu0 %v569
      %v773 = vpop.f32.mrf.mxu0
      %v774 = vadd.f32 0.0, %v773
      %v775 = vpop.f32.mrf.mxu0
      %v776 = vadd.f32 0.0, %v775
      %777 = vdwg.mxu0
      %v790 = vunpack.c.l.b16 %v469
      %v791 = vunpack.c.h.b16 %v469
      %v792 = vunpack.c.l.b16 %v470
      %v793 = vunpack.c.h.b16 %v470
      %v794 = vunpack.c.l.b16 %v471
      %v795 = vunpack.c.h.b16 %v471
      %v796 = vunpack.c.l.b16 %v472
      %v797 = vunpack.c.h.b16 %v472
      %v798 = vunpack.c.l.b16 %v473
      %v799 = vunpack.c.h.b16 %v473
      %v800 = vunpack.c.l.b16 %v474
      %v801 = vunpack.c.h.b16 %v474
      %v802 = vunpack.c.l.b16 %v475
      %v803 = vunpack.c.h.b16 %v475
      %v804 = vunpack.c.l.b16 %v476
      %v805 = vunpack.c.h.b16 %v476
      %v806 = vunpack.c.l.b16 %v477
      %v807 = vunpack.c.h.b16 %v477
      %v808 = vunpack.c.l.b16 %v478
      %v809 = vunpack.c.h.b16 %v478
      %v810 = vunpack.c.l.b16 %v479
      %v811 = vunpack.c.h.b16 %v479
      %v812 = vunpack.c.l.b16 %v480
      %v813 = vunpack.c.h.b16 %v480
      %v814 = vpack.c.b16 %v792, %v790
      %v815 = vpack.c.b16 %v793, %v791
      %v816 = vpack.c.b16 %v796, %v794
      %v817 = vpack.c.b16 %v797, %v795
      %v818 = vpack.c.b16 %v800, %v798
      %v819 = vpack.c.b16 %v801, %v799
      %v820 = vpack.c.b16 %v804, %v802
      %v821 = vpack.c.b16 %v805, %v803
      %v822 = vpack.c.b16 %v808, %v806
      %v823 = vpack.c.b16 %v809, %v807
      %v824 = vpack.c.b16 %v812, %v810
      %v825 = vpack.c.b16 %v813, %v811
      %838 = vmatpush.bf16.msra.mxu0 0
      %839 = vmatpush.bf16.msra.mxu0 0
      %840 = vmatpush.bf16.msra.mxu0 %v824
      %841 = vmatpush.bf16.msra.mxu0 %v822
      %842 = vmatpush.bf16.msra.mxu0 %v820
      %843 = vmatpush.bf16.msra.mxu0 %v818
      %844 = vmatpush.bf16.msra.mxu0 %v816
      %845 = vmatpush.bf16.msra.mxu0 %v814
      %846 = vmatmul.bf16.gmra.mxu0 %v660
      %v847 = vpop.f32.mrf.mxu0
      %v848 = vadd.f32 %v760, %v847
      %v849 = vpop.f32.mrf.mxu0
      %v850 = vadd.f32 %v762, %v849
      %851 = vdwg.mxu0
      %852 = vmatpush.bf16.msra.mxu0 0
      %853 = vmatpush.bf16.msra.mxu0 0
      %854 = vmatpush.bf16.msra.mxu0 %v825
      %855 = vmatpush.bf16.msra.mxu0 %v823
      %856 = vmatpush.bf16.msra.mxu0 %v821
      %857 = vmatpush.bf16.msra.mxu0 %v819
      %858 = vmatpush.bf16.msra.mxu0 %v817
      %859 = vmatpush.bf16.msra.mxu0 %v815
      %860 = vmatmul.bf16.gmra.mxu0 %v660
      %v861 = vpop.f32.mrf.mxu0
      %v862 = vadd.f32 %v774, %v861
      %v863 = vpop.f32.mrf.mxu0
      %v864 = vadd.f32 %v776, %v863
      %865 = vdwg.mxu0
      %v867 = vsel %vm567, %v447, 0
      %869 = vmatpush.bf16.msra.mxu0 0
      %870 = vmatpush.bf16.msra.mxu0 0
      %871 = vmatpush.bf16.msra.mxu0 %v553
      %872 = vmatpush.bf16.msra.mxu0 %v551
      %873 = vmatpush.bf16.msra.mxu0 %v549
      %874 = vmatpush.bf16.msra.mxu0 %v547
      %875 = vmatpush.bf16.msra.mxu0 %v545
      %876 = vmatpush.bf16.msra.mxu0 %v543
      %877 = vmatmul.bf16.gmra.mxu0 %v867
      %v878 = vpop.f32.mrf.mxu0
      %v879 = vadd.f32 0.0, %v878
      %v880 = vpop.f32.mrf.mxu0
      %v881 = vadd.f32 0.0, %v880
      %882 = vdwg.mxu0
      %883 = vmatpush.bf16.msra.mxu0 0
      %884 = vmatpush.bf16.msra.mxu0 0
      %885 = vmatpush.bf16.msra.mxu0 %v554
      %886 = vmatpush.bf16.msra.mxu0 %v552
      %887 = vmatpush.bf16.msra.mxu0 %v550
      %888 = vmatpush.bf16.msra.mxu0 %v548
      %889 = vmatpush.bf16.msra.mxu0 %v546
      %890 = vmatpush.bf16.msra.mxu0 %v544
      %891 = vmatmul.bf16.gmra.mxu0 %v867
      %v892 = vpop.f32.mrf.mxu0
      %v893 = vadd.f32 0.0, %v892
      %v894 = vpop.f32.mrf.mxu0
      %v895 = vadd.f32 0.0, %v894
      %896 = vdwg.mxu0
      %897 = vmatpush.bf16.msra.mxu0 0
      %898 = vmatpush.bf16.msra.mxu0 0
      %899 = vmatpush.bf16.msra.mxu0 %v645
      %900 = vmatpush.bf16.msra.mxu0 %v643
      %901 = vmatpush.bf16.msra.mxu0 %v641
      %902 = vmatpush.bf16.msra.mxu0 %v639
      %903 = vmatpush.bf16.msra.mxu0 %v637
      %904 = vmatpush.bf16.msra.mxu0 %v635
      %905 = vmatmul.bf16.gmra.mxu0 %v569
      %v906 = vpop.f32.mrf.mxu0
      %v907 = vadd.f32 %v879, %v906
      %v908 = vpop.f32.mrf.mxu0
      %v909 = vadd.f32 %v881, %v908
      %910 = vdwg.mxu0
      %911 = vmatpush.bf16.msra.mxu0 0
      %912 = vmatpush.bf16.msra.mxu0 0
      %913 = vmatpush.bf16.msra.mxu0 %v646
      %914 = vmatpush.bf16.msra.mxu0 %v644
      %915 = vmatpush.bf16.msra.mxu0 %v642
      %916 = vmatpush.bf16.msra.mxu0 %v640
      %917 = vmatpush.bf16.msra.mxu0 %v638
      %918 = vmatpush.bf16.msra.mxu0 %v636
      %919 = vmatmul.bf16.gmra.mxu0 %v569
      %v920 = vpop.f32.mrf.mxu0
      %v921 = vadd.f32 %v893, %v920
      %v922 = vpop.f32.mrf.mxu0
      %v923 = vadd.f32 %v895, %v922
      %924 = vdwg.mxu0
      %925 = vmatpush.bf16.msra.mxu0 0
      %926 = vmatpush.bf16.msra.mxu0 0
      %927 = vmatpush.bf16.msra.mxu0 %v736
      %928 = vmatpush.bf16.msra.mxu0 %v734
      %929 = vmatpush.bf16.msra.mxu0 %v732
      %930 = vmatpush.bf16.msra.mxu0 %v730
      %931 = vmatpush.bf16.msra.mxu0 %v728
      %932 = vmatpush.bf16.msra.mxu0 %v726
      %933 = vmatmul.bf16.gmra.mxu0 %v867
      %v934 = vpop.f32.mrf.mxu0
      %v935 = vadd.f32 0.0, %v934
      %v936 = vpop.f32.mrf.mxu0
      %v937 = vadd.f32 0.0, %v936
      %938 = vdwg.mxu0
      %939 = vmatpush.bf16.msra.mxu0 0
      %940 = vmatpush.bf16.msra.mxu0 0
      %941 = vmatpush.bf16.msra.mxu0 %v737
      %942 = vmatpush.bf16.msra.mxu0 %v735
      %943 = vmatpush.bf16.msra.mxu0 %v733
      %944 = vmatpush.bf16.msra.mxu0 %v731
      %945 = vmatpush.bf16.msra.mxu0 %v729
      %946 = vmatpush.bf16.msra.mxu0 %v727
      %947 = vmatmul.bf16.gmra.mxu0 %v867
      %v948 = vpop.f32.mrf.mxu0
      %v949 = vadd.f32 0.0, %v948
      %v950 = vpop.f32.mrf.mxu0
      %v951 = vadd.f32 0.0, %v950
      %952 = vdwg.mxu0
      %953 = vmatpush.bf16.msra.mxu0 0
      %954 = vmatpush.bf16.msra.mxu0 0
      %955 = vmatpush.bf16.msra.mxu0 %v824
      %956 = vmatpush.bf16.msra.mxu0 %v822
      %957 = vmatpush.bf16.msra.mxu0 %v820
      %958 = vmatpush.bf16.msra.mxu0 %v818
      %959 = vmatpush.bf16.msra.mxu0 %v816
      %960 = vmatpush.bf16.msra.mxu0 %v814
      %961 = vmatmul.bf16.gmra.mxu0 %v569
      %v962 = vpop.f32.mrf.mxu0
      %v963 = vadd.f32 %v935, %v962
      %v964 = vpop.f32.mrf.mxu0
      %v965 = vadd.f32 %v937, %v964
      %966 = vdwg.mxu0
      %967 = vmatpush.bf16.msra.mxu0 0
      %968 = vmatpush.bf16.msra.mxu0 0
      %969 = vmatpush.bf16.msra.mxu0 %v825
      %970 = vmatpush.bf16.msra.mxu0 %v823
      %971 = vmatpush.bf16.msra.mxu0 %v821
      %972 = vmatpush.bf16.msra.mxu0 %v819
      %973 = vmatpush.bf16.msra.mxu0 %v817
      %974 = vmatpush.bf16.msra.mxu0 %v815
      %975 = vmatmul.bf16.gmra.mxu0 %v569
      %v976 = vpop.f32.mrf.mxu0
      %v977 = vadd.f32 %v949, %v976
      %v978 = vpop.f32.mrf.mxu0
      %v979 = vadd.f32 %v951, %v978
      %980 = vdwg.mxu0
      %s981 = scalar_lea.vmem %s1, 192
      %v982 = vld [vmem:[%s981] sm:$0xff]
      %v983 = vld [vmem:[%s981 + $0x8] sm:$0xff]
      %v984 = vld [vmem:[%s981 + $0x10] sm:$0xff]
      %v985 = vld [vmem:[%s981 + $0x18] sm:$0xff]
      %v986 = vld [vmem:[%s981 + $0x20] sm:$0xff]
      %v987 = vld [vmem:[%s981 + $0x28] sm:$0xff]
      %v988 = vld [vmem:[%s981 + $0x30] sm:$0xff]
      %v989 = vld [vmem:[%s981 + $0x38] sm:$0xff]
      %v990 = vld [vmem:[%s981 + $0x40] sm:$0xff]
      %v991 = vld [vmem:[%s981 + $0x48] sm:$0xff]
      %v992 = vld [vmem:[%s981 + $0x50] sm:$0xff]
      %v993 = vld [vmem:[%s981 + $0x58] sm:$0xff]
      %s994 = scalar_lea.vmem %s2, 192
      %v995 = vld [vmem:[%s994] sm:$0xff]
      %v996 = vld [vmem:[%s994 + $0x8] sm:$0xff]
      %v997 = vld [vmem:[%s994 + $0x10] sm:$0xff]
      %v998 = vld [vmem:[%s994 + $0x18] sm:$0xff]
      %v999 = vld [vmem:[%s994 + $0x20] sm:$0xff]
      %v1000 = vld [vmem:[%s994 + $0x28] sm:$0xff]
      %v1001 = vld [vmem:[%s994 + $0x30] sm:$0xff]
      %v1002 = vld [vmem:[%s994 + $0x38] sm:$0xff]
      %v1003 = vld [vmem:[%s994 + $0x40] sm:$0xff]
      %v1004 = vld [vmem:[%s994 + $0x48] sm:$0xff]
      %v1005 = vld [vmem:[%s994 + $0x50] sm:$0xff]
      %v1006 = vld [vmem:[%s994 + $0x58] sm:$0xff]
      %v1019 = vunpack.c.l.b16 %v982
      %v1020 = vunpack.c.h.b16 %v982
      %v1021 = vunpack.c.l.b16 %v983
      %v1022 = vunpack.c.h.b16 %v983
      %v1023 = vunpack.c.l.b16 %v984
      %v1024 = vunpack.c.h.b16 %v984
      %v1025 = vunpack.c.l.b16 %v985
      %v1026 = vunpack.c.h.b16 %v985
      %v1027 = vunpack.c.l.b16 %v986
      %v1028 = vunpack.c.h.b16 %v986
      %v1029 = vunpack.c.l.b16 %v987
      %v1030 = vunpack.c.h.b16 %v987
      %v1031 = vunpack.c.l.b16 %v988
      %v1032 = vunpack.c.h.b16 %v988
      %v1033 = vunpack.c.l.b16 %v989
      %v1034 = vunpack.c.h.b16 %v989
      %v1035 = vunpack.c.l.b16 %v990
      %v1036 = vunpack.c.h.b16 %v990
      %v1037 = vunpack.c.l.b16 %v991
      %v1038 = vunpack.c.h.b16 %v991
      %v1039 = vunpack.c.l.b16 %v992
      %v1040 = vunpack.c.h.b16 %v992
      %v1041 = vunpack.c.l.b16 %v993
      %v1042 = vunpack.c.h.b16 %v993
      %v1043 = vpack.c.b16 %v1021, %v1019
      %v1044 = vpack.c.b16 %v1022, %v1020
      %v1045 = vpack.c.b16 %v1025, %v1023
      %v1046 = vpack.c.b16 %v1026, %v1024
      %v1047 = vpack.c.b16 %v1029, %v1027
      %v1048 = vpack.c.b16 %v1030, %v1028
      %v1049 = vpack.c.b16 %v1033, %v1031
      %v1050 = vpack.c.b16 %v1034, %v1032
      %v1051 = vpack.c.b16 %v1037, %v1035
      %v1052 = vpack.c.b16 %v1038, %v1036
      %v1053 = vpack.c.b16 %v1041, %v1039
      %v1054 = vpack.c.b16 %v1042, %v1040
      %1067 = vmatpush.bf16.msra.mxu0 0
      %1068 = vmatpush.bf16.msra.mxu0 0
      %1069 = vmatpush.bf16.msra.mxu0 %v1053
      %1070 = vmatpush.bf16.msra.mxu0 %v1051
      %1071 = vmatpush.bf16.msra.mxu0 %v1049
      %1072 = vmatpush.bf16.msra.mxu0 %v1047
      %1073 = vmatpush.bf16.msra.mxu0 %v1045
      %1074 = vmatpush.bf16.msra.mxu0 %v1043
      %1075 = vmatmul.bf16.gmra.mxu0 %v867
      %v1076 = vpop.f32.mrf.mxu0
      %v1077 = vadd.f32 0.0, %v1076
      %v1078 = vpop.f32.mrf.mxu0
      %v1079 = vadd.f32 0.0, %v1078
      %1080 = vdwg.mxu0
      %1081 = vmatpush.bf16.msra.mxu0 0
      %1082 = vmatpush.bf16.msra.mxu0 0
      %1083 = vmatpush.bf16.msra.mxu0 %v1054
      %1084 = vmatpush.bf16.msra.mxu0 %v1052
      %1085 = vmatpush.bf16.msra.mxu0 %v1050
      %1086 = vmatpush.bf16.msra.mxu0 %v1048
      %1087 = vmatpush.bf16.msra.mxu0 %v1046
      %1088 = vmatpush.bf16.msra.mxu0 %v1044
      %1089 = vmatmul.bf16.gmra.mxu0 %v867
      %v1090 = vpop.f32.mrf.mxu0
      %v1091 = vadd.f32 0.0, %v1090
      %v1092 = vpop.f32.mrf.mxu0
      %v1093 = vadd.f32 0.0, %v1092
      %1094 = vdwg.mxu0
      %v1095 = vadd.f32 %v672, %v1077
      %v1096 = vadd.f32 %v686, %v1091
      %v1097 = vadd.f32 %v674, %v1079
      %v1098 = vadd.f32 %v688, %v1093
      %v1111 = vunpack.c.l.b16 %v995
      %v1112 = vunpack.c.h.b16 %v995
      %v1113 = vunpack.c.l.b16 %v996
      %v1114 = vunpack.c.h.b16 %v996
      %v1115 = vunpack.c.l.b16 %v997
      %v1116 = vunpack.c.h.b16 %v997
      %v1117 = vunpack.c.l.b16 %v998
      %v1118 = vunpack.c.h.b16 %v998
      %v1119 = vunpack.c.l.b16 %v999
      %v1120 = vunpack.c.h.b16 %v999
      %v1121 = vunpack.c.l.b16 %v1000
      %v1122 = vunpack.c.h.b16 %v1000
      %v1123 = vunpack.c.l.b16 %v1001
      %v1124 = vunpack.c.h.b16 %v1001
      %v1125 = vunpack.c.l.b16 %v1002
      %v1126 = vunpack.c.h.b16 %v1002
      %v1127 = vunpack.c.l.b16 %v1003
      %v1128 = vunpack.c.h.b16 %v1003
      %v1129 = vunpack.c.l.b16 %v1004
      %v1130 = vunpack.c.h.b16 %v1004
      %v1131 = vunpack.c.l.b16 %v1005
      %v1132 = vunpack.c.h.b16 %v1005
      %v1133 = vunpack.c.l.b16 %v1006
      %v1134 = vunpack.c.h.b16 %v1006
      %v1135 = vpack.c.b16 %v1113, %v1111
      %v1136 = vpack.c.b16 %v1114, %v1112
      %v1137 = vpack.c.b16 %v1117, %v1115
      %v1138 = vpack.c.b16 %v1118, %v1116
      %v1139 = vpack.c.b16 %v1121, %v1119
      %v1140 = vpack.c.b16 %v1122, %v1120
      %v1141 = vpack.c.b16 %v1125, %v1123
      %v1142 = vpack.c.b16 %v1126, %v1124
      %v1143 = vpack.c.b16 %v1129, %v1127
      %v1144 = vpack.c.b16 %v1130, %v1128
      %v1145 = vpack.c.b16 %v1133, %v1131
      %v1146 = vpack.c.b16 %v1134, %v1132
      %1159 = vmatpush.bf16.msra.mxu0 0
      %1160 = vmatpush.bf16.msra.mxu0 0
      %1161 = vmatpush.bf16.msra.mxu0 %v1145
      %1162 = vmatpush.bf16.msra.mxu0 %v1143
      %1163 = vmatpush.bf16.msra.mxu0 %v1141
      %1164 = vmatpush.bf16.msra.mxu0 %v1139
      %1165 = vmatpush.bf16.msra.mxu0 %v1137
      %1166 = vmatpush.bf16.msra.mxu0 %v1135
      %1167 = vmatmul.bf16.gmra.mxu0 %v867
      %v1168 = vpop.f32.mrf.mxu0
      %v1169 = vadd.f32 0.0, %v1168
      %v1170 = vpop.f32.mrf.mxu0
      %v1171 = vadd.f32 0.0, %v1170
      %1172 = vdwg.mxu0
      %1173 = vmatpush.bf16.msra.mxu0 0
      %1174 = vmatpush.bf16.msra.mxu0 0
      %1175 = vmatpush.bf16.msra.mxu0 %v1146
      %1176 = vmatpush.bf16.msra.mxu0 %v1144
      %1177 = vmatpush.bf16.msra.mxu0 %v1142
      %1178 = vmatpush.bf16.msra.mxu0 %v1140
      %1179 = vmatpush.bf16.msra.mxu0 %v1138
      %1180 = vmatpush.bf16.msra.mxu0 %v1136
      %1181 = vmatmul.bf16.gmra.mxu0 %v867
      %v1182 = vpop.f32.mrf.mxu0
      %v1183 = vadd.f32 0.0, %v1182
      %v1184 = vpop.f32.mrf.mxu0
      %v1185 = vadd.f32 0.0, %v1184
      %1186 = vdwg.mxu0
      %v1187 = vadd.f32 %v848, %v1169
      %v1188 = vadd.f32 %v862, %v1183
      %v1189 = vadd.f32 %v850, %v1171
      %v1190 = vadd.f32 %v864, %v1185
      %v1192 = vsel %vm567, %v450, 0
      %1194 = vmatpush.bf16.msra.mxu0 0
      %1195 = vmatpush.bf16.msra.mxu0 0
      %1196 = vmatpush.bf16.msra.mxu0 %v1053
      %1197 = vmatpush.bf16.msra.mxu0 %v1051
      %1198 = vmatpush.bf16.msra.mxu0 %v1049
      %1199 = vmatpush.bf16.msra.mxu0 %v1047
      %1200 = vmatpush.bf16.msra.mxu0 %v1045
      %1201 = vmatpush.bf16.msra.mxu0 %v1043
      %1202 = vmatmul.bf16.gmra.mxu0 %v1192
      %v1203 = vpop.f32.mrf.mxu0
      %v1204 = vadd.f32 0.0, %v1203
      %v1205 = vpop.f32.mrf.mxu0
      %v1206 = vadd.f32 0.0, %v1205
      %1207 = vdwg.mxu0
      %1208 = vmatpush.bf16.msra.mxu0 0
      %1209 = vmatpush.bf16.msra.mxu0 0
      %1210 = vmatpush.bf16.msra.mxu0 %v1054
      %1211 = vmatpush.bf16.msra.mxu0 %v1052
      %1212 = vmatpush.bf16.msra.mxu0 %v1050
      %1213 = vmatpush.bf16.msra.mxu0 %v1048
      %1214 = vmatpush.bf16.msra.mxu0 %v1046
      %1215 = vmatpush.bf16.msra.mxu0 %v1044
      %1216 = vmatmul.bf16.gmra.mxu0 %v1192
      %v1217 = vpop.f32.mrf.mxu0
      %v1218 = vadd.f32 0.0, %v1217
      %v1219 = vpop.f32.mrf.mxu0
      %v1220 = vadd.f32 0.0, %v1219
      %1221 = vdwg.mxu0
      %v1222 = vadd.f32 %v907, %v1204
      %v1223 = vadd.f32 %v921, %v1218
      %v1224 = vadd.f32 %v909, %v1206
      %v1225 = vadd.f32 %v923, %v1220
      %1226 = vmatpush.bf16.msra.mxu0 0
      %1227 = vmatpush.bf16.msra.mxu0 0
      %1228 = vmatpush.bf16.msra.mxu0 %v1145
      %1229 = vmatpush.bf16.msra.mxu0 %v1143
      %1230 = vmatpush.bf16.msra.mxu0 %v1141
      %1231 = vmatpush.bf16.msra.mxu0 %v1139
      %1232 = vmatpush.bf16.msra.mxu0 %v1137
      %1233 = vmatpush.bf16.msra.mxu0 %v1135
      %1234 = vmatmul.bf16.gmra.mxu0 %v1192
      %v1235 = vpop.f32.mrf.mxu0
      %v1236 = vadd.f32 0.0, %v1235
      %v1237 = vpop.f32.mrf.mxu0
      %v1238 = vadd.f32 0.0, %v1237
      %1239 = vdwg.mxu0
      %1240 = vmatpush.bf16.msra.mxu0 0
      %1241 = vmatpush.bf16.msra.mxu0 0
      %1242 = vmatpush.bf16.msra.mxu0 %v1146
      %1243 = vmatpush.bf16.msra.mxu0 %v1144
      %1244 = vmatpush.bf16.msra.mxu0 %v1142
      %1245 = vmatpush.bf16.msra.mxu0 %v1140
      %1246 = vmatpush.bf16.msra.mxu0 %v1138
      %1247 = vmatpush.bf16.msra.mxu0 %v1136
      %1248 = vmatmul.bf16.gmra.mxu0 %v1192
      %v1249 = vpop.f32.mrf.mxu0
      %v1250 = vadd.f32 0.0, %v1249
      %v1251 = vpop.f32.mrf.mxu0
      %v1252 = vadd.f32 0.0, %v1251
      %1253 = vdwg.mxu0
      %v1254 = vadd.f32 %v963, %v1236
      %v1255 = vadd.f32 %v977, %v1250
      %v1256 = vadd.f32 %v965, %v1238
      %v1257 = vadd.f32 %v979, %v1252
      %s1258 = scalar_lea.vmem %s1, 288
      %v1259 = vld [vmem:[%s1258] sm:$0xff]
      %v1260 = vld [vmem:[%s1258 + $0x8] sm:$0xff]
      %v1261 = vld [vmem:[%s1258 + $0x10] sm:$0xff]
      %v1262 = vld [vmem:[%s1258 + $0x18] sm:$0xff]
      %v1263 = vld [vmem:[%s1258 + $0x20] sm:$0xff]
      %v1264 = vld [vmem:[%s1258 + $0x28] sm:$0xff]
      %v1265 = vld [vmem:[%s1258 + $0x30] sm:$0xff]
      %v1266 = vld [vmem:[%s1258 + $0x38] sm:$0xff]
      %v1267 = vld [vmem:[%s1258 + $0x40] sm:$0xff]
      %v1268 = vld [vmem:[%s1258 + $0x48] sm:$0xff]
      %v1269 = vld [vmem:[%s1258 + $0x50] sm:$0xff]
      %v1270 = vld [vmem:[%s1258 + $0x58] sm:$0xff]
      %s1271 = scalar_lea.vmem %s2, 288
      %v1272 = vld [vmem:[%s1271] sm:$0xff]
      %v1273 = vld [vmem:[%s1271 + $0x8] sm:$0xff]
      %v1274 = vld [vmem:[%s1271 + $0x10] sm:$0xff]
      %v1275 = vld [vmem:[%s1271 + $0x18] sm:$0xff]
      %v1276 = vld [vmem:[%s1271 + $0x20] sm:$0xff]
      %v1277 = vld [vmem:[%s1271 + $0x28] sm:$0xff]
      %v1278 = vld [vmem:[%s1271 + $0x30] sm:$0xff]
      %v1279 = vld [vmem:[%s1271 + $0x38] sm:$0xff]
      %v1280 = vld [vmem:[%s1271 + $0x40] sm:$0xff]
      %v1281 = vld [vmem:[%s1271 + $0x48] sm:$0xff]
      %v1282 = vld [vmem:[%s1271 + $0x50] sm:$0xff]
      %v1283 = vld [vmem:[%s1271 + $0x58] sm:$0xff]
      %v1296 = vunpack.c.l.b16 %v1259
      %v1297 = vunpack.c.h.b16 %v1259
      %v1298 = vunpack.c.l.b16 %v1260
      %v1299 = vunpack.c.h.b16 %v1260
      %v1300 = vunpack.c.l.b16 %v1261
      %v1301 = vunpack.c.h.b16 %v1261
      %v1302 = vunpack.c.l.b16 %v1262
      %v1303 = vunpack.c.h.b16 %v1262
      %v1304 = vunpack.c.l.b16 %v1263
      %v1305 = vunpack.c.h.b16 %v1263
      %v1306 = vunpack.c.l.b16 %v1264
      %v1307 = vunpack.c.h.b16 %v1264
      %v1308 = vunpack.c.l.b16 %v1265
      %v1309 = vunpack.c.h.b16 %v1265
      %v1310 = vunpack.c.l.b16 %v1266
      %v1311 = vunpack.c.h.b16 %v1266
      %v1312 = vunpack.c.l.b16 %v1267
      %v1313 = vunpack.c.h.b16 %v1267
      %v1314 = vunpack.c.l.b16 %v1268
      %v1315 = vunpack.c.h.b16 %v1268
      %v1316 = vunpack.c.l.b16 %v1269
      %v1317 = vunpack.c.h.b16 %v1269
      %v1318 = vunpack.c.l.b16 %v1270
      %v1319 = vunpack.c.h.b16 %v1270
      %v1320 = vpack.c.b16 %v1298, %v1296
      %v1321 = vpack.c.b16 %v1299, %v1297
      %v1322 = vpack.c.b16 %v1302, %v1300
      %v1323 = vpack.c.b16 %v1303, %v1301
      %v1324 = vpack.c.b16 %v1306, %v1304
      %v1325 = vpack.c.b16 %v1307, %v1305
      %v1326 = vpack.c.b16 %v1310, %v1308
      %v1327 = vpack.c.b16 %v1311, %v1309
      %v1328 = vpack.c.b16 %v1314, %v1312
      %v1329 = vpack.c.b16 %v1315, %v1313
      %v1330 = vpack.c.b16 %v1318, %v1316
      %v1331 = vpack.c.b16 %v1319, %v1317
      %1344 = vmatpush.bf16.msra.mxu0 0
      %1345 = vmatpush.bf16.msra.mxu0 0
      %1346 = vmatpush.bf16.msra.mxu0 %v1330
      %1347 = vmatpush.bf16.msra.mxu0 %v1328
      %1348 = vmatpush.bf16.msra.mxu0 %v1326
      %1349 = vmatpush.bf16.msra.mxu0 %v1324
      %1350 = vmatpush.bf16.msra.mxu0 %v1322
      %1351 = vmatpush.bf16.msra.mxu0 %v1320
      %1352 = vmatmul.bf16.gmra.mxu0 %v1192
      %v1353 = vpop.f32.mrf.mxu0
      %v1354 = vadd.f32 0.0, %v1353
      %v1355 = vpop.f32.mrf.mxu0
      %v1356 = vadd.f32 0.0, %v1355
      %1357 = vdwg.mxu0
      %1358 = vmatpush.bf16.msra.mxu0 0
      %1359 = vmatpush.bf16.msra.mxu0 0
      %1360 = vmatpush.bf16.msra.mxu0 %v1331
      %1361 = vmatpush.bf16.msra.mxu0 %v1329
      %1362 = vmatpush.bf16.msra.mxu0 %v1327
      %1363 = vmatpush.bf16.msra.mxu0 %v1325
      %1364 = vmatpush.bf16.msra.mxu0 %v1323
      %1365 = vmatpush.bf16.msra.mxu0 %v1321
      %1366 = vmatmul.bf16.gmra.mxu0 %v1192
      %v1367 = vpop.f32.mrf.mxu0
      %v1368 = vadd.f32 0.0, %v1367
      %v1369 = vpop.f32.mrf.mxu0
      %v1370 = vadd.f32 0.0, %v1369
      %1371 = vdwg.mxu0
      %v1372 = vadd.f32 %v1095, %v1354
      %v1373 = vadd.f32 %v1096, %v1368
      %v1374 = vadd.f32 %v1097, %v1356
      %v1375 = vadd.f32 %v1098, %v1370
      %v1388 = vunpack.c.l.b16 %v1272
      %v1389 = vunpack.c.h.b16 %v1272
      %v1390 = vunpack.c.l.b16 %v1273
      %v1391 = vunpack.c.h.b16 %v1273
      %v1392 = vunpack.c.l.b16 %v1274
      %v1393 = vunpack.c.h.b16 %v1274
      %v1394 = vunpack.c.l.b16 %v1275
      %v1395 = vunpack.c.h.b16 %v1275
      %v1396 = vunpack.c.l.b16 %v1276
      %v1397 = vunpack.c.h.b16 %v1276
      %v1398 = vunpack.c.l.b16 %v1277
      %v1399 = vunpack.c.h.b16 %v1277
      %v1400 = vunpack.c.l.b16 %v1278
      %v1401 = vunpack.c.h.b16 %v1278
      %v1402 = vunpack.c.l.b16 %v1279
      %v1403 = vunpack.c.h.b16 %v1279
      %v1404 = vunpack.c.l.b16 %v1280
      %v1405 = vunpack.c.h.b16 %v1280
      %v1406 = vunpack.c.l.b16 %v1281
      %v1407 = vunpack.c.h.b16 %v1281
      %v1408 = vunpack.c.l.b16 %v1282
      %v1409 = vunpack.c.h.b16 %v1282
      %v1410 = vunpack.c.l.b16 %v1283
      %v1411 = vunpack.c.h.b16 %v1283
      %v1412 = vpack.c.b16 %v1390, %v1388
      %v1413 = vpack.c.b16 %v1391, %v1389
      %v1414 = vpack.c.b16 %v1394, %v1392
      %v1415 = vpack.c.b16 %v1395, %v1393
      %v1416 = vpack.c.b16 %v1398, %v1396
      %v1417 = vpack.c.b16 %v1399, %v1397
      %v1418 = vpack.c.b16 %v1402, %v1400
      %v1419 = vpack.c.b16 %v1403, %v1401
      %v1420 = vpack.c.b16 %v1406, %v1404
      %v1421 = vpack.c.b16 %v1407, %v1405
      %v1422 = vpack.c.b16 %v1410, %v1408
      %v1423 = vpack.c.b16 %v1411, %v1409
      %1436 = vmatpush.bf16.msra.mxu0 0
      %1437 = vmatpush.bf16.msra.mxu0 0
      %1438 = vmatpush.bf16.msra.mxu0 %v1422
      %1439 = vmatpush.bf16.msra.mxu0 %v1420
      %1440 = vmatpush.bf16.msra.mxu0 %v1418
      %1441 = vmatpush.bf16.msra.mxu0 %v1416
      %1442 = vmatpush.bf16.msra.mxu0 %v1414
      %1443 = vmatpush.bf16.msra.mxu0 %v1412
      %1444 = vmatmul.bf16.gmra.mxu0 %v1192
      %v1445 = vpop.f32.mrf.mxu0
      %v1446 = vadd.f32 0.0, %v1445
      %v1447 = vpop.f32.mrf.mxu0
      %v1448 = vadd.f32 0.0, %v1447
      %1449 = vdwg.mxu0
      %1450 = vmatpush.bf16.msra.mxu0 0
      %1451 = vmatpush.bf16.msra.mxu0 0
      %1452 = vmatpush.bf16.msra.mxu0 %v1423
      %1453 = vmatpush.bf16.msra.mxu0 %v1421
      %1454 = vmatpush.bf16.msra.mxu0 %v1419
      %1455 = vmatpush.bf16.msra.mxu0 %v1417
      %1456 = vmatpush.bf16.msra.mxu0 %v1415
      %1457 = vmatpush.bf16.msra.mxu0 %v1413
      %1458 = vmatmul.bf16.gmra.mxu0 %v1192
      %v1459 = vpop.f32.mrf.mxu0
      %v1460 = vadd.f32 0.0, %v1459
      %v1461 = vpop.f32.mrf.mxu0
      %v1462 = vadd.f32 0.0, %v1461
      %1463 = vdwg.mxu0
      %v1464 = vadd.f32 %v1187, %v1446
      %v1465 = vadd.f32 %v1188, %v1460
      %v1466 = vadd.f32 %v1189, %v1448
      %v1467 = vadd.f32 %v1190, %v1462
      %v1469 = vsel %vm567, %v453, 0
      %1471 = vmatpush.bf16.msra.mxu0 0
      %1472 = vmatpush.bf16.msra.mxu0 0
      %1473 = vmatpush.bf16.msra.mxu0 %v1330
      %1474 = vmatpush.bf16.msra.mxu0 %v1328
      %1475 = vmatpush.bf16.msra.mxu0 %v1326
      %1476 = vmatpush.bf16.msra.mxu0 %v1324
      %1477 = vmatpush.bf16.msra.mxu0 %v1322
      %1478 = vmatpush.bf16.msra.mxu0 %v1320
      %1479 = vmatmul.bf16.gmra.mxu0 %v1469
      %v1480 = vpop.f32.mrf.mxu0
      %v1481 = vadd.f32 0.0, %v1480
      %v1482 = vpop.f32.mrf.mxu0
      %v1483 = vadd.f32 0.0, %v1482
      %1484 = vdwg.mxu0
      %1485 = vmatpush.bf16.msra.mxu0 0
      %1486 = vmatpush.bf16.msra.mxu0 0
      %1487 = vmatpush.bf16.msra.mxu0 %v1331
      %1488 = vmatpush.bf16.msra.mxu0 %v1329
      %1489 = vmatpush.bf16.msra.mxu0 %v1327
      %1490 = vmatpush.bf16.msra.mxu0 %v1325
      %1491 = vmatpush.bf16.msra.mxu0 %v1323
      %1492 = vmatpush.bf16.msra.mxu0 %v1321
      %1493 = vmatmul.bf16.gmra.mxu0 %v1469
      %v1494 = vpop.f32.mrf.mxu0
      %v1495 = vadd.f32 0.0, %v1494
      %v1496 = vpop.f32.mrf.mxu0
      %v1497 = vadd.f32 0.0, %v1496
      %1498 = vdwg.mxu0
      %v1499 = vadd.f32 %v1222, %v1481
      %v1500 = vadd.f32 %v1223, %v1495
      %v1501 = vadd.f32 %v1224, %v1483
      %v1502 = vadd.f32 %v1225, %v1497
      %1503 = vmatpush.bf16.msra.mxu0 0
      %1504 = vmatpush.bf16.msra.mxu0 0
      %1505 = vmatpush.bf16.msra.mxu0 %v1422
      %1506 = vmatpush.bf16.msra.mxu0 %v1420
      %1507 = vmatpush.bf16.msra.mxu0 %v1418
      %1508 = vmatpush.bf16.msra.mxu0 %v1416
      %1509 = vmatpush.bf16.msra.mxu0 %v1414
      %1510 = vmatpush.bf16.msra.mxu0 %v1412
      %1511 = vmatmul.bf16.gmra.mxu0 %v1469
      %v1512 = vpop.f32.mrf.mxu0
      %v1513 = vadd.f32 0.0, %v1512
      %v1514 = vpop.f32.mrf.mxu0
      %v1515 = vadd.f32 0.0, %v1514
      %1516 = vdwg.mxu0
      %1517 = vmatpush.bf16.msra.mxu0 0
      %1518 = vmatpush.bf16.msra.mxu0 0
      %1519 = vmatpush.bf16.msra.mxu0 %v1423
      %1520 = vmatpush.bf16.msra.mxu0 %v1421
      %1521 = vmatpush.bf16.msra.mxu0 %v1419
      %1522 = vmatpush.bf16.msra.mxu0 %v1417
      %1523 = vmatpush.bf16.msra.mxu0 %v1415
      %1524 = vmatpush.bf16.msra.mxu0 %v1413
      %1525 = vmatmul.bf16.gmra.mxu0 %v1469
      %v1526 = vpop.f32.mrf.mxu0
      %v1527 = vadd.f32 0.0, %v1526
      %v1528 = vpop.f32.mrf.mxu0
      %v1529 = vadd.f32 0.0, %v1528
      %1530 = vdwg.mxu0
      %v1531 = vadd.f32 %v1254, %v1513
      %v1532 = vadd.f32 %v1255, %v1527
      %v1533 = vadd.f32 %v1256, %v1515
      %v1534 = vadd.f32 %v1257, %v1529
      %s1535 = scalar_lea.vmem %s1, 384
      %v1536 = vld [vmem:[%s1535] sm:$0xff]
      %v1537 = vld [vmem:[%s1535 + $0x8] sm:$0xff]
      %v1538 = vld [vmem:[%s1535 + $0x10] sm:$0xff]
      %v1539 = vld [vmem:[%s1535 + $0x18] sm:$0xff]
      %v1540 = vld [vmem:[%s1535 + $0x20] sm:$0xff]
      %v1541 = vld [vmem:[%s1535 + $0x28] sm:$0xff]
      %v1542 = vld [vmem:[%s1535 + $0x30] sm:$0xff]
      %v1543 = vld [vmem:[%s1535 + $0x38] sm:$0xff]
      %v1544 = vld [vmem:[%s1535 + $0x40] sm:$0xff]
      %v1545 = vld [vmem:[%s1535 + $0x48] sm:$0xff]
      %v1546 = vld [vmem:[%s1535 + $0x50] sm:$0xff]
      %v1547 = vld [vmem:[%s1535 + $0x58] sm:$0xff]
      %s1548 = scalar_lea.vmem %s2, 384
      %v1549 = vld [vmem:[%s1548] sm:$0xff]
      %v1550 = vld [vmem:[%s1548 + $0x8] sm:$0xff]
      %v1551 = vld [vmem:[%s1548 + $0x10] sm:$0xff]
      %v1552 = vld [vmem:[%s1548 + $0x18] sm:$0xff]
      %v1553 = vld [vmem:[%s1548 + $0x20] sm:$0xff]
      %v1554 = vld [vmem:[%s1548 + $0x28] sm:$0xff]
      %v1555 = vld [vmem:[%s1548 + $0x30] sm:$0xff]
      %v1556 = vld [vmem:[%s1548 + $0x38] sm:$0xff]
      %v1557 = vld [vmem:[%s1548 + $0x40] sm:$0xff]
      %v1558 = vld [vmem:[%s1548 + $0x48] sm:$0xff]
      %v1559 = vld [vmem:[%s1548 + $0x50] sm:$0xff]
      %v1560 = vld [vmem:[%s1548 + $0x58] sm:$0xff]
      %v1573 = vunpack.c.l.b16 %v1536
      %v1574 = vunpack.c.h.b16 %v1536
      %v1575 = vunpack.c.l.b16 %v1537
      %v1576 = vunpack.c.h.b16 %v1537
      %v1577 = vunpack.c.l.b16 %v1538
      %v1578 = vunpack.c.h.b16 %v1538
      %v1579 = vunpack.c.l.b16 %v1539
      %v1580 = vunpack.c.h.b16 %v1539
      %v1581 = vunpack.c.l.b16 %v1540
      %v1582 = vunpack.c.h.b16 %v1540
      %v1583 = vunpack.c.l.b16 %v1541
      %v1584 = vunpack.c.h.b16 %v1541
      %v1585 = vunpack.c.l.b16 %v1542
      %v1586 = vunpack.c.h.b16 %v1542
      %v1587 = vunpack.c.l.b16 %v1543
      %v1588 = vunpack.c.h.b16 %v1543
      %v1589 = vunpack.c.l.b16 %v1544
      %v1590 = vunpack.c.h.b16 %v1544
      %v1591 = vunpack.c.l.b16 %v1545
      %v1592 = vunpack.c.h.b16 %v1545
      %v1593 = vunpack.c.l.b16 %v1546
      %v1594 = vunpack.c.h.b16 %v1546
      %v1595 = vunpack.c.l.b16 %v1547
      %v1596 = vunpack.c.h.b16 %v1547
      %v1597 = vpack.c.b16 %v1575, %v1573
      %v1598 = vpack.c.b16 %v1576, %v1574
      %v1599 = vpack.c.b16 %v1579, %v1577
      %v1600 = vpack.c.b16 %v1580, %v1578
      %v1601 = vpack.c.b16 %v1583, %v1581
      %v1602 = vpack.c.b16 %v1584, %v1582
      %v1603 = vpack.c.b16 %v1587, %v1585
      %v1604 = vpack.c.b16 %v1588, %v1586
      %v1605 = vpack.c.b16 %v1591, %v1589
      %v1606 = vpack.c.b16 %v1592, %v1590
      %v1607 = vpack.c.b16 %v1595, %v1593
      %v1608 = vpack.c.b16 %v1596, %v1594
      %1621 = vmatpush.bf16.msra.mxu0 0
      %1622 = vmatpush.bf16.msra.mxu0 0
      %1623 = vmatpush.bf16.msra.mxu0 %v1607
      %1624 = vmatpush.bf16.msra.mxu0 %v1605
      %1625 = vmatpush.bf16.msra.mxu0 %v1603
      %1626 = vmatpush.bf16.msra.mxu0 %v1601
      %1627 = vmatpush.bf16.msra.mxu0 %v1599
      %1628 = vmatpush.bf16.msra.mxu0 %v1597
      %1629 = vmatmul.bf16.gmra.mxu0 %v1469
      %v1630 = vpop.f32.mrf.mxu0
      %v1631 = vadd.f32 0.0, %v1630
      %v1632 = vpop.f32.mrf.mxu0
      %v1633 = vadd.f32 0.0, %v1632
      %1634 = vdwg.mxu0
      %1635 = vmatpush.bf16.msra.mxu0 0
      %1636 = vmatpush.bf16.msra.mxu0 0
      %1637 = vmatpush.bf16.msra.mxu0 %v1608
      %1638 = vmatpush.bf16.msra.mxu0 %v1606
      %1639 = vmatpush.bf16.msra.mxu0 %v1604
      %1640 = vmatpush.bf16.msra.mxu0 %v1602
      %1641 = vmatpush.bf16.msra.mxu0 %v1600
      %1642 = vmatpush.bf16.msra.mxu0 %v1598
      %1643 = vmatmul.bf16.gmra.mxu0 %v1469
      %v1644 = vpop.f32.mrf.mxu0
      %v1645 = vadd.f32 0.0, %v1644
      %v1646 = vpop.f32.mrf.mxu0
      %v1647 = vadd.f32 0.0, %v1646
      %1648 = vdwg.mxu0
      %v1649 = vadd.f32 %v1372, %v1631
      %v1650 = vadd.f32 %v1373, %v1645
      %v1651 = vadd.f32 %v1374, %v1633
      %v1652 = vadd.f32 %v1375, %v1647
      %v1665 = vunpack.c.l.b16 %v1549
      %v1666 = vunpack.c.h.b16 %v1549
      %v1667 = vunpack.c.l.b16 %v1550
      %v1668 = vunpack.c.h.b16 %v1550
      %v1669 = vunpack.c.l.b16 %v1551
      %v1670 = vunpack.c.h.b16 %v1551
      %v1671 = vunpack.c.l.b16 %v1552
      %v1672 = vunpack.c.h.b16 %v1552
      %v1673 = vunpack.c.l.b16 %v1553
      %v1674 = vunpack.c.h.b16 %v1553
      %v1675 = vunpack.c.l.b16 %v1554
      %v1676 = vunpack.c.h.b16 %v1554
      %v1677 = vunpack.c.l.b16 %v1555
      %v1678 = vunpack.c.h.b16 %v1555
      %v1679 = vunpack.c.l.b16 %v1556
      %v1680 = vunpack.c.h.b16 %v1556
      %v1681 = vunpack.c.l.b16 %v1557
      %v1682 = vunpack.c.h.b16 %v1557
      %v1683 = vunpack.c.l.b16 %v1558
      %v1684 = vunpack.c.h.b16 %v1558
      %v1685 = vunpack.c.l.b16 %v1559
      %v1686 = vunpack.c.h.b16 %v1559
      %v1687 = vunpack.c.l.b16 %v1560
      %v1688 = vunpack.c.h.b16 %v1560
      %v1689 = vpack.c.b16 %v1667, %v1665
      %v1690 = vpack.c.b16 %v1668, %v1666
      %v1691 = vpack.c.b16 %v1671, %v1669
      %v1692 = vpack.c.b16 %v1672, %v1670
      %v1693 = vpack.c.b16 %v1675, %v1673
      %v1694 = vpack.c.b16 %v1676, %v1674
      %v1695 = vpack.c.b16 %v1679, %v1677
      %v1696 = vpack.c.b16 %v1680, %v1678
      %v1697 = vpack.c.b16 %v1683, %v1681
      %v1698 = vpack.c.b16 %v1684, %v1682
      %v1699 = vpack.c.b16 %v1687, %v1685
      %v1700 = vpack.c.b16 %v1688, %v1686
      %1713 = vmatpush.bf16.msra.mxu0 0
      %1714 = vmatpush.bf16.msra.mxu0 0
      %1715 = vmatpush.bf16.msra.mxu0 %v1699
      %1716 = vmatpush.bf16.msra.mxu0 %v1697
      %1717 = vmatpush.bf16.msra.mxu0 %v1695
      %1718 = vmatpush.bf16.msra.mxu0 %v1693
      %1719 = vmatpush.bf16.msra.mxu0 %v1691
      %1720 = vmatpush.bf16.msra.mxu0 %v1689
      %1721 = vmatmul.bf16.gmra.mxu0 %v1469
      %v1722 = vpop.f32.mrf.mxu0
      %v1723 = vadd.f32 0.0, %v1722
      %v1724 = vpop.f32.mrf.mxu0
      %v1725 = vadd.f32 0.0, %v1724
      %1726 = vdwg.mxu0
      %1727 = vmatpush.bf16.msra.mxu0 0
      %1728 = vmatpush.bf16.msra.mxu0 0
      %1729 = vmatpush.bf16.msra.mxu0 %v1700
      %1730 = vmatpush.bf16.msra.mxu0 %v1698
      %1731 = vmatpush.bf16.msra.mxu0 %v1696
      %1732 = vmatpush.bf16.msra.mxu0 %v1694
      %1733 = vmatpush.bf16.msra.mxu0 %v1692
      %1734 = vmatpush.bf16.msra.mxu0 %v1690
      %1735 = vmatmul.bf16.gmra.mxu0 %v1469
      %v1736 = vpop.f32.mrf.mxu0
      %v1737 = vadd.f32 0.0, %v1736
      %v1738 = vpop.f32.mrf.mxu0
      %v1739 = vadd.f32 0.0, %v1738
      %1740 = vdwg.mxu0
      %v1741 = vadd.f32 %v1464, %v1723
      %v1742 = vadd.f32 %v1465, %v1737
      %v1743 = vadd.f32 %v1466, %v1725
      %v1744 = vadd.f32 %v1467, %v1739
      %v1746 = vsel %vm567, %v456, 0
      %1748 = vmatpush.bf16.msra.mxu0 0
      %1749 = vmatpush.bf16.msra.mxu0 0
      %1750 = vmatpush.bf16.msra.mxu0 %v1607
      %1751 = vmatpush.bf16.msra.mxu0 %v1605
      %1752 = vmatpush.bf16.msra.mxu0 %v1603
      %1753 = vmatpush.bf16.msra.mxu0 %v1601
      %1754 = vmatpush.bf16.msra.mxu0 %v1599
      %1755 = vmatpush.bf16.msra.mxu0 %v1597
      %1756 = vmatmul.bf16.gmra.mxu0 %v1746
      %v1757 = vpop.f32.mrf.mxu0
      %v1758 = vadd.f32 0.0, %v1757
      %v1759 = vpop.f32.mrf.mxu0
      %v1760 = vadd.f32 0.0, %v1759
      %1761 = vdwg.mxu0
      %1762 = vmatpush.bf16.msra.mxu0 0
      %1763 = vmatpush.bf16.msra.mxu0 0
      %1764 = vmatpush.bf16.msra.mxu0 %v1608
      %1765 = vmatpush.bf16.msra.mxu0 %v1606
      %1766 = vmatpush.bf16.msra.mxu0 %v1604
      %1767 = vmatpush.bf16.msra.mxu0 %v1602
      %1768 = vmatpush.bf16.msra.mxu0 %v1600
      %1769 = vmatpush.bf16.msra.mxu0 %v1598
      %1770 = vmatmul.bf16.gmra.mxu0 %v1746
      %v1771 = vpop.f32.mrf.mxu0
      %v1772 = vadd.f32 0.0, %v1771
      %v1773 = vpop.f32.mrf.mxu0
      %v1774 = vadd.f32 0.0, %v1773
      %1775 = vdwg.mxu0
      %v1776 = vadd.f32 %v1499, %v1758
      %v1777 = vadd.f32 %v1500, %v1772
      %v1778 = vadd.f32 %v1501, %v1760
      %v1779 = vadd.f32 %v1502, %v1774
      %1780 = vmatpush.bf16.msra.mxu0 0
      %1781 = vmatpush.bf16.msra.mxu0 0
      %1782 = vmatpush.bf16.msra.mxu0 %v1699
      %1783 = vmatpush.bf16.msra.mxu0 %v1697
      %1784 = vmatpush.bf16.msra.mxu0 %v1695
      %1785 = vmatpush.bf16.msra.mxu0 %v1693
      %1786 = vmatpush.bf16.msra.mxu0 %v1691
      %1787 = vmatpush.bf16.msra.mxu0 %v1689
      %1788 = vmatmul.bf16.gmra.mxu0 %v1746
      %v1789 = vpop.f32.mrf.mxu0
      %v1790 = vadd.f32 0.0, %v1789
      %v1791 = vpop.f32.mrf.mxu0
      %v1792 = vadd.f32 0.0, %v1791
      %1793 = vdwg.mxu0
      %1794 = vmatpush.bf16.msra.mxu0 0
      %1795 = vmatpush.bf16.msra.mxu0 0
      %1796 = vmatpush.bf16.msra.mxu0 %v1700
      %1797 = vmatpush.bf16.msra.mxu0 %v1698
      %1798 = vmatpush.bf16.msra.mxu0 %v1696
      %1799 = vmatpush.bf16.msra.mxu0 %v1694
      %1800 = vmatpush.bf16.msra.mxu0 %v1692
      %1801 = vmatpush.bf16.msra.mxu0 %v1690
      %1802 = vmatmul.bf16.gmra.mxu0 %v1746
      %v1803 = vpop.f32.mrf.mxu0
      %v1804 = vadd.f32 0.0, %v1803
      %v1805 = vpop.f32.mrf.mxu0
      %v1806 = vadd.f32 0.0, %v1805
      %1807 = vdwg.mxu0
      %v1808 = vadd.f32 %v1531, %v1790
      %v1809 = vadd.f32 %v1532, %v1804
      %v1810 = vadd.f32 %v1533, %v1792
      %v1811 = vadd.f32 %v1534, %v1806
      %v1812 = vmax.f32 %v1649, %v1741
      %v1813 = vmax.f32 %v1650, %v1742
      %v1814 = vmax.f32 %v1651, %v1743
      %v1815 = vmax.f32 %v1652, %v1744
      %v1816 = vmax.f32 %v1776, %v1808
      %v1817 = vmax.f32 %v1777, %v1809
      %v1818 = vmax.f32 %v1778, %v1810
      %v1819 = vmax.f32 %v1779, %v1811
      %v1820 = vmax.f32 %v1812, %v1816
      %v1821 = vmax.f32 %v1813, %v1817
      %v1822 = vmax.f32 %v1814, %v1818
      %v1823 = vmax.f32 %v1815, %v1819
      %v1824 = vld [vmem:[%s3] sm:$0x3]
      %v1826 = vperm.slane %v1824, 0
      %v1827 = vperm.slane %v1824, 1
      %v1830 = vadd.f32 %v1820, %v1826
      %v1831 = vadd.f32 %v1821, %v1827
      %v1832 = vadd.f32 %v1822, %v1826
      %v1833 = vadd.f32 %v1823, %v1827
      %v1834 = vmax.f32 %v1830, 0.0
      %v1835 = vmax.f32 %v1831, 0.0
      %v1836 = vmax.f32 %v1832, 0.0
      %v1837 = vmax.f32 %v1833, 0.0
      %v1838 = vpack.c.bf16 %v1836, %v1834
      %v1839 = vpack.c.bf16 %v1837, %v1835
      %v1840 = vld [vmem:[%s4] sm:$0xff]
      %v1841 = vld [vmem:[%s4 + $0x8] sm:$0xff]
      %v1842 = vld [vmem:[%s4 + $0x10] sm:$0xff]
      %v1843 = vld [vmem:[%s4 + $0x18] sm:$0xff]
      %v1844 = vld [vmem:[%s4 + $0x20] sm:$0xff]
      %v1845 = vld [vmem:[%s4 + $0x28] sm:$0xff]
      %v1846 = vld [vmem:[%s4 + $0x30] sm:$0xff]
      %v1847 = vld [vmem:[%s4 + $0x38] sm:$0xff]
      %v1848 = vld [vmem:[%s4 + $0x40] sm:$0xff]
      %v1849 = vld [vmem:[%s4 + $0x48] sm:$0xff]
      %v1850 = vld [vmem:[%s4 + $0x50] sm:$0xff]
      %v1851 = vld [vmem:[%s4 + $0x58] sm:$0xff]
      %v1852 = vld [vmem:[%s4 + $0x60] sm:$0xff]
      %v1853 = vld [vmem:[%s4 + $0x68] sm:$0xff]
      %v1854 = vld [vmem:[%s4 + $0x70] sm:$0xff]
      %v1855 = vld [vmem:[%s4 + $0x78] sm:$0xff]
      %v1856 = vld [vmem:[%s4 + $0x80] sm:$0xff]
      %v1857 = vld [vmem:[%s4 + $0x88] sm:$0xff]
      %v1858 = vld [vmem:[%s4 + $0x90] sm:$0xff]
      %v1859 = vld [vmem:[%s4 + $0x98] sm:$0xff]
      %v1860 = vld [vmem:[%s4 + $0xa0] sm:$0xff]
      %v1861 = vld [vmem:[%s5] sm:$0xff]
      %v1862 = vld [vmem:[%s5 + $0x8] sm:$0xff]
      %v1863 = vld [vmem:[%s5 + $0x10] sm:$0xff]
      %v1864 = vld [vmem:[%s5 + $0x18] sm:$0xff]
      %v1865 = vld [vmem:[%s5 + $0x20] sm:$0xff]
      %v1866 = vld [vmem:[%s5 + $0x28] sm:$0xff]
      %v1867 = vld [vmem:[%s5 + $0x30] sm:$0xff]
      %v1868 = vld [vmem:[%s5 + $0x38] sm:$0xff]
      %v1869 = vld [vmem:[%s5 + $0x40] sm:$0xff]
      %v1870 = vld [vmem:[%s5 + $0x48] sm:$0xff]
      %v1871 = vld [vmem:[%s5 + $0x50] sm:$0xff]
      %v1872 = vld [vmem:[%s5 + $0x58] sm:$0xff]
      %v1873 = vld [vmem:[%s5 + $0x60] sm:$0xff]
      %v1874 = vld [vmem:[%s5 + $0x68] sm:$0xff]
      %v1875 = vld [vmem:[%s5 + $0x70] sm:$0xff]
      %v1876 = vld [vmem:[%s5 + $0x78] sm:$0xff]
      %v1877 = vld [vmem:[%s5 + $0x80] sm:$0xff]
      %v1878 = vld [vmem:[%s5 + $0x88] sm:$0xff]
      %v1879 = vld [vmem:[%s5 + $0x90] sm:$0xff]
      %v1880 = vld [vmem:[%s5 + $0x98] sm:$0xff]
      %v1881 = vld [vmem:[%s5 + $0xa0] sm:$0xff]
      %s1882 = scalar_lea.vmem %s4, 168
      %v1883 = vld [vmem:[%s1882] sm:$0xff]
      %v1884 = vld [vmem:[%s1882 + $0x8] sm:$0xff]
      %v1885 = vld [vmem:[%s1882 + $0x10] sm:$0xff]
      %v1886 = vld [vmem:[%s1882 + $0x18] sm:$0xff]
      %v1887 = vld [vmem:[%s1882 + $0x20] sm:$0xff]
      %v1888 = vld [vmem:[%s1882 + $0x28] sm:$0xff]
      %v1889 = vld [vmem:[%s1882 + $0x30] sm:$0xff]
      %v1890 = vld [vmem:[%s1882 + $0x38] sm:$0xff]
      %v1891 = vld [vmem:[%s1882 + $0x40] sm:$0xff]
      %v1892 = vld [vmem:[%s1882 + $0x48] sm:$0xff]
      %v1893 = vld [vmem:[%s1882 + $0x50] sm:$0xff]
      %v1894 = vld [vmem:[%s1882 + $0x58] sm:$0xff]
      %v1895 = vld [vmem:[%s1882 + $0x60] sm:$0xff]
      %v1896 = vld [vmem:[%s1882 + $0x68] sm:$0xff]
      %v1897 = vld [vmem:[%s1882 + $0x70] sm:$0xff]
      %v1898 = vld [vmem:[%s1882 + $0x78] sm:$0xff]
      %v1899 = vld [vmem:[%s1882 + $0x80] sm:$0xff]
      %v1900 = vld [vmem:[%s1882 + $0x88] sm:$0xff]
      %v1901 = vld [vmem:[%s1882 + $0x90] sm:$0xff]
      %v1902 = vld [vmem:[%s1882 + $0x98] sm:$0xff]
      %v1903 = vld [vmem:[%s1882 + $0xa0] sm:$0xff]
      %v1905 = vshrl.u32 %v1838, 16
      %v1907 = vshll.u32 %v1838, 16
      %v1909 = vrot.slane %v1907, 1
      %v1910 = vor.u32 %v1905, %v1909
      %v1912 = vshrl.u32 %v1839, 16
      %v1914 = vshll.u32 %v1839, 16
      %v1916 = vrot.slane %v1914, 1
      %v1917 = vor.u32 %v1912, %v1916
      %v1940 = vunpack.c.l.b16 %v1883
      %v1941 = vunpack.c.h.b16 %v1883
      %v1942 = vunpack.c.l.b16 %v1884
      %v1943 = vunpack.c.h.b16 %v1884
      %v1944 = vunpack.c.l.b16 %v1885
      %v1945 = vunpack.c.h.b16 %v1885
      %v1946 = vunpack.c.l.b16 %v1886
      %v1947 = vunpack.c.h.b16 %v1886
      %v1948 = vunpack.c.l.b16 %v1887
      %v1949 = vunpack.c.h.b16 %v1887
      %v1950 = vunpack.c.l.b16 %v1888
      %v1951 = vunpack.c.h.b16 %v1888
      %v1952 = vunpack.c.l.b16 %v1889
      %v1953 = vunpack.c.h.b16 %v1889
      %v1954 = vunpack.c.l.b16 %v1890
      %v1955 = vunpack.c.h.b16 %v1890
      %v1956 = vunpack.c.l.b16 %v1891
      %v1957 = vunpack.c.h.b16 %v1891
      %v1958 = vunpack.c.l.b16 %v1892
      %v1959 = vunpack.c.h.b16 %v1892
      %v1960 = vunpack.c.l.b16 %v1893
      %v1961 = vunpack.c.h.b16 %v1893
      %v1962 = vunpack.c.l.b16 %v1894
      %v1963 = vunpack.c.h.b16 %v1894
      %v1964 = vunpack.c.l.b16 %v1895
      %v1965 = vunpack.c.h.b16 %v1895
      %v1966 = vunpack.c.l.b16 %v1896
      %v1967 = vunpack.c.h.b16 %v1896
      %v1968 = vunpack.c.l.b16 %v1897
      %v1969 = vunpack.c.h.b16 %v1897
      %v1970 = vunpack.c.l.b16 %v1898
      %v1971 = vunpack.c.h.b16 %v1898
      %v1972 = vunpack.c.l.b16 %v1899
      %v1973 = vunpack.c.h.b16 %v1899
      %v1974 = vunpack.c.l.b16 %v1900
      %v1975 = vunpack.c.h.b16 %v1900
      %v1976 = vunpack.c.l.b16 %v1901
      %v1977 = vunpack.c.h.b16 %v1901
      %v1978 = vunpack.c.l.b16 %v1902
      %v1979 = vunpack.c.h.b16 %v1902
      %v1980 = vunpack.c.l.b16 %v1903
      %v1981 = vunpack.c.h.b16 %v1903
      %v1982 = vpack.c.b16 %v1942, %v1940
      %v1983 = vpack.c.b16 %v1943, %v1941
      %v1984 = vpack.c.b16 %v1946, %v1944
      %v1985 = vpack.c.b16 %v1947, %v1945
      %v1986 = vpack.c.b16 %v1950, %v1948
      %v1987 = vpack.c.b16 %v1951, %v1949
      %v1988 = vpack.c.b16 %v1954, %v1952
      %v1989 = vpack.c.b16 %v1955, %v1953
      %v1990 = vpack.c.b16 %v1958, %v1956
      %v1991 = vpack.c.b16 %v1959, %v1957
      %v1992 = vpack.c.b16 %v1962, %v1960
      %v1993 = vpack.c.b16 %v1963, %v1961
      %v1994 = vpack.c.b16 %v1966, %v1964
      %v1995 = vpack.c.b16 %v1967, %v1965
      %v1996 = vpack.c.b16 %v1970, %v1968
      %v1997 = vpack.c.b16 %v1971, %v1969
      %v1998 = vpack.c.b16 %v1974, %v1972
      %v1999 = vpack.c.b16 %v1975, %v1973
      %v2000 = vpack.c.b16 %v1978, %v1976
      %v2001 = vpack.c.b16 %v1979, %v1977
      %v2002 = vpack.c.b16 %v1980, %v1980
      %v2003 = vpack.c.b16 %v1981, %v1981
      %vm2024 = vcmask 326656
      %v2026 = vsel %vm2024, %v1917, 0
      %vm2028 = vcmask 1043456
      %v2030 = vsel %vm2028, %v2002, 0
      %v2033 = vsel %vm2028, %v2003, 0
      %2035 = vmatpush.bf16.msra.mxu0 %v1996
      %2036 = vmatpush.bf16.msra.mxu0 %v1994
      %2037 = vmatpush.bf16.msra.mxu0 %v1992
      %2038 = vmatpush.bf16.msra.mxu0 %v1990
      %2039 = vmatpush.bf16.msra.mxu0 %v1988
      %2040 = vmatpush.bf16.msra.mxu0 %v1986
      %2041 = vmatpush.bf16.msra.mxu0 %v1984
      %2042 = vmatpush.bf16.msra.mxu0 %v1982
      %2043 = vmatmul.bf16.gmra.mxu0 %v1910
      %v2044 = vpop.f32.mrf.mxu0
      %v2045 = vadd.f32 0.0, %v2044
      %v2046 = vpop.f32.mrf.mxu0
      %v2047 = vadd.f32 0.0, %v2046
      %2048 = vdwg.mxu0
      %2049 = vmatpush.bf16.msra.mxu0 0
      %2050 = vmatpush.bf16.msra.mxu0 0
      %2051 = vmatpush.bf16.msra.mxu0 0
      %2052 = vmatpush.bf16.msra.mxu0 0
      %2053 = vmatpush.bf16.msra.mxu0 0
      %2054 = vmatpush.bf16.msra.mxu0 %v2030
      %2055 = vmatpush.bf16.msra.mxu0 %v2000
      %2056 = vmatpush.bf16.msra.mxu0 %v1998
      %2057 = vmatmul.bf16.gmra.mxu0 %v2026
      %v2058 = vpop.f32.mrf.mxu0
      %v2059 = vadd.f32 %v2045, %v2058
      %v2060 = vpop.f32.mrf.mxu0
      %v2061 = vadd.f32 %v2047, %v2060
      %2062 = vdwg.mxu0
      %2063 = vmatpush.bf16.msra.mxu0 %v1997
      %2064 = vmatpush.bf16.msra.mxu0 %v1995
      %2065 = vmatpush.bf16.msra.mxu0 %v1993
      %2066 = vmatpush.bf16.msra.mxu0 %v1991
      %2067 = vmatpush.bf16.msra.mxu0 %v1989
      %2068 = vmatpush.bf16.msra.mxu0 %v1987
      %2069 = vmatpush.bf16.msra.mxu0 %v1985
      %2070 = vmatpush.bf16.msra.mxu0 %v1983
      %2071 = vmatmul.bf16.gmra.mxu0 %v1910
      %v2072 = vpop.f32.mrf.mxu0
      %v2073 = vadd.f32 0.0, %v2072
      %v2074 = vpop.f32.mrf.mxu0
      %v2075 = vadd.f32 0.0, %v2074
      %2076 = vdwg.mxu0
      %2077 = vmatpush.bf16.msra.mxu0 0
      %2078 = vmatpush.bf16.msra.mxu0 0
      %2079 = vmatpush.bf16.msra.mxu0 0
      %2080 = vmatpush.bf16.msra.mxu0 0
      %2081 = vmatpush.bf16.msra.mxu0 0
      %2082 = vmatpush.bf16.msra.mxu0 %v2033
      %2083 = vmatpush.bf16.msra.mxu0 %v2001
      %2084 = vmatpush.bf16.msra.mxu0 %v1999
      %2085 = vmatmul.bf16.gmra.mxu0 %v2026
      %v2086 = vpop.f32.mrf.mxu0
      %v2087 = vadd.f32 %v2073, %v2086
      %v2088 = vpop.f32.mrf.mxu0
      %v2089 = vadd.f32 %v2075, %v2088
      %2090 = vdwg.mxu0
      %v2112 = vunpack.c.l.b16 %v1840
      %v2113 = vunpack.c.h.b16 %v1840
      %v2114 = vunpack.c.l.b16 %v1841
      %v2115 = vunpack.c.h.b16 %v1841
      %v2116 = vunpack.c.l.b16 %v1842
      %v2117 = vunpack.c.h.b16 %v1842
      %v2118 = vunpack.c.l.b16 %v1843
      %v2119 = vunpack.c.h.b16 %v1843
      %v2120 = vunpack.c.l.b16 %v1844
      %v2121 = vunpack.c.h.b16 %v1844
      %v2122 = vunpack.c.l.b16 %v1845
      %v2123 = vunpack.c.h.b16 %v1845
      %v2124 = vunpack.c.l.b16 %v1846
      %v2125 = vunpack.c.h.b16 %v1846
      %v2126 = vunpack.c.l.b16 %v1847
      %v2127 = vunpack.c.h.b16 %v1847
      %v2128 = vunpack.c.l.b16 %v1848
      %v2129 = vunpack.c.h.b16 %v1848
      %v2130 = vunpack.c.l.b16 %v1849
      %v2131 = vunpack.c.h.b16 %v1849
      %v2132 = vunpack.c.l.b16 %v1850
      %v2133 = vunpack.c.h.b16 %v1850
      %v2134 = vunpack.c.l.b16 %v1851
      %v2135 = vunpack.c.h.b16 %v1851
      %v2136 = vunpack.c.l.b16 %v1852
      %v2137 = vunpack.c.h.b16 %v1852
      %v2138 = vunpack.c.l.b16 %v1853
      %v2139 = vunpack.c.h.b16 %v1853
      %v2140 = vunpack.c.l.b16 %v1854
      %v2141 = vunpack.c.h.b16 %v1854
      %v2142 = vunpack.c.l.b16 %v1855
      %v2143 = vunpack.c.h.b16 %v1855
      %v2144 = vunpack.c.l.b16 %v1856
      %v2145 = vunpack.c.h.b16 %v1856
      %v2146 = vunpack.c.l.b16 %v1857
      %v2147 = vunpack.c.h.b16 %v1857
      %v2148 = vunpack.c.l.b16 %v1858
      %v2149 = vunpack.c.h.b16 %v1858
      %v2150 = vunpack.c.l.b16 %v1859
      %v2151 = vunpack.c.h.b16 %v1859
      %v2152 = vunpack.c.l.b16 %v1860
      %v2153 = vunpack.c.h.b16 %v1860
      %v2154 = vpack.c.b16 %v2114, %v2112
      %v2155 = vpack.c.b16 %v2115, %v2113
      %v2156 = vpack.c.b16 %v2118, %v2116
      %v2157 = vpack.c.b16 %v2119, %v2117
      %v2158 = vpack.c.b16 %v2122, %v2120
      %v2159 = vpack.c.b16 %v2123, %v2121
      %v2160 = vpack.c.b16 %v2126, %v2124
      %v2161 = vpack.c.b16 %v2127, %v2125
      %v2162 = vpack.c.b16 %v2130, %v2128
      %v2163 = vpack.c.b16 %v2131, %v2129
      %v2164 = vpack.c.b16 %v2134, %v2132
      %v2165 = vpack.c.b16 %v2135, %v2133
      %v2166 = vpack.c.b16 %v2138, %v2136
      %v2167 = vpack.c.b16 %v2139, %v2137
      %v2168 = vpack.c.b16 %v2142, %v2140
      %v2169 = vpack.c.b16 %v2143, %v2141
      %v2170 = vpack.c.b16 %v2146, %v2144
      %v2171 = vpack.c.b16 %v2147, %v2145
      %v2172 = vpack.c.b16 %v2150, %v2148
      %v2173 = vpack.c.b16 %v2151, %v2149
      %v2174 = vpack.c.b16 %v2152, %v2152
      %v2175 = vpack.c.b16 %v2153, %v2153
      %v2196 = vsel %vm2024, %v1839, 0
      %v2199 = vsel %vm2028, %v2174, 0
      %v2202 = vsel %vm2028, %v2175, 0
      %2204 = vmatpush.bf16.msra.mxu0 %v2168
      %2205 = vmatpush.bf16.msra.mxu0 %v2166
      %2206 = vmatpush.bf16.msra.mxu0 %v2164
      %2207 = vmatpush.bf16.msra.mxu0 %v2162
      %2208 = vmatpush.bf16.msra.mxu0 %v2160
      %2209 = vmatpush.bf16.msra.mxu0 %v2158
      %2210 = vmatpush.bf16.msra.mxu0 %v2156
      %2211 = vmatpush.bf16.msra.mxu0 %v2154
      %2212 = vmatmul.bf16.gmra.mxu0 %v1838
      %v2213 = vpop.f32.mrf.mxu0
      %v2214 = vadd.f32 %v2059, %v2213
      %v2215 = vpop.f32.mrf.mxu0
      %v2216 = vadd.f32 %v2061, %v2215
      %2217 = vdwg.mxu0
      %2218 = vmatpush.bf16.msra.mxu0 0
      %2219 = vmatpush.bf16.msra.mxu0 0
      %2220 = vmatpush.bf16.msra.mxu0 0
      %2221 = vmatpush.bf16.msra.mxu0 0
      %2222 = vmatpush.bf16.msra.mxu0 0
      %2223 = vmatpush.bf16.msra.mxu0 %v2199
      %2224 = vmatpush.bf16.msra.mxu0 %v2172
      %2225 = vmatpush.bf16.msra.mxu0 %v2170
      %2226 = vmatmul.bf16.gmra.mxu0 %v2196
      %v2227 = vpop.f32.mrf.mxu0
      %v2228 = vadd.f32 %v2214, %v2227
      %v2229 = vpop.f32.mrf.mxu0
      %v2230 = vadd.f32 %v2216, %v2229
      %2231 = vdwg.mxu0
      %2232 = vmatpush.bf16.msra.mxu0 %v2169
      %2233 = vmatpush.bf16.msra.mxu0 %v2167
      %2234 = vmatpush.bf16.msra.mxu0 %v2165
      %2235 = vmatpush.bf16.msra.mxu0 %v2163
      %2236 = vmatpush.bf16.msra.mxu0 %v2161
      %2237 = vmatpush.bf16.msra.mxu0 %v2159
      %2238 = vmatpush.bf16.msra.mxu0 %v2157
      %2239 = vmatpush.bf16.msra.mxu0 %v2155
      %2240 = vmatmul.bf16.gmra.mxu0 %v1838
      %v2241 = vpop.f32.mrf.mxu0
      %v2242 = vadd.f32 %v2087, %v2241
      %v2243 = vpop.f32.mrf.mxu0
      %v2244 = vadd.f32 %v2089, %v2243
      %2245 = vdwg.mxu0
      %2246 = vmatpush.bf16.msra.mxu0 0
      %2247 = vmatpush.bf16.msra.mxu0 0
      %2248 = vmatpush.bf16.msra.mxu0 0
      %2249 = vmatpush.bf16.msra.mxu0 0
      %2250 = vmatpush.bf16.msra.mxu0 0
      %2251 = vmatpush.bf16.msra.mxu0 %v2202
      %2252 = vmatpush.bf16.msra.mxu0 %v2173
      %2253 = vmatpush.bf16.msra.mxu0 %v2171
      %2254 = vmatmul.bf16.gmra.mxu0 %v2196
      %v2255 = vpop.f32.mrf.mxu0
      %v2256 = vadd.f32 %v2242, %v2255
      %v2257 = vpop.f32.mrf.mxu0
      %v2258 = vadd.f32 %v2244, %v2257
      %2259 = vdwg.mxu0
      %s2260 = scalar_lea.vmem %s5, 168
      %v2261 = vld [vmem:[%s2260] sm:$0xff]
      %v2262 = vld [vmem:[%s2260 + $0x8] sm:$0xff]
      %v2263 = vld [vmem:[%s2260 + $0x10] sm:$0xff]
      %v2264 = vld [vmem:[%s2260 + $0x18] sm:$0xff]
      %v2265 = vld [vmem:[%s2260 + $0x20] sm:$0xff]
      %v2266 = vld [vmem:[%s2260 + $0x28] sm:$0xff]
      %v2267 = vld [vmem:[%s2260 + $0x30] sm:$0xff]
      %v2268 = vld [vmem:[%s2260 + $0x38] sm:$0xff]
      %v2269 = vld [vmem:[%s2260 + $0x40] sm:$0xff]
      %v2270 = vld [vmem:[%s2260 + $0x48] sm:$0xff]
      %v2271 = vld [vmem:[%s2260 + $0x50] sm:$0xff]
      %v2272 = vld [vmem:[%s2260 + $0x58] sm:$0xff]
      %v2273 = vld [vmem:[%s2260 + $0x60] sm:$0xff]
      %v2274 = vld [vmem:[%s2260 + $0x68] sm:$0xff]
      %v2275 = vld [vmem:[%s2260 + $0x70] sm:$0xff]
      %v2276 = vld [vmem:[%s2260 + $0x78] sm:$0xff]
      %v2277 = vld [vmem:[%s2260 + $0x80] sm:$0xff]
      %v2278 = vld [vmem:[%s2260 + $0x88] sm:$0xff]
      %v2279 = vld [vmem:[%s2260 + $0x90] sm:$0xff]
      %v2280 = vld [vmem:[%s2260 + $0x98] sm:$0xff]
      %v2281 = vld [vmem:[%s2260 + $0xa0] sm:$0xff]
      %v2303 = vunpack.c.l.b16 %v2261
      %v2304 = vunpack.c.h.b16 %v2261
      %v2305 = vunpack.c.l.b16 %v2262
      %v2306 = vunpack.c.h.b16 %v2262
      %v2307 = vunpack.c.l.b16 %v2263
      %v2308 = vunpack.c.h.b16 %v2263
      %v2309 = vunpack.c.l.b16 %v2264
      %v2310 = vunpack.c.h.b16 %v2264
      %v2311 = vunpack.c.l.b16 %v2265
      %v2312 = vunpack.c.h.b16 %v2265
      %v2313 = vunpack.c.l.b16 %v2266
      %v2314 = vunpack.c.h.b16 %v2266
      %v2315 = vunpack.c.l.b16 %v2267
      %v2316 = vunpack.c.h.b16 %v2267
      %v2317 = vunpack.c.l.b16 %v2268
      %v2318 = vunpack.c.h.b16 %v2268
      %v2319 = vunpack.c.l.b16 %v2269
      %v2320 = vunpack.c.h.b16 %v2269
      %v2321 = vunpack.c.l.b16 %v2270
      %v2322 = vunpack.c.h.b16 %v2270
      %v2323 = vunpack.c.l.b16 %v2271
      %v2324 = vunpack.c.h.b16 %v2271
      %v2325 = vunpack.c.l.b16 %v2272
      %v2326 = vunpack.c.h.b16 %v2272
      %v2327 = vunpack.c.l.b16 %v2273
      %v2328 = vunpack.c.h.b16 %v2273
      %v2329 = vunpack.c.l.b16 %v2274
      %v2330 = vunpack.c.h.b16 %v2274
      %v2331 = vunpack.c.l.b16 %v2275
      %v2332 = vunpack.c.h.b16 %v2275
      %v2333 = vunpack.c.l.b16 %v2276
      %v2334 = vunpack.c.h.b16 %v2276
      %v2335 = vunpack.c.l.b16 %v2277
      %v2336 = vunpack.c.h.b16 %v2277
      %v2337 = vunpack.c.l.b16 %v2278
      %v2338 = vunpack.c.h.b16 %v2278
      %v2339 = vunpack.c.l.b16 %v2279
      %v2340 = vunpack.c.h.b16 %v2279
      %v2341 = vunpack.c.l.b16 %v2280
      %v2342 = vunpack.c.h.b16 %v2280
      %v2343 = vunpack.c.l.b16 %v2281
      %v2344 = vunpack.c.h.b16 %v2281
      %v2345 = vpack.c.b16 %v2305, %v2303
      %v2346 = vpack.c.b16 %v2306, %v2304
      %v2347 = vpack.c.b16 %v2309, %v2307
      %v2348 = vpack.c.b16 %v2310, %v2308
      %v2349 = vpack.c.b16 %v2313, %v2311
      %v2350 = vpack.c.b16 %v2314, %v2312
      %v2351 = vpack.c.b16 %v2317, %v2315
      %v2352 = vpack.c.b16 %v2318, %v2316
      %v2353 = vpack.c.b16 %v2321, %v2319
      %v2354 = vpack.c.b16 %v2322, %v2320
      %v2355 = vpack.c.b16 %v2325, %v2323
      %v2356 = vpack.c.b16 %v2326, %v2324
      %v2357 = vpack.c.b16 %v2329, %v2327
      %v2358 = vpack.c.b16 %v2330, %v2328
      %v2359 = vpack.c.b16 %v2333, %v2331
      %v2360 = vpack.c.b16 %v2334, %v2332
      %v2361 = vpack.c.b16 %v2337, %v2335
      %v2362 = vpack.c.b16 %v2338, %v2336
      %v2363 = vpack.c.b16 %v2341, %v2339
      %v2364 = vpack.c.b16 %v2342, %v2340
      %v2365 = vpack.c.b16 %v2343, %v2343
      %v2366 = vpack.c.b16 %v2344, %v2344
      %v2388 = vsel %vm2028, %v2365, 0
      %v2391 = vsel %vm2028, %v2366, 0
      %2393 = vmatpush.bf16.msra.mxu0 %v2359
      %2394 = vmatpush.bf16.msra.mxu0 %v2357
      %2395 = vmatpush.bf16.msra.mxu0 %v2355
      %2396 = vmatpush.bf16.msra.mxu0 %v2353
      %2397 = vmatpush.bf16.msra.mxu0 %v2351
      %2398 = vmatpush.bf16.msra.mxu0 %v2349
      %2399 = vmatpush.bf16.msra.mxu0 %v2347
      %2400 = vmatpush.bf16.msra.mxu0 %v2345
      %2401 = vmatmul.bf16.gmra.mxu0 %v1910
      %v2402 = vpop.f32.mrf.mxu0
      %v2403 = vadd.f32 0.0, %v2402
      %v2404 = vpop.f32.mrf.mxu0
      %v2405 = vadd.f32 0.0, %v2404
      %2406 = vdwg.mxu0
      %2407 = vmatpush.bf16.msra.mxu0 0
      %2408 = vmatpush.bf16.msra.mxu0 0
      %2409 = vmatpush.bf16.msra.mxu0 0
      %2410 = vmatpush.bf16.msra.mxu0 0
      %2411 = vmatpush.bf16.msra.mxu0 0
      %2412 = vmatpush.bf16.msra.mxu0 %v2388
      %2413 = vmatpush.bf16.msra.mxu0 %v2363
      %2414 = vmatpush.bf16.msra.mxu0 %v2361
      %2415 = vmatmul.bf16.gmra.mxu0 %v2026
      %v2416 = vpop.f32.mrf.mxu0
      %v2417 = vadd.f32 %v2403, %v2416
      %v2418 = vpop.f32.mrf.mxu0
      %v2419 = vadd.f32 %v2405, %v2418
      %2420 = vdwg.mxu0
      %2421 = vmatpush.bf16.msra.mxu0 %v2360
      %2422 = vmatpush.bf16.msra.mxu0 %v2358
      %2423 = vmatpush.bf16.msra.mxu0 %v2356
      %2424 = vmatpush.bf16.msra.mxu0 %v2354
      %2425 = vmatpush.bf16.msra.mxu0 %v2352
      %2426 = vmatpush.bf16.msra.mxu0 %v2350
      %2427 = vmatpush.bf16.msra.mxu0 %v2348
      %2428 = vmatpush.bf16.msra.mxu0 %v2346
      %2429 = vmatmul.bf16.gmra.mxu0 %v1910
      %v2430 = vpop.f32.mrf.mxu0
      %v2431 = vadd.f32 0.0, %v2430
      %v2432 = vpop.f32.mrf.mxu0
      %v2433 = vadd.f32 0.0, %v2432
      %2434 = vdwg.mxu0
      %2435 = vmatpush.bf16.msra.mxu0 0
      %2436 = vmatpush.bf16.msra.mxu0 0
      %2437 = vmatpush.bf16.msra.mxu0 0
      %2438 = vmatpush.bf16.msra.mxu0 0
      %2439 = vmatpush.bf16.msra.mxu0 0
      %2440 = vmatpush.bf16.msra.mxu0 %v2391
      %2441 = vmatpush.bf16.msra.mxu0 %v2364
      %2442 = vmatpush.bf16.msra.mxu0 %v2362
      %2443 = vmatmul.bf16.gmra.mxu0 %v2026
      %v2444 = vpop.f32.mrf.mxu0
      %v2445 = vadd.f32 %v2431, %v2444
      %v2446 = vpop.f32.mrf.mxu0
      %v2447 = vadd.f32 %v2433, %v2446
      %2448 = vdwg.mxu0
      %v2470 = vunpack.c.l.b16 %v1861
      %v2471 = vunpack.c.h.b16 %v1861
      %v2472 = vunpack.c.l.b16 %v1862
      %v2473 = vunpack.c.h.b16 %v1862
      %v2474 = vunpack.c.l.b16 %v1863
      %v2475 = vunpack.c.h.b16 %v1863
      %v2476 = vunpack.c.l.b16 %v1864
      %v2477 = vunpack.c.h.b16 %v1864
      %v2478 = vunpack.c.l.b16 %v1865
      %v2479 = vunpack.c.h.b16 %v1865
      %v2480 = vunpack.c.l.b16 %v1866
      %v2481 = vunpack.c.h.b16 %v1866
      %v2482 = vunpack.c.l.b16 %v1867
      %v2483 = vunpack.c.h.b16 %v1867
      %v2484 = vunpack.c.l.b16 %v1868
      %v2485 = vunpack.c.h.b16 %v1868
      %v2486 = vunpack.c.l.b16 %v1869
      %v2487 = vunpack.c.h.b16 %v1869
      %v2488 = vunpack.c.l.b16 %v1870
      %v2489 = vunpack.c.h.b16 %v1870
      %v2490 = vunpack.c.l.b16 %v1871
      %v2491 = vunpack.c.h.b16 %v1871
      %v2492 = vunpack.c.l.b16 %v1872
      %v2493 = vunpack.c.h.b16 %v1872
      %v2494 = vunpack.c.l.b16 %v1873
      %v2495 = vunpack.c.h.b16 %v1873
      %v2496 = vunpack.c.l.b16 %v1874
      %v2497 = vunpack.c.h.b16 %v1874
      %v2498 = vunpack.c.l.b16 %v1875
      %v2499 = vunpack.c.h.b16 %v1875
      %v2500 = vunpack.c.l.b16 %v1876
      %v2501 = vunpack.c.h.b16 %v1876
      %v2502 = vunpack.c.l.b16 %v1877
      %v2503 = vunpack.c.h.b16 %v1877
      %v2504 = vunpack.c.l.b16 %v1878
      %v2505 = vunpack.c.h.b16 %v1878
      %v2506 = vunpack.c.l.b16 %v1879
      %v2507 = vunpack.c.h.b16 %v1879
      %v2508 = vunpack.c.l.b16 %v1880
      %v2509 = vunpack.c.h.b16 %v1880
      %v2510 = vunpack.c.l.b16 %v1881
      %v2511 = vunpack.c.h.b16 %v1881
      %v2512 = vpack.c.b16 %v2472, %v2470
      %v2513 = vpack.c.b16 %v2473, %v2471
      %v2514 = vpack.c.b16 %v2476, %v2474
      %v2515 = vpack.c.b16 %v2477, %v2475
      %v2516 = vpack.c.b16 %v2480, %v2478
      %v2517 = vpack.c.b16 %v2481, %v2479
      %v2518 = vpack.c.b16 %v2484, %v2482
      %v2519 = vpack.c.b16 %v2485, %v2483
      %v2520 = vpack.c.b16 %v2488, %v2486
      %v2521 = vpack.c.b16 %v2489, %v2487
      %v2522 = vpack.c.b16 %v2492, %v2490
      %v2523 = vpack.c.b16 %v2493, %v2491
      %v2524 = vpack.c.b16 %v2496, %v2494
      %v2525 = vpack.c.b16 %v2497, %v2495
      %v2526 = vpack.c.b16 %v2500, %v2498
      %v2527 = vpack.c.b16 %v2501, %v2499
      %v2528 = vpack.c.b16 %v2504, %v2502
      %v2529 = vpack.c.b16 %v2505, %v2503
      %v2530 = vpack.c.b16 %v2508, %v2506
      %v2531 = vpack.c.b16 %v2509, %v2507
      %v2532 = vpack.c.b16 %v2510, %v2510
      %v2533 = vpack.c.b16 %v2511, %v2511
      %v2555 = vsel %vm2028, %v2532, 0
      %v2558 = vsel %vm2028, %v2533, 0
      %2560 = vmatpush.bf16.msra.mxu0 %v2526
      %2561 = vmatpush.bf16.msra.mxu0 %v2524
      %2562 = vmatpush.bf16.msra.mxu0 %v2522
      %2563 = vmatpush.bf16.msra.mxu0 %v2520
      %2564 = vmatpush.bf16.msra.mxu0 %v2518
      %2565 = vmatpush.bf16.msra.mxu0 %v2516
      %2566 = vmatpush.bf16.msra.mxu0 %v2514
      %2567 = vmatpush.bf16.msra.mxu0 %v2512
      %2568 = vmatmul.bf16.gmra.mxu0 %v1838
      %v2569 = vpop.f32.mrf.mxu0
      %v2570 = vadd.f32 %v2417, %v2569
      %v2571 = vpop.f32.mrf.mxu0
      %v2572 = vadd.f32 %v2419, %v2571
      %2573 = vdwg.mxu0
      %2574 = vmatpush.bf16.msra.mxu0 0
      %2575 = vmatpush.bf16.msra.mxu0 0
      %2576 = vmatpush.bf16.msra.mxu0 0
      %2577 = vmatpush.bf16.msra.mxu0 0
      %2578 = vmatpush.bf16.msra.mxu0 0
      %2579 = vmatpush.bf16.msra.mxu0 %v2555
      %2580 = vmatpush.bf16.msra.mxu0 %v2530
      %2581 = vmatpush.bf16.msra.mxu0 %v2528
      %2582 = vmatmul.bf16.gmra.mxu0 %v2196
      %v2583 = vpop.f32.mrf.mxu0
      %v2584 = vadd.f32 %v2570, %v2583
      %v2585 = vpop.f32.mrf.mxu0
      %v2586 = vadd.f32 %v2572, %v2585
      %2587 = vdwg.mxu0
      %2588 = vmatpush.bf16.msra.mxu0 %v2527
      %2589 = vmatpush.bf16.msra.mxu0 %v2525
      %2590 = vmatpush.bf16.msra.mxu0 %v2523
      %2591 = vmatpush.bf16.msra.mxu0 %v2521
      %2592 = vmatpush.bf16.msra.mxu0 %v2519
      %2593 = vmatpush.bf16.msra.mxu0 %v2517
      %2594 = vmatpush.bf16.msra.mxu0 %v2515
      %2595 = vmatpush.bf16.msra.mxu0 %v2513
      %2596 = vmatmul.bf16.gmra.mxu0 %v1838
      %v2597 = vpop.f32.mrf.mxu0
      %v2598 = vadd.f32 %v2445, %v2597
      %v2599 = vpop.f32.mrf.mxu0
      %v2600 = vadd.f32 %v2447, %v2599
      %2601 = vdwg.mxu0
      %2602 = vmatpush.bf16.msra.mxu0 0
      %2603 = vmatpush.bf16.msra.mxu0 0
      %2604 = vmatpush.bf16.msra.mxu0 0
      %2605 = vmatpush.bf16.msra.mxu0 0
      %2606 = vmatpush.bf16.msra.mxu0 0
      %2607 = vmatpush.bf16.msra.mxu0 %v2558
      %2608 = vmatpush.bf16.msra.mxu0 %v2531
      %2609 = vmatpush.bf16.msra.mxu0 %v2529
      %2610 = vmatmul.bf16.gmra.mxu0 %v2196
      %v2611 = vpop.f32.mrf.mxu0
      %v2612 = vadd.f32 %v2598, %v2611
      %v2613 = vpop.f32.mrf.mxu0
      %v2614 = vadd.f32 %v2600, %v2613
      %2615 = vdwg.mxu0
      %s2616 = scalar_lea.vmem %s4, 336
      %v2617 = vld [vmem:[%s2616] sm:$0xff]
      %v2618 = vld [vmem:[%s2616 + $0x8] sm:$0xff]
      %v2619 = vld [vmem:[%s2616 + $0x10] sm:$0xff]
      %v2620 = vld [vmem:[%s2616 + $0x18] sm:$0xff]
      %v2621 = vld [vmem:[%s2616 + $0x20] sm:$0xff]
      %v2622 = vld [vmem:[%s2616 + $0x28] sm:$0xff]
      %v2623 = vld [vmem:[%s2616 + $0x30] sm:$0xff]
      %v2624 = vld [vmem:[%s2616 + $0x38] sm:$0xff]
      %v2625 = vld [vmem:[%s2616 + $0x40] sm:$0xff]
      %v2626 = vld [vmem:[%s2616 + $0x48] sm:$0xff]
      %v2627 = vld [vmem:[%s2616 + $0x50] sm:$0xff]
      %v2628 = vld [vmem:[%s2616 + $0x58] sm:$0xff]
      %v2629 = vld [vmem:[%s2616 + $0x60] sm:$0xff]
      %v2630 = vld [vmem:[%s2616 + $0x68] sm:$0xff]
      %v2631 = vld [vmem:[%s2616 + $0x70] sm:$0xff]
      %v2632 = vld [vmem:[%s2616 + $0x78] sm:$0xff]
      %v2633 = vld [vmem:[%s2616 + $0x80] sm:$0xff]
      %v2634 = vld [vmem:[%s2616 + $0x88] sm:$0xff]
      %v2635 = vld [vmem:[%s2616 + $0x90] sm:$0xff]
      %v2636 = vld [vmem:[%s2616 + $0x98] sm:$0xff]
      %v2637 = vld [vmem:[%s2616 + $0xa0] sm:$0xff]
      %v2640 = vrot.slane %v1838, 1
      %v2641 = vrot.slane %v1839, 1
      %v2664 = vunpack.c.l.b16 %v2617
      %v2665 = vunpack.c.h.b16 %v2617
      %v2666 = vunpack.c.l.b16 %v2618
      %v2667 = vunpack.c.h.b16 %v2618
      %v2668 = vunpack.c.l.b16 %v2619
      %v2669 = vunpack.c.h.b16 %v2619
      %v2670 = vunpack.c.l.b16 %v2620
      %v2671 = vunpack.c.h.b16 %v2620
      %v2672 = vunpack.c.l.b16 %v2621
      %v2673 = vunpack.c.h.b16 %v2621
      %v2674 = vunpack.c.l.b16 %v2622
      %v2675 = vunpack.c.h.b16 %v2622
      %v2676 = vunpack.c.l.b16 %v2623
      %v2677 = vunpack.c.h.b16 %v2623
      %v2678 = vunpack.c.l.b16 %v2624
      %v2679 = vunpack.c.h.b16 %v2624
      %v2680 = vunpack.c.l.b16 %v2625
      %v2681 = vunpack.c.h.b16 %v2625
      %v2682 = vunpack.c.l.b16 %v2626
      %v2683 = vunpack.c.h.b16 %v2626
      %v2684 = vunpack.c.l.b16 %v2627
      %v2685 = vunpack.c.h.b16 %v2627
      %v2686 = vunpack.c.l.b16 %v2628
      %v2687 = vunpack.c.h.b16 %v2628
      %v2688 = vunpack.c.l.b16 %v2629
      %v2689 = vunpack.c.h.b16 %v2629
      %v2690 = vunpack.c.l.b16 %v2630
      %v2691 = vunpack.c.h.b16 %v2630
      %v2692 = vunpack.c.l.b16 %v2631
      %v2693 = vunpack.c.h.b16 %v2631
      %v2694 = vunpack.c.l.b16 %v2632
      %v2695 = vunpack.c.h.b16 %v2632
      %v2696 = vunpack.c.l.b16 %v2633
      %v2697 = vunpack.c.h.b16 %v2633
      %v2698 = vunpack.c.l.b16 %v2634
      %v2699 = vunpack.c.h.b16 %v2634
      %v2700 = vunpack.c.l.b16 %v2635
      %v2701 = vunpack.c.h.b16 %v2635
      %v2702 = vunpack.c.l.b16 %v2636
      %v2703 = vunpack.c.h.b16 %v2636
      %v2704 = vunpack.c.l.b16 %v2637
      %v2705 = vunpack.c.h.b16 %v2637
      %v2706 = vpack.c.b16 %v2666, %v2664
      %v2707 = vpack.c.b16 %v2667, %v2665
      %v2708 = vpack.c.b16 %v2670, %v2668
      %v2709 = vpack.c.b16 %v2671, %v2669
      %v2710 = vpack.c.b16 %v2674, %v2672
      %v2711 = vpack.c.b16 %v2675, %v2673
      %v2712 = vpack.c.b16 %v2678, %v2676
      %v2713 = vpack.c.b16 %v2679, %v2677
      %v2714 = vpack.c.b16 %v2682, %v2680
      %v2715 = vpack.c.b16 %v2683, %v2681
      %v2716 = vpack.c.b16 %v2686, %v2684
      %v2717 = vpack.c.b16 %v2687, %v2685
      %v2718 = vpack.c.b16 %v2690, %v2688
      %v2719 = vpack.c.b16 %v2691, %v2689
      %v2720 = vpack.c.b16 %v2694, %v2692
      %v2721 = vpack.c.b16 %v2695, %v2693
      %v2722 = vpack.c.b16 %v2698, %v2696
      %v2723 = vpack.c.b16 %v2699, %v2697
      %v2724 = vpack.c.b16 %v2702, %v2700
      %v2725 = vpack.c.b16 %v2703, %v2701
      %v2726 = vpack.c.b16 %v2704, %v2704
      %v2727 = vpack.c.b16 %v2705, %v2705
      %v2749 = vsel %vm2024, %v2641, 0
      %v2752 = vsel %vm2028, %v2726, 0
      %v2755 = vsel %vm2028, %v2727, 0
      %2757 = vmatpush.bf16.msra.mxu0 %v2720
      %2758 = vmatpush.bf16.msra.mxu0 %v2718
      %2759 = vmatpush.bf16.msra.mxu0 %v2716
      %2760 = vmatpush.bf16.msra.mxu0 %v2714
      %2761 = vmatpush.bf16.msra.mxu0 %v2712
      %2762 = vmatpush.bf16.msra.mxu0 %v2710
      %2763 = vmatpush.bf16.msra.mxu0 %v2708
      %2764 = vmatpush.bf16.msra.mxu0 %v2706
      %2765 = vmatmul.bf16.gmra.mxu0 %v2640
      %v2766 = vpop.f32.mrf.mxu0
      %v2767 = vadd.f32 0.0, %v2766
      %v2768 = vpop.f32.mrf.mxu0
      %v2769 = vadd.f32 0.0, %v2768
      %2770 = vdwg.mxu0
      %2771 = vmatpush.bf16.msra.mxu0 0
      %2772 = vmatpush.bf16.msra.mxu0 0
      %2773 = vmatpush.bf16.msra.mxu0 0
      %2774 = vmatpush.bf16.msra.mxu0 0
      %2775 = vmatpush.bf16.msra.mxu0 0
      %2776 = vmatpush.bf16.msra.mxu0 %v2752
      %2777 = vmatpush.bf16.msra.mxu0 %v2724
      %2778 = vmatpush.bf16.msra.mxu0 %v2722
      %2779 = vmatmul.bf16.gmra.mxu0 %v2749
      %v2780 = vpop.f32.mrf.mxu0
      %v2781 = vadd.f32 %v2767, %v2780
      %v2782 = vpop.f32.mrf.mxu0
      %v2783 = vadd.f32 %v2769, %v2782
      %2784 = vdwg.mxu0
      %2785 = vmatpush.bf16.msra.mxu0 %v2721
      %2786 = vmatpush.bf16.msra.mxu0 %v2719
      %2787 = vmatpush.bf16.msra.mxu0 %v2717
      %2788 = vmatpush.bf16.msra.mxu0 %v2715
      %2789 = vmatpush.bf16.msra.mxu0 %v2713
      %2790 = vmatpush.bf16.msra.mxu0 %v2711
      %2791 = vmatpush.bf16.msra.mxu0 %v2709
      %2792 = vmatpush.bf16.msra.mxu0 %v2707
      %2793 = vmatmul.bf16.gmra.mxu0 %v2640
      %v2794 = vpop.f32.mrf.mxu0
      %v2795 = vadd.f32 0.0, %v2794
      %v2796 = vpop.f32.mrf.mxu0
      %v2797 = vadd.f32 0.0, %v2796
      %2798 = vdwg.mxu0
      %2799 = vmatpush.bf16.msra.mxu0 0
      %2800 = vmatpush.bf16.msra.mxu0 0
      %2801 = vmatpush.bf16.msra.mxu0 0
      %2802 = vmatpush.bf16.msra.mxu0 0
      %2803 = vmatpush.bf16.msra.mxu0 0
      %2804 = vmatpush.bf16.msra.mxu0 %v2755
      %2805 = vmatpush.bf16.msra.mxu0 %v2725
      %2806 = vmatpush.bf16.msra.mxu0 %v2723
      %2807 = vmatmul.bf16.gmra.mxu0 %v2749
      %v2808 = vpop.f32.mrf.mxu0
      %v2809 = vadd.f32 %v2795, %v2808
      %v2810 = vpop.f32.mrf.mxu0
      %v2811 = vadd.f32 %v2797, %v2810
      %2812 = vdwg.mxu0
      %v2813 = vadd.f32 %v2228, %v2781
      %v2814 = vadd.f32 %v2256, %v2809
      %v2815 = vadd.f32 %v2230, %v2783
      %v2816 = vadd.f32 %v2258, %v2811
      %s2817 = scalar_lea.vmem %s5, 336
      %v2818 = vld [vmem:[%s2817] sm:$0xff]
      %v2819 = vld [vmem:[%s2817 + $0x8] sm:$0xff]
      %v2820 = vld [vmem:[%s2817 + $0x10] sm:$0xff]
      %v2821 = vld [vmem:[%s2817 + $0x18] sm:$0xff]
      %v2822 = vld [vmem:[%s2817 + $0x20] sm:$0xff]
      %v2823 = vld [vmem:[%s2817 + $0x28] sm:$0xff]
      %v2824 = vld [vmem:[%s2817 + $0x30] sm:$0xff]
      %v2825 = vld [vmem:[%s2817 + $0x38] sm:$0xff]
      %v2826 = vld [vmem:[%s2817 + $0x40] sm:$0xff]
      %v2827 = vld [vmem:[%s2817 + $0x48] sm:$0xff]
      %v2828 = vld [vmem:[%s2817 + $0x50] sm:$0xff]
      %v2829 = vld [vmem:[%s2817 + $0x58] sm:$0xff]
      %v2830 = vld [vmem:[%s2817 + $0x60] sm:$0xff]
      %v2831 = vld [vmem:[%s2817 + $0x68] sm:$0xff]
      %v2832 = vld [vmem:[%s2817 + $0x70] sm:$0xff]
      %v2833 = vld [vmem:[%s2817 + $0x78] sm:$0xff]
      %v2834 = vld [vmem:[%s2817 + $0x80] sm:$0xff]
      %v2835 = vld [vmem:[%s2817 + $0x88] sm:$0xff]
      %v2836 = vld [vmem:[%s2817 + $0x90] sm:$0xff]
      %v2837 = vld [vmem:[%s2817 + $0x98] sm:$0xff]
      %v2838 = vld [vmem:[%s2817 + $0xa0] sm:$0xff]
      %v2860 = vunpack.c.l.b16 %v2818
      %v2861 = vunpack.c.h.b16 %v2818
      %v2862 = vunpack.c.l.b16 %v2819
      %v2863 = vunpack.c.h.b16 %v2819
      %v2864 = vunpack.c.l.b16 %v2820
      %v2865 = vunpack.c.h.b16 %v2820
      %v2866 = vunpack.c.l.b16 %v2821
      %v2867 = vunpack.c.h.b16 %v2821
      %v2868 = vunpack.c.l.b16 %v2822
      %v2869 = vunpack.c.h.b16 %v2822
      %v2870 = vunpack.c.l.b16 %v2823
      %v2871 = vunpack.c.h.b16 %v2823
      %v2872 = vunpack.c.l.b16 %v2824
      %v2873 = vunpack.c.h.b16 %v2824
      %v2874 = vunpack.c.l.b16 %v2825
      %v2875 = vunpack.c.h.b16 %v2825
      %v2876 = vunpack.c.l.b16 %v2826
      %v2877 = vunpack.c.h.b16 %v2826
      %v2878 = vunpack.c.l.b16 %v2827
      %v2879 = vunpack.c.h.b16 %v2827
      %v2880 = vunpack.c.l.b16 %v2828
      %v2881 = vunpack.c.h.b16 %v2828
      %v2882 = vunpack.c.l.b16 %v2829
      %v2883 = vunpack.c.h.b16 %v2829
      %v2884 = vunpack.c.l.b16 %v2830
      %v2885 = vunpack.c.h.b16 %v2830
      %v2886 = vunpack.c.l.b16 %v2831
      %v2887 = vunpack.c.h.b16 %v2831
      %v2888 = vunpack.c.l.b16 %v2832
      %v2889 = vunpack.c.h.b16 %v2832
      %v2890 = vunpack.c.l.b16 %v2833
      %v2891 = vunpack.c.h.b16 %v2833
      %v2892 = vunpack.c.l.b16 %v2834
      %v2893 = vunpack.c.h.b16 %v2834
      %v2894 = vunpack.c.l.b16 %v2835
      %v2895 = vunpack.c.h.b16 %v2835
      %v2896 = vunpack.c.l.b16 %v2836
      %v2897 = vunpack.c.h.b16 %v2836
      %v2898 = vunpack.c.l.b16 %v2837
      %v2899 = vunpack.c.h.b16 %v2837
      %v2900 = vunpack.c.l.b16 %v2838
      %v2901 = vunpack.c.h.b16 %v2838
      %v2902 = vpack.c.b16 %v2862, %v2860
      %v2903 = vpack.c.b16 %v2863, %v2861
      %v2904 = vpack.c.b16 %v2866, %v2864
      %v2905 = vpack.c.b16 %v2867, %v2865
      %v2906 = vpack.c.b16 %v2870, %v2868
      %v2907 = vpack.c.b16 %v2871, %v2869
      %v2908 = vpack.c.b16 %v2874, %v2872
      %v2909 = vpack.c.b16 %v2875, %v2873
      %v2910 = vpack.c.b16 %v2878, %v2876
      %v2911 = vpack.c.b16 %v2879, %v2877
      %v2912 = vpack.c.b16 %v2882, %v2880
      %v2913 = vpack.c.b16 %v2883, %v2881
      %v2914 = vpack.c.b16 %v2886, %v2884
      %v2915 = vpack.c.b16 %v2887, %v2885
      %v2916 = vpack.c.b16 %v2890, %v2888
      %v2917 = vpack.c.b16 %v2891, %v2889
      %v2918 = vpack.c.b16 %v2894, %v2892
      %v2919 = vpack.c.b16 %v2895, %v2893
      %v2920 = vpack.c.b16 %v2898, %v2896
      %v2921 = vpack.c.b16 %v2899, %v2897
      %v2922 = vpack.c.b16 %v2900, %v2900
      %v2923 = vpack.c.b16 %v2901, %v2901
      %v2945 = vsel %vm2028, %v2922, 0
      %v2948 = vsel %vm2028, %v2923, 0
      %2950 = vmatpush.bf16.msra.mxu0 %v2916
      %2951 = vmatpush.bf16.msra.mxu0 %v2914
      %2952 = vmatpush.bf16.msra.mxu0 %v2912
      %2953 = vmatpush.bf16.msra.mxu0 %v2910
      %2954 = vmatpush.bf16.msra.mxu0 %v2908
      %2955 = vmatpush.bf16.msra.mxu0 %v2906
      %2956 = vmatpush.bf16.msra.mxu0 %v2904
      %2957 = vmatpush.bf16.msra.mxu0 %v2902
      %2958 = vmatmul.bf16.gmra.mxu0 %v2640
      %v2959 = vpop.f32.mrf.mxu0
      %v2960 = vadd.f32 0.0, %v2959
      %v2961 = vpop.f32.mrf.mxu0
      %v2962 = vadd.f32 0.0, %v2961
      %2963 = vdwg.mxu0
      %2964 = vmatpush.bf16.msra.mxu0 0
      %2965 = vmatpush.bf16.msra.mxu0 0
      %2966 = vmatpush.bf16.msra.mxu0 0
      %2967 = vmatpush.bf16.msra.mxu0 0
      %2968 = vmatpush.bf16.msra.mxu0 0
      %2969 = vmatpush.bf16.msra.mxu0 %v2945
      %2970 = vmatpush.bf16.msra.mxu0 %v2920
      %2971 = vmatpush.bf16.msra.mxu0 %v2918
      %2972 = vmatmul.bf16.gmra.mxu0 %v2749
      %v2973 = vpop.f32.mrf.mxu0
      %v2974 = vadd.f32 %v2960, %v2973
      %v2975 = vpop.f32.mrf.mxu0
      %v2976 = vadd.f32 %v2962, %v2975
      %2977 = vdwg.mxu0
      %2978 = vmatpush.bf16.msra.mxu0 %v2917
      %2979 = vmatpush.bf16.msra.mxu0 %v2915
      %2980 = vmatpush.bf16.msra.mxu0 %v2913
      %2981 = vmatpush.bf16.msra.mxu0 %v2911
      %2982 = vmatpush.bf16.msra.mxu0 %v2909
      %2983 = vmatpush.bf16.msra.mxu0 %v2907
      %2984 = vmatpush.bf16.msra.mxu0 %v2905
      %2985 = vmatpush.bf16.msra.mxu0 %v2903
      %2986 = vmatmul.bf16.gmra.mxu0 %v2640
      %v2987 = vpop.f32.mrf.mxu0
      %v2988 = vadd.f32 0.0, %v2987
      %v2989 = vpop.f32.mrf.mxu0
      %v2990 = vadd.f32 0.0, %v2989
      %2991 = vdwg.mxu0
      %2992 = vmatpush.bf16.msra.mxu0 0
      %2993 = vmatpush.bf16.msra.mxu0 0
      %2994 = vmatpush.bf16.msra.mxu0 0
      %2995 = vmatpush.bf16.msra.mxu0 0
      %2996 = vmatpush.bf16.msra.mxu0 0
      %2997 = vmatpush.bf16.msra.mxu0 %v2948
      %2998 = vmatpush.bf16.msra.mxu0 %v2921
      %2999 = vmatpush.bf16.msra.mxu0 %v2919
      %3000 = vmatmul.bf16.gmra.mxu0 %v2749
      %v3001 = vpop.f32.mrf.mxu0
      %v3002 = vadd.f32 %v2988, %v3001
      %v3003 = vpop.f32.mrf.mxu0
      %v3004 = vadd.f32 %v2990, %v3003
      %3005 = vdwg.mxu0
      %v3006 = vadd.f32 %v2584, %v2974
      %v3007 = vadd.f32 %v2612, %v3002
      %v3008 = vadd.f32 %v2586, %v2976
      %v3009 = vadd.f32 %v2614, %v3004
      %s3010 = scalar_lea.vmem %s4, 504
      %v3011 = vld [vmem:[%s3010] sm:$0xff]
      %v3012 = vld [vmem:[%s3010 + $0x8] sm:$0xff]
      %v3013 = vld [vmem:[%s3010 + $0x10] sm:$0xff]
      %v3014 = vld [vmem:[%s3010 + $0x18] sm:$0xff]
      %v3015 = vld [vmem:[%s3010 + $0x20] sm:$0xff]
      %v3016 = vld [vmem:[%s3010 + $0x28] sm:$0xff]
      %v3017 = vld [vmem:[%s3010 + $0x30] sm:$0xff]
      %v3018 = vld [vmem:[%s3010 + $0x38] sm:$0xff]
      %v3019 = vld [vmem:[%s3010 + $0x40] sm:$0xff]
      %v3020 = vld [vmem:[%s3010 + $0x48] sm:$0xff]
      %v3021 = vld [vmem:[%s3010 + $0x50] sm:$0xff]
      %v3022 = vld [vmem:[%s3010 + $0x58] sm:$0xff]
      %v3023 = vld [vmem:[%s3010 + $0x60] sm:$0xff]
      %v3024 = vld [vmem:[%s3010 + $0x68] sm:$0xff]
      %v3025 = vld [vmem:[%s3010 + $0x70] sm:$0xff]
      %v3026 = vld [vmem:[%s3010 + $0x78] sm:$0xff]
      %v3027 = vld [vmem:[%s3010 + $0x80] sm:$0xff]
      %v3028 = vld [vmem:[%s3010 + $0x88] sm:$0xff]
      %v3029 = vld [vmem:[%s3010 + $0x90] sm:$0xff]
      %v3030 = vld [vmem:[%s3010 + $0x98] sm:$0xff]
      %v3031 = vld [vmem:[%s3010 + $0xa0] sm:$0xff]
      %v3032 = vrot.slane %v1905, 1
      %v3033 = vrot.slane %v1907, 2
      %v3034 = vor.u32 %v3032, %v3033
      %v3035 = vrot.slane %v1912, 1
      %v3036 = vrot.slane %v1914, 2
      %v3037 = vor.u32 %v3035, %v3036
      %v3060 = vunpack.c.l.b16 %v3011
      %v3061 = vunpack.c.h.b16 %v3011
      %v3062 = vunpack.c.l.b16 %v3012
      %v3063 = vunpack.c.h.b16 %v3012
      %v3064 = vunpack.c.l.b16 %v3013
      %v3065 = vunpack.c.h.b16 %v3013
      %v3066 = vunpack.c.l.b16 %v3014
      %v3067 = vunpack.c.h.b16 %v3014
      %v3068 = vunpack.c.l.b16 %v3015
      %v3069 = vunpack.c.h.b16 %v3015
      %v3070 = vunpack.c.l.b16 %v3016
      %v3071 = vunpack.c.h.b16 %v3016
      %v3072 = vunpack.c.l.b16 %v3017
      %v3073 = vunpack.c.h.b16 %v3017
      %v3074 = vunpack.c.l.b16 %v3018
      %v3075 = vunpack.c.h.b16 %v3018
      %v3076 = vunpack.c.l.b16 %v3019
      %v3077 = vunpack.c.h.b16 %v3019
      %v3078 = vunpack.c.l.b16 %v3020
      %v3079 = vunpack.c.h.b16 %v3020
      %v3080 = vunpack.c.l.b16 %v3021
      %v3081 = vunpack.c.h.b16 %v3021
      %v3082 = vunpack.c.l.b16 %v3022
      %v3083 = vunpack.c.h.b16 %v3022
      %v3084 = vunpack.c.l.b16 %v3023
      %v3085 = vunpack.c.h.b16 %v3023
      %v3086 = vunpack.c.l.b16 %v3024
      %v3087 = vunpack.c.h.b16 %v3024
      %v3088 = vunpack.c.l.b16 %v3025
      %v3089 = vunpack.c.h.b16 %v3025
      %v3090 = vunpack.c.l.b16 %v3026
      %v3091 = vunpack.c.h.b16 %v3026
      %v3092 = vunpack.c.l.b16 %v3027
      %v3093 = vunpack.c.h.b16 %v3027
      %v3094 = vunpack.c.l.b16 %v3028
      %v3095 = vunpack.c.h.b16 %v3028
      %v3096 = vunpack.c.l.b16 %v3029
      %v3097 = vunpack.c.h.b16 %v3029
      %v3098 = vunpack.c.l.b16 %v3030
      %v3099 = vunpack.c.h.b16 %v3030
      %v3100 = vunpack.c.l.b16 %v3031
      %v3101 = vunpack.c.h.b16 %v3031
      %v3102 = vpack.c.b16 %v3062, %v3060
      %v3103 = vpack.c.b16 %v3063, %v3061
      %v3104 = vpack.c.b16 %v3066, %v3064
      %v3105 = vpack.c.b16 %v3067, %v3065
      %v3106 = vpack.c.b16 %v3070, %v3068
      %v3107 = vpack.c.b16 %v3071, %v3069
      %v3108 = vpack.c.b16 %v3074, %v3072
      %v3109 = vpack.c.b16 %v3075, %v3073
      %v3110 = vpack.c.b16 %v3078, %v3076
      %v3111 = vpack.c.b16 %v3079, %v3077
      %v3112 = vpack.c.b16 %v3082, %v3080
      %v3113 = vpack.c.b16 %v3083, %v3081
      %v3114 = vpack.c.b16 %v3086, %v3084
      %v3115 = vpack.c.b16 %v3087, %v3085
      %v3116 = vpack.c.b16 %v3090, %v3088
      %v3117 = vpack.c.b16 %v3091, %v3089
      %v3118 = vpack.c.b16 %v3094, %v3092
      %v3119 = vpack.c.b16 %v3095, %v3093
      %v3120 = vpack.c.b16 %v3098, %v3096
      %v3121 = vpack.c.b16 %v3099, %v3097
      %v3122 = vpack.c.b16 %v3100, %v3100
      %v3123 = vpack.c.b16 %v3101, %v3101
      %v3145 = vsel %vm2024, %v3037, 0
      %v3148 = vsel %vm2028, %v3122, 0
      %v3151 = vsel %vm2028, %v3123, 0
      %3153 = vmatpush.bf16.msra.mxu0 %v3116
      %3154 = vmatpush.bf16.msra.mxu0 %v3114
      %3155 = vmatpush.bf16.msra.mxu0 %v3112
      %3156 = vmatpush.bf16.msra.mxu0 %v3110
      %3157 = vmatpush.bf16.msra.mxu0 %v3108
      %3158 = vmatpush.bf16.msra.mxu0 %v3106
      %3159 = vmatpush.bf16.msra.mxu0 %v3104
      %3160 = vmatpush.bf16.msra.mxu0 %v3102
      %3161 = vmatmul.bf16.gmra.mxu0 %v3034
      %v3162 = vpop.f32.mrf.mxu0
      %v3163 = vadd.f32 0.0, %v3162
      %v3164 = vpop.f32.mrf.mxu0
      %v3165 = vadd.f32 0.0, %v3164
      %3166 = vdwg.mxu0
      %3167 = vmatpush.bf16.msra.mxu0 0
      %3168 = vmatpush.bf16.msra.mxu0 0
      %3169 = vmatpush.bf16.msra.mxu0 0
      %3170 = vmatpush.bf16.msra.mxu0 0
      %3171 = vmatpush.bf16.msra.mxu0 0
      %3172 = vmatpush.bf16.msra.mxu0 %v3148
      %3173 = vmatpush.bf16.msra.mxu0 %v3120
      %3174 = vmatpush.bf16.msra.mxu0 %v3118
      %3175 = vmatmul.bf16.gmra.mxu0 %v3145
      %v3176 = vpop.f32.mrf.mxu0
      %v3177 = vadd.f32 %v3163, %v3176
      %v3178 = vpop.f32.mrf.mxu0
      %v3179 = vadd.f32 %v3165, %v3178
      %3180 = vdwg.mxu0
      %3181 = vmatpush.bf16.msra.mxu0 %v3117
      %3182 = vmatpush.bf16.msra.mxu0 %v3115
      %3183 = vmatpush.bf16.msra.mxu0 %v3113
      %3184 = vmatpush.bf16.msra.mxu0 %v3111
      %3185 = vmatpush.bf16.msra.mxu0 %v3109
      %3186 = vmatpush.bf16.msra.mxu0 %v3107
      %3187 = vmatpush.bf16.msra.mxu0 %v3105
      %3188 = vmatpush.bf16.msra.mxu0 %v3103
      %3189 = vmatmul.bf16.gmra.mxu0 %v3034
      %v3190 = vpop.f32.mrf.mxu0
      %v3191 = vadd.f32 0.0, %v3190
      %v3192 = vpop.f32.mrf.mxu0
      %v3193 = vadd.f32 0.0, %v3192
      %3194 = vdwg.mxu0
      %3195 = vmatpush.bf16.msra.mxu0 0
      %3196 = vmatpush.bf16.msra.mxu0 0
      %3197 = vmatpush.bf16.msra.mxu0 0
      %3198 = vmatpush.bf16.msra.mxu0 0
      %3199 = vmatpush.bf16.msra.mxu0 0
      %3200 = vmatpush.bf16.msra.mxu0 %v3151
      %3201 = vmatpush.bf16.msra.mxu0 %v3121
      %3202 = vmatpush.bf16.msra.mxu0 %v3119
      %3203 = vmatmul.bf16.gmra.mxu0 %v3145
      %v3204 = vpop.f32.mrf.mxu0
      %v3205 = vadd.f32 %v3191, %v3204
      %v3206 = vpop.f32.mrf.mxu0
      %v3207 = vadd.f32 %v3193, %v3206
      %3208 = vdwg.mxu0
      %v3209 = vadd.f32 %v2813, %v3177
      %v3210 = vadd.f32 %v2814, %v3205
      %v3211 = vadd.f32 %v2815, %v3179
      %v3212 = vadd.f32 %v2816, %v3207
      %s3213 = scalar_lea.vmem %s5, 504
      %v3214 = vld [vmem:[%s3213] sm:$0xff]
      %v3215 = vld [vmem:[%s3213 + $0x8] sm:$0xff]
      %v3216 = vld [vmem:[%s3213 + $0x10] sm:$0xff]
      %v3217 = vld [vmem:[%s3213 + $0x18] sm:$0xff]
      %v3218 = vld [vmem:[%s3213 + $0x20] sm:$0xff]
      %v3219 = vld [vmem:[%s3213 + $0x28] sm:$0xff]
      %v3220 = vld [vmem:[%s3213 + $0x30] sm:$0xff]
      %v3221 = vld [vmem:[%s3213 + $0x38] sm:$0xff]
      %v3222 = vld [vmem:[%s3213 + $0x40] sm:$0xff]
      %v3223 = vld [vmem:[%s3213 + $0x48] sm:$0xff]
      %v3224 = vld [vmem:[%s3213 + $0x50] sm:$0xff]
      %v3225 = vld [vmem:[%s3213 + $0x58] sm:$0xff]
      %v3226 = vld [vmem:[%s3213 + $0x60] sm:$0xff]
      %v3227 = vld [vmem:[%s3213 + $0x68] sm:$0xff]
      %v3228 = vld [vmem:[%s3213 + $0x70] sm:$0xff]
      %v3229 = vld [vmem:[%s3213 + $0x78] sm:$0xff]
      %v3230 = vld [vmem:[%s3213 + $0x80] sm:$0xff]
      %v3231 = vld [vmem:[%s3213 + $0x88] sm:$0xff]
      %v3232 = vld [vmem:[%s3213 + $0x90] sm:$0xff]
      %v3233 = vld [vmem:[%s3213 + $0x98] sm:$0xff]
      %v3234 = vld [vmem:[%s3213 + $0xa0] sm:$0xff]
      %v3256 = vunpack.c.l.b16 %v3214
      %v3257 = vunpack.c.h.b16 %v3214
      %v3258 = vunpack.c.l.b16 %v3215
      %v3259 = vunpack.c.h.b16 %v3215
      %v3260 = vunpack.c.l.b16 %v3216
      %v3261 = vunpack.c.h.b16 %v3216
      %v3262 = vunpack.c.l.b16 %v3217
      %v3263 = vunpack.c.h.b16 %v3217
      %v3264 = vunpack.c.l.b16 %v3218
      %v3265 = vunpack.c.h.b16 %v3218
      %v3266 = vunpack.c.l.b16 %v3219
      %v3267 = vunpack.c.h.b16 %v3219
      %v3268 = vunpack.c.l.b16 %v3220
      %v3269 = vunpack.c.h.b16 %v3220
      %v3270 = vunpack.c.l.b16 %v3221
      %v3271 = vunpack.c.h.b16 %v3221
      %v3272 = vunpack.c.l.b16 %v3222
      %v3273 = vunpack.c.h.b16 %v3222
      %v3274 = vunpack.c.l.b16 %v3223
      %v3275 = vunpack.c.h.b16 %v3223
      %v3276 = vunpack.c.l.b16 %v3224
      %v3277 = vunpack.c.h.b16 %v3224
      %v3278 = vunpack.c.l.b16 %v3225
      %v3279 = vunpack.c.h.b16 %v3225
      %v3280 = vunpack.c.l.b16 %v3226
      %v3281 = vunpack.c.h.b16 %v3226
      %v3282 = vunpack.c.l.b16 %v3227
      %v3283 = vunpack.c.h.b16 %v3227
      %v3284 = vunpack.c.l.b16 %v3228
      %v3285 = vunpack.c.h.b16 %v3228
      %v3286 = vunpack.c.l.b16 %v3229
      %v3287 = vunpack.c.h.b16 %v3229
      %v3288 = vunpack.c.l.b16 %v3230
      %v3289 = vunpack.c.h.b16 %v3230
      %v3290 = vunpack.c.l.b16 %v3231
      %v3291 = vunpack.c.h.b16 %v3231
      %v3292 = vunpack.c.l.b16 %v3232
      %v3293 = vunpack.c.h.b16 %v3232
      %v3294 = vunpack.c.l.b16 %v3233
      %v3295 = vunpack.c.h.b16 %v3233
      %v3296 = vunpack.c.l.b16 %v3234
      %v3297 = vunpack.c.h.b16 %v3234
      %v3298 = vpack.c.b16 %v3258, %v3256
      %v3299 = vpack.c.b16 %v3259, %v3257
      %v3300 = vpack.c.b16 %v3262, %v3260
      %v3301 = vpack.c.b16 %v3263, %v3261
      %v3302 = vpack.c.b16 %v3266, %v3264
      %v3303 = vpack.c.b16 %v3267, %v3265
      %v3304 = vpack.c.b16 %v3270, %v3268
      %v3305 = vpack.c.b16 %v3271, %v3269
      %v3306 = vpack.c.b16 %v3274, %v3272
      %v3307 = vpack.c.b16 %v3275, %v3273
      %v3308 = vpack.c.b16 %v3278, %v3276
      %v3309 = vpack.c.b16 %v3279, %v3277
      %v3310 = vpack.c.b16 %v3282, %v3280
      %v3311 = vpack.c.b16 %v3283, %v3281
      %v3312 = vpack.c.b16 %v3286, %v3284
      %v3313 = vpack.c.b16 %v3287, %v3285
      %v3314 = vpack.c.b16 %v3290, %v3288
      %v3315 = vpack.c.b16 %v3291, %v3289
      %v3316 = vpack.c.b16 %v3294, %v3292
      %v3317 = vpack.c.b16 %v3295, %v3293
      %v3318 = vpack.c.b16 %v3296, %v3296
      %v3319 = vpack.c.b16 %v3297, %v3297
      %v3341 = vsel %vm2028, %v3318, 0
      %v3344 = vsel %vm2028, %v3319, 0
      %3346 = vmatpush.bf16.msra.mxu0 %v3312
      %3347 = vmatpush.bf16.msra.mxu0 %v3310
      %3348 = vmatpush.bf16.msra.mxu0 %v3308
      %3349 = vmatpush.bf16.msra.mxu0 %v3306
      %3350 = vmatpush.bf16.msra.mxu0 %v3304
      %3351 = vmatpush.bf16.msra.mxu0 %v3302
      %3352 = vmatpush.bf16.msra.mxu0 %v3300
      %3353 = vmatpush.bf16.msra.mxu0 %v3298
      %3354 = vmatmul.bf16.gmra.mxu0 %v3034
      %v3355 = vpop.f32.mrf.mxu0
      %v3356 = vadd.f32 0.0, %v3355
      %v3357 = vpop.f32.mrf.mxu0
      %v3358 = vadd.f32 0.0, %v3357
      %3359 = vdwg.mxu0
      %3360 = vmatpush.bf16.msra.mxu0 0
      %3361 = vmatpush.bf16.msra.mxu0 0
      %3362 = vmatpush.bf16.msra.mxu0 0
      %3363 = vmatpush.bf16.msra.mxu0 0
      %3364 = vmatpush.bf16.msra.mxu0 0
      %3365 = vmatpush.bf16.msra.mxu0 %v3341
      %3366 = vmatpush.bf16.msra.mxu0 %v3316
      %3367 = vmatpush.bf16.msra.mxu0 %v3314
      %3368 = vmatmul.bf16.gmra.mxu0 %v3145
      %v3369 = vpop.f32.mrf.mxu0
      %v3370 = vadd.f32 %v3356, %v3369
      %v3371 = vpop.f32.mrf.mxu0
      %v3372 = vadd.f32 %v3358, %v3371
      %3373 = vdwg.mxu0
      %3374 = vmatpush.bf16.msra.mxu0 %v3313
      %3375 = vmatpush.bf16.msra.mxu0 %v3311
      %3376 = vmatpush.bf16.msra.mxu0 %v3309
      %3377 = vmatpush.bf16.msra.mxu0 %v3307
      %3378 = vmatpush.bf16.msra.mxu0 %v3305
      %3379 = vmatpush.bf16.msra.mxu0 %v3303
      %3380 = vmatpush.bf16.msra.mxu0 %v3301
      %3381 = vmatpush.bf16.msra.mxu0 %v3299
      %3382 = vmatmul.bf16.gmra.mxu0 %v3034
      %v3383 = vpop.f32.mrf.mxu0
      %v3384 = vadd.f32 0.0, %v3383
      %v3385 = vpop.f32.mrf.mxu0
      %v3386 = vadd.f32 0.0, %v3385
      %3387 = vdwg.mxu0
      %3388 = vmatpush.bf16.msra.mxu0 0
      %3389 = vmatpush.bf16.msra.mxu0 0
      %3390 = vmatpush.bf16.msra.mxu0 0
      %3391 = vmatpush.bf16.msra.mxu0 0
      %3392 = vmatpush.bf16.msra.mxu0 0
      %3393 = vmatpush.bf16.msra.mxu0 %v3344
      %3394 = vmatpush.bf16.msra.mxu0 %v3317
      %3395 = vmatpush.bf16.msra.mxu0 %v3315
      %3396 = vmatmul.bf16.gmra.mxu0 %v3145
      %v3397 = vpop.f32.mrf.mxu0
      %v3398 = vadd.f32 %v3384, %v3397
      %v3399 = vpop.f32.mrf.mxu0
      %v3400 = vadd.f32 %v3386, %v3399
      %3401 = vdwg.mxu0
      %v3402 = vadd.f32 %v3006, %v3370
      %v3403 = vadd.f32 %v3007, %v3398
      %v3404 = vadd.f32 %v3008, %v3372
      %v3405 = vadd.f32 %v3009, %v3400
      %s3406 = scalar_lea.vmem %s4, 672
      %v3407 = vld [vmem:[%s3406] sm:$0xff]
      %v3408 = vld [vmem:[%s3406 + $0x8] sm:$0xff]
      %v3409 = vld [vmem:[%s3406 + $0x10] sm:$0xff]
      %v3410 = vld [vmem:[%s3406 + $0x18] sm:$0xff]
      %v3411 = vld [vmem:[%s3406 + $0x20] sm:$0xff]
      %v3412 = vld [vmem:[%s3406 + $0x28] sm:$0xff]
      %v3413 = vld [vmem:[%s3406 + $0x30] sm:$0xff]
      %v3414 = vld [vmem:[%s3406 + $0x38] sm:$0xff]
      %v3415 = vld [vmem:[%s3406 + $0x40] sm:$0xff]
      %v3416 = vld [vmem:[%s3406 + $0x48] sm:$0xff]
      %v3417 = vld [vmem:[%s3406 + $0x50] sm:$0xff]
      %v3418 = vld [vmem:[%s3406 + $0x58] sm:$0xff]
      %v3419 = vld [vmem:[%s3406 + $0x60] sm:$0xff]
      %v3420 = vld [vmem:[%s3406 + $0x68] sm:$0xff]
      %v3421 = vld [vmem:[%s3406 + $0x70] sm:$0xff]
      %v3422 = vld [vmem:[%s3406 + $0x78] sm:$0xff]
      %v3423 = vld [vmem:[%s3406 + $0x80] sm:$0xff]
      %v3424 = vld [vmem:[%s3406 + $0x88] sm:$0xff]
      %v3425 = vld [vmem:[%s3406 + $0x90] sm:$0xff]
      %v3426 = vld [vmem:[%s3406 + $0x98] sm:$0xff]
      %v3427 = vld [vmem:[%s3406 + $0xa0] sm:$0xff]
      %v3428 = vrot.slane %v1838, 2
      %v3429 = vrot.slane %v1839, 2
      %v3452 = vunpack.c.l.b16 %v3407
      %v3453 = vunpack.c.h.b16 %v3407
      %v3454 = vunpack.c.l.b16 %v3408
      %v3455 = vunpack.c.h.b16 %v3408
      %v3456 = vunpack.c.l.b16 %v3409
      %v3457 = vunpack.c.h.b16 %v3409
      %v3458 = vunpack.c.l.b16 %v3410
      %v3459 = vunpack.c.h.b16 %v3410
      %v3460 = vunpack.c.l.b16 %v3411
      %v3461 = vunpack.c.h.b16 %v3411
      %v3462 = vunpack.c.l.b16 %v3412
      %v3463 = vunpack.c.h.b16 %v3412
      %v3464 = vunpack.c.l.b16 %v3413
      %v3465 = vunpack.c.h.b16 %v3413
      %v3466 = vunpack.c.l.b16 %v3414
      %v3467 = vunpack.c.h.b16 %v3414
      %v3468 = vunpack.c.l.b16 %v3415
      %v3469 = vunpack.c.h.b16 %v3415
      %v3470 = vunpack.c.l.b16 %v3416
      %v3471 = vunpack.c.h.b16 %v3416
      %v3472 = vunpack.c.l.b16 %v3417
      %v3473 = vunpack.c.h.b16 %v3417
      %v3474 = vunpack.c.l.b16 %v3418
      %v3475 = vunpack.c.h.b16 %v3418
      %v3476 = vunpack.c.l.b16 %v3419
      %v3477 = vunpack.c.h.b16 %v3419
      %v3478 = vunpack.c.l.b16 %v3420
      %v3479 = vunpack.c.h.b16 %v3420
      %v3480 = vunpack.c.l.b16 %v3421
      %v3481 = vunpack.c.h.b16 %v3421
      %v3482 = vunpack.c.l.b16 %v3422
      %v3483 = vunpack.c.h.b16 %v3422
      %v3484 = vunpack.c.l.b16 %v3423
      %v3485 = vunpack.c.h.b16 %v3423
      %v3486 = vunpack.c.l.b16 %v3424
      %v3487 = vunpack.c.h.b16 %v3424
      %v3488 = vunpack.c.l.b16 %v3425
      %v3489 = vunpack.c.h.b16 %v3425
      %v3490 = vunpack.c.l.b16 %v3426
      %v3491 = vunpack.c.h.b16 %v3426
      %v3492 = vunpack.c.l.b16 %v3427
      %v3493 = vunpack.c.h.b16 %v3427
      %v3494 = vpack.c.b16 %v3454, %v3452
      %v3495 = vpack.c.b16 %v3455, %v3453
      %v3496 = vpack.c.b16 %v3458, %v3456
      %v3497 = vpack.c.b16 %v3459, %v3457
      %v3498 = vpack.c.b16 %v3462, %v3460
      %v3499 = vpack.c.b16 %v3463, %v3461
      %v3500 = vpack.c.b16 %v3466, %v3464
      %v3501 = vpack.c.b16 %v3467, %v3465
      %v3502 = vpack.c.b16 %v3470, %v3468
      %v3503 = vpack.c.b16 %v3471, %v3469
      %v3504 = vpack.c.b16 %v3474, %v3472
      %v3505 = vpack.c.b16 %v3475, %v3473
      %v3506 = vpack.c.b16 %v3478, %v3476
      %v3507 = vpack.c.b16 %v3479, %v3477
      %v3508 = vpack.c.b16 %v3482, %v3480
      %v3509 = vpack.c.b16 %v3483, %v3481
      %v3510 = vpack.c.b16 %v3486, %v3484
      %v3511 = vpack.c.b16 %v3487, %v3485
      %v3512 = vpack.c.b16 %v3490, %v3488
      %v3513 = vpack.c.b16 %v3491, %v3489
      %v3514 = vpack.c.b16 %v3492, %v3492
      %v3515 = vpack.c.b16 %v3493, %v3493
      %v3537 = vsel %vm2024, %v3429, 0
      %v3540 = vsel %vm2028, %v3514, 0
      %v3543 = vsel %vm2028, %v3515, 0
      %3545 = vmatpush.bf16.msra.mxu0 %v3508
      %3546 = vmatpush.bf16.msra.mxu0 %v3506
      %3547 = vmatpush.bf16.msra.mxu0 %v3504
      %3548 = vmatpush.bf16.msra.mxu0 %v3502
      %3549 = vmatpush.bf16.msra.mxu0 %v3500
      %3550 = vmatpush.bf16.msra.mxu0 %v3498
      %3551 = vmatpush.bf16.msra.mxu0 %v3496
      %3552 = vmatpush.bf16.msra.mxu0 %v3494
      %3553 = vmatmul.bf16.gmra.mxu0 %v3428
      %v3554 = vpop.f32.mrf.mxu0
      %v3555 = vadd.f32 0.0, %v3554
      %v3556 = vpop.f32.mrf.mxu0
      %v3557 = vadd.f32 0.0, %v3556
      %3558 = vdwg.mxu0
      %3559 = vmatpush.bf16.msra.mxu0 0
      %3560 = vmatpush.bf16.msra.mxu0 0
      %3561 = vmatpush.bf16.msra.mxu0 0
      %3562 = vmatpush.bf16.msra.mxu0 0
      %3563 = vmatpush.bf16.msra.mxu0 0
      %3564 = vmatpush.bf16.msra.mxu0 %v3540
      %3565 = vmatpush.bf16.msra.mxu0 %v3512
      %3566 = vmatpush.bf16.msra.mxu0 %v3510
      %3567 = vmatmul.bf16.gmra.mxu0 %v3537
      %v3568 = vpop.f32.mrf.mxu0
      %v3569 = vadd.f32 %v3555, %v3568
      %v3570 = vpop.f32.mrf.mxu0
      %v3571 = vadd.f32 %v3557, %v3570
      %3572 = vdwg.mxu0
      %3573 = vmatpush.bf16.msra.mxu0 %v3509
      %3574 = vmatpush.bf16.msra.mxu0 %v3507
      %3575 = vmatpush.bf16.msra.mxu0 %v3505
      %3576 = vmatpush.bf16.msra.mxu0 %v3503
      %3577 = vmatpush.bf16.msra.mxu0 %v3501
      %3578 = vmatpush.bf16.msra.mxu0 %v3499
      %3579 = vmatpush.bf16.msra.mxu0 %v3497
      %3580 = vmatpush.bf16.msra.mxu0 %v3495
      %3581 = vmatmul.bf16.gmra.mxu0 %v3428
      %v3582 = vpop.f32.mrf.mxu0
      %v3583 = vadd.f32 0.0, %v3582
      %v3584 = vpop.f32.mrf.mxu0
      %v3585 = vadd.f32 0.0, %v3584
      %3586 = vdwg.mxu0
      %3587 = vmatpush.bf16.msra.mxu0 0
      %3588 = vmatpush.bf16.msra.mxu0 0
      %3589 = vmatpush.bf16.msra.mxu0 0
      %3590 = vmatpush.bf16.msra.mxu0 0
      %3591 = vmatpush.bf16.msra.mxu0 0
      %3592 = vmatpush.bf16.msra.mxu0 %v3543
      %3593 = vmatpush.bf16.msra.mxu0 %v3513
      %3594 = vmatpush.bf16.msra.mxu0 %v3511
      %3595 = vmatmul.bf16.gmra.mxu0 %v3537
      %v3596 = vpop.f32.mrf.mxu0
      %v3597 = vadd.f32 %v3583, %v3596
      %v3598 = vpop.f32.mrf.mxu0
      %v3599 = vadd.f32 %v3585, %v3598
      %3600 = vdwg.mxu0
      %v3601 = vadd.f32 %v3209, %v3569
      %v3602 = vadd.f32 %v3210, %v3597
      %v3603 = vadd.f32 %v3211, %v3571
      %v3604 = vadd.f32 %v3212, %v3599
      %s3605 = scalar_lea.vmem %s5, 672
      %v3606 = vld [vmem:[%s3605] sm:$0xff]
      %v3607 = vld [vmem:[%s3605 + $0x8] sm:$0xff]
      %v3608 = vld [vmem:[%s3605 + $0x10] sm:$0xff]
      %v3609 = vld [vmem:[%s3605 + $0x18] sm:$0xff]
      %v3610 = vld [vmem:[%s3605 + $0x20] sm:$0xff]
      %v3611 = vld [vmem:[%s3605 + $0x28] sm:$0xff]
      %v3612 = vld [vmem:[%s3605 + $0x30] sm:$0xff]
      %v3613 = vld [vmem:[%s3605 + $0x38] sm:$0xff]
      %v3614 = vld [vmem:[%s3605 + $0x40] sm:$0xff]
      %v3615 = vld [vmem:[%s3605 + $0x48] sm:$0xff]
      %v3616 = vld [vmem:[%s3605 + $0x50] sm:$0xff]
      %v3617 = vld [vmem:[%s3605 + $0x58] sm:$0xff]
      %v3618 = vld [vmem:[%s3605 + $0x60] sm:$0xff]
      %v3619 = vld [vmem:[%s3605 + $0x68] sm:$0xff]
      %v3620 = vld [vmem:[%s3605 + $0x70] sm:$0xff]
      %v3621 = vld [vmem:[%s3605 + $0x78] sm:$0xff]
      %v3622 = vld [vmem:[%s3605 + $0x80] sm:$0xff]
      %v3623 = vld [vmem:[%s3605 + $0x88] sm:$0xff]
      %v3624 = vld [vmem:[%s3605 + $0x90] sm:$0xff]
      %v3625 = vld [vmem:[%s3605 + $0x98] sm:$0xff]
      %v3626 = vld [vmem:[%s3605 + $0xa0] sm:$0xff]
      %v3648 = vunpack.c.l.b16 %v3606
      %v3649 = vunpack.c.h.b16 %v3606
      %v3650 = vunpack.c.l.b16 %v3607
      %v3651 = vunpack.c.h.b16 %v3607
      %v3652 = vunpack.c.l.b16 %v3608
      %v3653 = vunpack.c.h.b16 %v3608
      %v3654 = vunpack.c.l.b16 %v3609
      %v3655 = vunpack.c.h.b16 %v3609
      %v3656 = vunpack.c.l.b16 %v3610
      %v3657 = vunpack.c.h.b16 %v3610
      %v3658 = vunpack.c.l.b16 %v3611
      %v3659 = vunpack.c.h.b16 %v3611
      %v3660 = vunpack.c.l.b16 %v3612
      %v3661 = vunpack.c.h.b16 %v3612
      %v3662 = vunpack.c.l.b16 %v3613
      %v3663 = vunpack.c.h.b16 %v3613
      %v3664 = vunpack.c.l.b16 %v3614
      %v3665 = vunpack.c.h.b16 %v3614
      %v3666 = vunpack.c.l.b16 %v3615
      %v3667 = vunpack.c.h.b16 %v3615
      %v3668 = vunpack.c.l.b16 %v3616
      %v3669 = vunpack.c.h.b16 %v3616
      %v3670 = vunpack.c.l.b16 %v3617
      %v3671 = vunpack.c.h.b16 %v3617
      %v3672 = vunpack.c.l.b16 %v3618
      %v3673 = vunpack.c.h.b16 %v3618
      %v3674 = vunpack.c.l.b16 %v3619
      %v3675 = vunpack.c.h.b16 %v3619
      %v3676 = vunpack.c.l.b16 %v3620
      %v3677 = vunpack.c.h.b16 %v3620
      %v3678 = vunpack.c.l.b16 %v3621
      %v3679 = vunpack.c.h.b16 %v3621
      %v3680 = vunpack.c.l.b16 %v3622
      %v3681 = vunpack.c.h.b16 %v3622
      %v3682 = vunpack.c.l.b16 %v3623
      %v3683 = vunpack.c.h.b16 %v3623
      %v3684 = vunpack.c.l.b16 %v3624
      %v3685 = vunpack.c.h.b16 %v3624
      %v3686 = vunpack.c.l.b16 %v3625
      %v3687 = vunpack.c.h.b16 %v3625
      %v3688 = vunpack.c.l.b16 %v3626
      %v3689 = vunpack.c.h.b16 %v3626
      %v3690 = vpack.c.b16 %v3650, %v3648
      %v3691 = vpack.c.b16 %v3651, %v3649
      %v3692 = vpack.c.b16 %v3654, %v3652
      %v3693 = vpack.c.b16 %v3655, %v3653
      %v3694 = vpack.c.b16 %v3658, %v3656
      %v3695 = vpack.c.b16 %v3659, %v3657
      %v3696 = vpack.c.b16 %v3662, %v3660
      %v3697 = vpack.c.b16 %v3663, %v3661
      %v3698 = vpack.c.b16 %v3666, %v3664
      %v3699 = vpack.c.b16 %v3667, %v3665
      %v3700 = vpack.c.b16 %v3670, %v3668
      %v3701 = vpack.c.b16 %v3671, %v3669
      %v3702 = vpack.c.b16 %v3674, %v3672
      %v3703 = vpack.c.b16 %v3675, %v3673
      %v3704 = vpack.c.b16 %v3678, %v3676
      %v3705 = vpack.c.b16 %v3679, %v3677
      %v3706 = vpack.c.b16 %v3682, %v3680
      %v3707 = vpack.c.b16 %v3683, %v3681
      %v3708 = vpack.c.b16 %v3686, %v3684
      %v3709 = vpack.c.b16 %v3687, %v3685
      %v3710 = vpack.c.b16 %v3688, %v3688
      %v3711 = vpack.c.b16 %v3689, %v3689
      %v3733 = vsel %vm2028, %v3710, 0
      %v3736 = vsel %vm2028, %v3711, 0
      %3738 = vmatpush.bf16.msra.mxu0 %v3704
      %3739 = vmatpush.bf16.msra.mxu0 %v3702
      %3740 = vmatpush.bf16.msra.mxu0 %v3700
      %3741 = vmatpush.bf16.msra.mxu0 %v3698
      %3742 = vmatpush.bf16.msra.mxu0 %v3696
      %3743 = vmatpush.bf16.msra.mxu0 %v3694
      %3744 = vmatpush.bf16.msra.mxu0 %v3692
      %3745 = vmatpush.bf16.msra.mxu0 %v3690
      %3746 = vmatmul.bf16.gmra.mxu0 %v3428
      %v3747 = vpop.f32.mrf.mxu0
      %v3748 = vadd.f32 0.0, %v3747
      %v3749 = vpop.f32.mrf.mxu0
      %v3750 = vadd.f32 0.0, %v3749
      %3751 = vdwg.mxu0
      %3752 = vmatpush.bf16.msra.mxu0 0
      %3753 = vmatpush.bf16.msra.mxu0 0
      %3754 = vmatpush.bf16.msra.mxu0 0
      %3755 = vmatpush.bf16.msra.mxu0 0
      %3756 = vmatpush.bf16.msra.mxu0 0
      %3757 = vmatpush.bf16.msra.mxu0 %v3733
      %3758 = vmatpush.bf16.msra.mxu0 %v3708
      %3759 = vmatpush.bf16.msra.mxu0 %v3706
      %3760 = vmatmul.bf16.gmra.mxu0 %v3537
      %v3761 = vpop.f32.mrf.mxu0
      %v3762 = vadd.f32 %v3748, %v3761
      %v3763 = vpop.f32.mrf.mxu0
      %v3764 = vadd.f32 %v3750, %v3763
      %3765 = vdwg.mxu0
      %3766 = vmatpush.bf16.msra.mxu0 %v3705
      %3767 = vmatpush.bf16.msra.mxu0 %v3703
      %3768 = vmatpush.bf16.msra.mxu0 %v3701
      %3769 = vmatpush.bf16.msra.mxu0 %v3699
      %3770 = vmatpush.bf16.msra.mxu0 %v3697
      %3771 = vmatpush.bf16.msra.mxu0 %v3695
      %3772 = vmatpush.bf16.msra.mxu0 %v3693
      %3773 = vmatpush.bf16.msra.mxu0 %v3691
      %3774 = vmatmul.bf16.gmra.mxu0 %v3428
      %v3775 = vpop.f32.mrf.mxu0
      %v3776 = vadd.f32 0.0, %v3775
      %v3777 = vpop.f32.mrf.mxu0
      %v3778 = vadd.f32 0.0, %v3777
      %3779 = vdwg.mxu0
      %3780 = vmatpush.bf16.msra.mxu0 0
      %3781 = vmatpush.bf16.msra.mxu0 0
      %3782 = vmatpush.bf16.msra.mxu0 0
      %3783 = vmatpush.bf16.msra.mxu0 0
      %3784 = vmatpush.bf16.msra.mxu0 0
      %3785 = vmatpush.bf16.msra.mxu0 %v3736
      %3786 = vmatpush.bf16.msra.mxu0 %v3709
      %3787 = vmatpush.bf16.msra.mxu0 %v3707
      %3788 = vmatmul.bf16.gmra.mxu0 %v3537
      %v3789 = vpop.f32.mrf.mxu0
      %v3790 = vadd.f32 %v3776, %v3789
      %v3791 = vpop.f32.mrf.mxu0
      %v3792 = vadd.f32 %v3778, %v3791
      %3793 = vdwg.mxu0
      %v3794 = vadd.f32 %v3402, %v3762
      %v3795 = vadd.f32 %v3403, %v3790
      %v3796 = vadd.f32 %v3404, %v3764
      %v3797 = vadd.f32 %v3405, %v3792
      %v3798 = vmax.f32 %v3601, %v3794
      %v3799 = vmax.f32 %v3602, %v3795
      %v3800 = vmax.f32 %v3603, %v3796
      %v3801 = vmax.f32 %v3604, %v3797
      %v3804 = vrot.slane %v3798, 1
      %v3805 = vrot.slane %v3799, 1
      %v3808 = vmax.f32 %v3798, %v3804
      %v3809 = vmax.f32 %v3799, %v3805
      %v3810 = vld [vmem:[%s6] sm:$0x3]
      %v3812 = vperm.slane %v3810, 0
      %v3813 = vperm.slane %v3810, 1
      %v3816 = vadd.f32 %v3808, %v3812
      %v3817 = vadd.f32 %v3809, %v3813
      %v3818 = vmax.f32 %v3816, 0.0
      %v3819 = vmax.f32 %v3817, 0.0
      %v3820 = vpack.c.bf16 %v3818, %v3818
      %v3821 = vpack.c.bf16 %v3819, %v3819
      %v3822 = vld [vmem:[%s7] sm:$0xff]
      %v3823 = vld [vmem:[%s7 + $0x8] sm:$0xff]
      %v3824 = vld [vmem:[%s7 + $0x10] sm:$0xff]
      %v3825 = vld [vmem:[%s7 + $0x18] sm:$0xff]
      %v3826 = vld [vmem:[%s7 + $0x20] sm:$0xff]
      %v3827 = vld [vmem:[%s7 + $0x28] sm:$0xff]
      %v3828 = vld [vmem:[%s7 + $0x30] sm:$0xff]
      %v3829 = vld [vmem:[%s7 + $0x38] sm:$0xff]
      %v3830 = vld [vmem:[%s7 + $0x40] sm:$0xff]
      %v3831 = vld [vmem:[%s7 + $0x48] sm:$0xff]
      %v3832 = vld [vmem:[%s7 + $0x50] sm:$0xff]
      %v3833 = vld [vmem:[%s7 + $0x58] sm:$0xff]
      %v3834 = vld [vmem:[%s7 + $0x60] sm:$0xff]
      %v3835 = vld [vmem:[%s7 + $0x68] sm:$0xff]
      %v3836 = vld [vmem:[%s7 + $0x70] sm:$0xff]
      %v3837 = vld [vmem:[%s7 + $0x78] sm:$0xff]
      %v3838 = vld [vmem:[%s7 + $0x80] sm:$0xff]
      %v3839 = vld [vmem:[%s7 + $0x88] sm:$0xff]
      %v3840 = vld [vmem:[%s7 + $0x90] sm:$0xff]
      %v3841 = vld [vmem:[%s7 + $0x98] sm:$0xff]
      %v3842 = vld [vmem:[%s7 + $0xa0] sm:$0xff]
      %v3843 = vld [vmem:[%s7 + $0xa8] sm:$0xff]
      %v3844 = vld [vmem:[%s7 + $0xb0] sm:$0xff]
      %v3845 = vld [vmem:[%s7 + $0xb8] sm:$0xff]
      %v3846 = vld [vmem:[%s7 + $0xc0] sm:$0xff]
      %v3847 = vld [vmem:[%s7 + $0xc8] sm:$0xff]
      %v3848 = vld [vmem:[%s7 + $0xd0] sm:$0xff]
      %v3849 = vld [vmem:[%s7 + $0xd8] sm:$0xff]
      %v3850 = vld [vmem:[%s7 + $0xe0] sm:$0xff]
      %v3851 = vld [vmem:[%s7 + $0xe8] sm:$0xff]
      %v3852 = vld [vmem:[%s7 + $0xf0] sm:$0xff]
      %v3853 = vld [vmem:[%s7 + $0xf8] sm:$0xff]
      %v3854 = vld [vmem:[%s7 + $0x100] sm:$0xff]
      %v3855 = vld [vmem:[%s7 + $0x108] sm:$0xff]
      %v3856 = vld [vmem:[%s7 + $0x110] sm:$0xff]
      %v3857 = vld [vmem:[%s7 + $0x118] sm:$0xff]
      %v3858 = vld [vmem:[%s7 + $0x120] sm:$0xff]
      %v3859 = vld [vmem:[%s7 + $0x128] sm:$0xff]
      %v3860 = vld [vmem:[%s7 + $0x130] sm:$0xff]
      %v3861 = vld [vmem:[%s7 + $0x138] sm:$0xff]
      %v3864 = vrot.slane %v3820, 1
      %v3865 = vrot.slane %v3821, 1
      %v3887 = vunpack.c.l.b16 %v3842
      %v3888 = vunpack.c.h.b16 %v3842
      %v3889 = vunpack.c.l.b16 %v3843
      %v3890 = vunpack.c.h.b16 %v3843
      %v3891 = vunpack.c.l.b16 %v3844
      %v3892 = vunpack.c.h.b16 %v3844
      %v3893 = vunpack.c.l.b16 %v3845
      %v3894 = vunpack.c.h.b16 %v3845
      %v3895 = vunpack.c.l.b16 %v3846
      %v3896 = vunpack.c.h.b16 %v3846
      %v3897 = vunpack.c.l.b16 %v3847
      %v3898 = vunpack.c.h.b16 %v3847
      %v3899 = vunpack.c.l.b16 %v3848
      %v3900 = vunpack.c.h.b16 %v3848
      %v3901 = vunpack.c.l.b16 %v3849
      %v3902 = vunpack.c.h.b16 %v3849
      %v3903 = vunpack.c.l.b16 %v3850
      %v3904 = vunpack.c.h.b16 %v3850
      %v3905 = vunpack.c.l.b16 %v3851
      %v3906 = vunpack.c.h.b16 %v3851
      %v3907 = vunpack.c.l.b16 %v3852
      %v3908 = vunpack.c.h.b16 %v3852
      %v3909 = vunpack.c.l.b16 %v3853
      %v3910 = vunpack.c.h.b16 %v3853
      %v3911 = vunpack.c.l.b16 %v3854
      %v3912 = vunpack.c.h.b16 %v3854
      %v3913 = vunpack.c.l.b16 %v3855
      %v3914 = vunpack.c.h.b16 %v3855
      %v3915 = vunpack.c.l.b16 %v3856
      %v3916 = vunpack.c.h.b16 %v3856
      %v3917 = vunpack.c.l.b16 %v3857
      %v3918 = vunpack.c.h.b16 %v3857
      %v3919 = vunpack.c.l.b16 %v3858
      %v3920 = vunpack.c.h.b16 %v3858
      %v3921 = vunpack.c.l.b16 %v3859
      %v3922 = vunpack.c.h.b16 %v3859
      %v3923 = vunpack.c.l.b16 %v3860
      %v3924 = vunpack.c.h.b16 %v3860
      %v3925 = vunpack.c.l.b16 %v3861
      %v3926 = vunpack.c.h.b16 %v3861
      %v3927 = vpack.c.b16 %v3889, %v3887
      %v3928 = vpack.c.b16 %v3890, %v3888
      %v3929 = vpack.c.b16 %v3893, %v3891
      %v3930 = vpack.c.b16 %v3894, %v3892
      %v3931 = vpack.c.b16 %v3897, %v3895
      %v3932 = vpack.c.b16 %v3898, %v3896
      %v3933 = vpack.c.b16 %v3901, %v3899
      %v3934 = vpack.c.b16 %v3902, %v3900
      %v3935 = vpack.c.b16 %v3905, %v3903
      %v3936 = vpack.c.b16 %v3906, %v3904
      %v3937 = vpack.c.b16 %v3909, %v3907
      %v3938 = vpack.c.b16 %v3910, %v3908
      %v3939 = vpack.c.b16 %v3913, %v3911
      %v3940 = vpack.c.b16 %v3914, %v3912
      %v3941 = vpack.c.b16 %v3917, %v3915
      %v3942 = vpack.c.b16 %v3918, %v3916
      %v3943 = vpack.c.b16 %v3921, %v3919
      %v3944 = vpack.c.b16 %v3922, %v3920
      %v3945 = vpack.c.b16 %v3925, %v3923
      %v3946 = vpack.c.b16 %v3926, %v3924
      %vm3967 = vcmask 261120
      %v3969 = vsel %vm3967, %v3865, 0
      %3971 = vmatpush.bf16.msra.mxu0 %v3941
      %3972 = vmatpush.bf16.msra.mxu0 %v3939
      %3973 = vmatpush.bf16.msra.mxu0 %v3937
      %3974 = vmatpush.bf16.msra.mxu0 %v3935
      %3975 = vmatpush.bf16.msra.mxu0 %v3933
      %3976 = vmatpush.bf16.msra.mxu0 %v3931
      %3977 = vmatpush.bf16.msra.mxu0 %v3929
      %3978 = vmatpush.bf16.msra.mxu0 %v3927
      %3979 = vmatmul.bf16.gmra.mxu0 %v3864
      %v3980 = vpop.f32.mrf.mxu0
      %v3981 = vadd.f32 0.0, %v3980
      %v3982 = vpop.f32.mrf.mxu0
      %3983 = vdwg.mxu0
      %3984 = vmatpush.bf16.msra.mxu0 0
      %3985 = vmatpush.bf16.msra.mxu0 0
      %3986 = vmatpush.bf16.msra.mxu0 0
      %3987 = vmatpush.bf16.msra.mxu0 0
      %3988 = vmatpush.bf16.msra.mxu0 0
      %3989 = vmatpush.bf16.msra.mxu0 0
      %3990 = vmatpush.bf16.msra.mxu0 %v3945
      %3991 = vmatpush.bf16.msra.mxu0 %v3943
      %3992 = vmatmul.bf16.gmra.mxu0 %v3969
      %v3993 = vpop.f32.mrf.mxu0
      %v3994 = vadd.f32 %v3981, %v3993
      %v3995 = vpop.f32.mrf.mxu0
      %3996 = vdwg.mxu0
      %3997 = vmatpush.bf16.msra.mxu0 %v3942
      %3998 = vmatpush.bf16.msra.mxu0 %v3940
      %3999 = vmatpush.bf16.msra.mxu0 %v3938
      %4000 = vmatpush.bf16.msra.mxu0 %v3936
      %4001 = vmatpush.bf16.msra.mxu0 %v3934
      %4002 = vmatpush.bf16.msra.mxu0 %v3932
      %4003 = vmatpush.bf16.msra.mxu0 %v3930
      %4004 = vmatpush.bf16.msra.mxu0 %v3928
      %4005 = vmatmul.bf16.gmra.mxu0 %v3864
      %v4006 = vpop.f32.mrf.mxu0
      %v4007 = vadd.f32 0.0, %v4006
      %v4008 = vpop.f32.mrf.mxu0
      %4009 = vdwg.mxu0
      %4010 = vmatpush.bf16.msra.mxu0 0
      %4011 = vmatpush.bf16.msra.mxu0 0
      %4012 = vmatpush.bf16.msra.mxu0 0
      %4013 = vmatpush.bf16.msra.mxu0 0
      %4014 = vmatpush.bf16.msra.mxu0 0
      %4015 = vmatpush.bf16.msra.mxu0 0
      %4016 = vmatpush.bf16.msra.mxu0 %v3946
      %4017 = vmatpush.bf16.msra.mxu0 %v3944
      %4018 = vmatmul.bf16.gmra.mxu0 %v3969
      %v4019 = vpop.f32.mrf.mxu0
      %v4020 = vadd.f32 %v4007, %v4019
      %v4021 = vpop.f32.mrf.mxu0
      %4022 = vdwg.mxu0
      %v4043 = vunpack.c.l.b16 %v3822
      %v4044 = vunpack.c.h.b16 %v3822
      %v4045 = vunpack.c.l.b16 %v3823
      %v4046 = vunpack.c.h.b16 %v3823
      %v4047 = vunpack.c.l.b16 %v3824
      %v4048 = vunpack.c.h.b16 %v3824
      %v4049 = vunpack.c.l.b16 %v3825
      %v4050 = vunpack.c.h.b16 %v3825
      %v4051 = vunpack.c.l.b16 %v3826
      %v4052 = vunpack.c.h.b16 %v3826
      %v4053 = vunpack.c.l.b16 %v3827
      %v4054 = vunpack.c.h.b16 %v3827
      %v4055 = vunpack.c.l.b16 %v3828
      %v4056 = vunpack.c.h.b16 %v3828
      %v4057 = vunpack.c.l.b16 %v3829
      %v4058 = vunpack.c.h.b16 %v3829
      %v4059 = vunpack.c.l.b16 %v3830
      %v4060 = vunpack.c.h.b16 %v3830
      %v4061 = vunpack.c.l.b16 %v3831
      %v4062 = vunpack.c.h.b16 %v3831
      %v4063 = vunpack.c.l.b16 %v3832
      %v4064 = vunpack.c.h.b16 %v3832
      %v4065 = vunpack.c.l.b16 %v3833
      %v4066 = vunpack.c.h.b16 %v3833
      %v4067 = vunpack.c.l.b16 %v3834
      %v4068 = vunpack.c.h.b16 %v3834
      %v4069 = vunpack.c.l.b16 %v3835
      %v4070 = vunpack.c.h.b16 %v3835
      %v4071 = vunpack.c.l.b16 %v3836
      %v4072 = vunpack.c.h.b16 %v3836
      %v4073 = vunpack.c.l.b16 %v3837
      %v4074 = vunpack.c.h.b16 %v3837
      %v4075 = vunpack.c.l.b16 %v3838
      %v4076 = vunpack.c.h.b16 %v3838
      %v4077 = vunpack.c.l.b16 %v3839
      %v4078 = vunpack.c.h.b16 %v3839
      %v4079 = vunpack.c.l.b16 %v3840
      %v4080 = vunpack.c.h.b16 %v3840
      %v4081 = vunpack.c.l.b16 %v3841
      %v4082 = vunpack.c.h.b16 %v3841
      %v4083 = vpack.c.b16 %v4045, %v4043
      %v4084 = vpack.c.b16 %v4046, %v4044
      %v4085 = vpack.c.b16 %v4049, %v4047
      %v4086 = vpack.c.b16 %v4050, %v4048
      %v4087 = vpack.c.b16 %v4053, %v4051
      %v4088 = vpack.c.b16 %v4054, %v4052
      %v4089 = vpack.c.b16 %v4057, %v4055
      %v4090 = vpack.c.b16 %v4058, %v4056
      %v4091 = vpack.c.b16 %v4061, %v4059
      %v4092 = vpack.c.b16 %v4062, %v4060
      %v4093 = vpack.c.b16 %v4065, %v4063
      %v4094 = vpack.c.b16 %v4066, %v4064
      %v4095 = vpack.c.b16 %v4069, %v4067
      %v4096 = vpack.c.b16 %v4070, %v4068
      %v4097 = vpack.c.b16 %v4073, %v4071
      %v4098 = vpack.c.b16 %v4074, %v4072
      %v4099 = vpack.c.b16 %v4077, %v4075
      %v4100 = vpack.c.b16 %v4078, %v4076
      %v4101 = vpack.c.b16 %v4081, %v4079
      %v4102 = vpack.c.b16 %v4082, %v4080
      %v4124 = vsel %vm3967, %v3821, 0
      %4126 = vmatpush.bf16.msra.mxu0 %v4097
      %4127 = vmatpush.bf16.msra.mxu0 %v4095
      %4128 = vmatpush.bf16.msra.mxu0 %v4093
      %4129 = vmatpush.bf16.msra.mxu0 %v4091
      %4130 = vmatpush.bf16.msra.mxu0 %v4089
      %4131 = vmatpush.bf16.msra.mxu0 %v4087
      %4132 = vmatpush.bf16.msra.mxu0 %v4085
      %4133 = vmatpush.bf16.msra.mxu0 %v4083
      %4134 = vmatmul.bf16.gmra.mxu0 %v3820
      %v4135 = vpop.f32.mrf.mxu0
      %v4136 = vadd.f32 %v3994, %v4135
      %v4137 = vpop.f32.mrf.mxu0
      %4138 = vdwg.mxu0
      %4139 = vmatpush.bf16.msra.mxu0 0
      %4140 = vmatpush.bf16.msra.mxu0 0
      %4141 = vmatpush.bf16.msra.mxu0 0
      %4142 = vmatpush.bf16.msra.mxu0 0
      %4143 = vmatpush.bf16.msra.mxu0 0
      %4144 = vmatpush.bf16.msra.mxu0 0
      %4145 = vmatpush.bf16.msra.mxu0 %v4101
      %4146 = vmatpush.bf16.msra.mxu0 %v4099
      %4147 = vmatmul.bf16.gmra.mxu0 %v4124
      %v4148 = vpop.f32.mrf.mxu0
      %v4149 = vadd.f32 %v4136, %v4148
      %v4150 = vpop.f32.mrf.mxu0
      %4151 = vdwg.mxu0
      %4152 = vmatpush.bf16.msra.mxu0 %v4098
      %4153 = vmatpush.bf16.msra.mxu0 %v4096
      %4154 = vmatpush.bf16.msra.mxu0 %v4094
      %4155 = vmatpush.bf16.msra.mxu0 %v4092
      %4156 = vmatpush.bf16.msra.mxu0 %v4090
      %4157 = vmatpush.bf16.msra.mxu0 %v4088
      %4158 = vmatpush.bf16.msra.mxu0 %v4086
      %4159 = vmatpush.bf16.msra.mxu0 %v4084
      %4160 = vmatmul.bf16.gmra.mxu0 %v3820
      %v4161 = vpop.f32.mrf.mxu0
      %v4162 = vadd.f32 %v4020, %v4161
      %v4163 = vpop.f32.mrf.mxu0
      %4164 = vdwg.mxu0
      %4165 = vmatpush.bf16.msra.mxu0 0
      %4166 = vmatpush.bf16.msra.mxu0 0
      %4167 = vmatpush.bf16.msra.mxu0 0
      %4168 = vmatpush.bf16.msra.mxu0 0
      %4169 = vmatpush.bf16.msra.mxu0 0
      %4170 = vmatpush.bf16.msra.mxu0 0
      %4171 = vmatpush.bf16.msra.mxu0 %v4102
      %4172 = vmatpush.bf16.msra.mxu0 %v4100
      %4173 = vmatmul.bf16.gmra.mxu0 %v4124
      %v4174 = vpop.f32.mrf.mxu0
      %v4175 = vadd.f32 %v4162, %v4174
      %v4176 = vpop.f32.mrf.mxu0
      %4177 = vdwg.mxu0
      %v4178 = vld [vmem:[%s7 + $0x140] sm:$0xff]
      %v4179 = vld [vmem:[%s7 + $0x148] sm:$0xff]
      %v4180 = vld [vmem:[%s7 + $0x150] sm:$0xff]
      %v4181 = vld [vmem:[%s7 + $0x158] sm:$0xff]
      %v4182 = vld [vmem:[%s7 + $0x160] sm:$0xff]
      %v4183 = vld [vmem:[%s7 + $0x168] sm:$0xff]
      %v4184 = vld [vmem:[%s7 + $0x170] sm:$0xff]
      %v4185 = vld [vmem:[%s7 + $0x178] sm:$0xff]
      %v4186 = vld [vmem:[%s7 + $0x180] sm:$0xff]
      %v4187 = vld [vmem:[%s7 + $0x188] sm:$0xff]
      %v4188 = vld [vmem:[%s7 + $0x190] sm:$0xff]
      %v4189 = vld [vmem:[%s7 + $0x198] sm:$0xff]
      %v4190 = vld [vmem:[%s7 + $0x1a0] sm:$0xff]
      %v4191 = vld [vmem:[%s7 + $0x1a8] sm:$0xff]
      %v4192 = vld [vmem:[%s7 + $0x1b0] sm:$0xff]
      %v4193 = vld [vmem:[%s7 + $0x1b8] sm:$0xff]
      %v4194 = vld [vmem:[%s7 + $0x1c0] sm:$0xff]
      %v4195 = vld [vmem:[%s7 + $0x1c8] sm:$0xff]
      %v4196 = vld [vmem:[%s7 + $0x1d0] sm:$0xff]
      %v4197 = vld [vmem:[%s7 + $0x1d8] sm:$0xff]
      %v4198 = vrot.slane %v3820, 2
      %v4199 = vrot.slane %v3821, 2
      %v4221 = vunpack.c.l.b16 %v4178
      %v4222 = vunpack.c.h.b16 %v4178
      %v4223 = vunpack.c.l.b16 %v4179
      %v4224 = vunpack.c.h.b16 %v4179
      %v4225 = vunpack.c.l.b16 %v4180
      %v4226 = vunpack.c.h.b16 %v4180
      %v4227 = vunpack.c.l.b16 %v4181
      %v4228 = vunpack.c.h.b16 %v4181
      %v4229 = vunpack.c.l.b16 %v4182
      %v4230 = vunpack.c.h.b16 %v4182
      %v4231 = vunpack.c.l.b16 %v4183
      %v4232 = vunpack.c.h.b16 %v4183
      %v4233 = vunpack.c.l.b16 %v4184
      %v4234 = vunpack.c.h.b16 %v4184
      %v4235 = vunpack.c.l.b16 %v4185
      %v4236 = vunpack.c.h.b16 %v4185
      %v4237 = vunpack.c.l.b16 %v4186
      %v4238 = vunpack.c.h.b16 %v4186
      %v4239 = vunpack.c.l.b16 %v4187
      %v4240 = vunpack.c.h.b16 %v4187
      %v4241 = vunpack.c.l.b16 %v4188
      %v4242 = vunpack.c.h.b16 %v4188
      %v4243 = vunpack.c.l.b16 %v4189
      %v4244 = vunpack.c.h.b16 %v4189
      %v4245 = vunpack.c.l.b16 %v4190
      %v4246 = vunpack.c.h.b16 %v4190
      %v4247 = vunpack.c.l.b16 %v4191
      %v4248 = vunpack.c.h.b16 %v4191
      %v4249 = vunpack.c.l.b16 %v4192
      %v4250 = vunpack.c.h.b16 %v4192
      %v4251 = vunpack.c.l.b16 %v4193
      %v4252 = vunpack.c.h.b16 %v4193
      %v4253 = vunpack.c.l.b16 %v4194
      %v4254 = vunpack.c.h.b16 %v4194
      %v4255 = vunpack.c.l.b16 %v4195
      %v4256 = vunpack.c.h.b16 %v4195
      %v4257 = vunpack.c.l.b16 %v4196
      %v4258 = vunpack.c.h.b16 %v4196
      %v4259 = vunpack.c.l.b16 %v4197
      %v4260 = vunpack.c.h.b16 %v4197
      %v4261 = vpack.c.b16 %v4223, %v4221
      %v4262 = vpack.c.b16 %v4224, %v4222
      %v4263 = vpack.c.b16 %v4227, %v4225
      %v4264 = vpack.c.b16 %v4228, %v4226
      %v4265 = vpack.c.b16 %v4231, %v4229
      %v4266 = vpack.c.b16 %v4232, %v4230
      %v4267 = vpack.c.b16 %v4235, %v4233
      %v4268 = vpack.c.b16 %v4236, %v4234
      %v4269 = vpack.c.b16 %v4239, %v4237
      %v4270 = vpack.c.b16 %v4240, %v4238
      %v4271 = vpack.c.b16 %v4243, %v4241
      %v4272 = vpack.c.b16 %v4244, %v4242
      %v4273 = vpack.c.b16 %v4247, %v4245
      %v4274 = vpack.c.b16 %v4248, %v4246
      %v4275 = vpack.c.b16 %v4251, %v4249
      %v4276 = vpack.c.b16 %v4252, %v4250
      %v4277 = vpack.c.b16 %v4255, %v4253
      %v4278 = vpack.c.b16 %v4256, %v4254
      %v4279 = vpack.c.b16 %v4259, %v4257
      %v4280 = vpack.c.b16 %v4260, %v4258
      %v4302 = vsel %vm3967, %v4199, 0
      %4304 = vmatpush.bf16.msra.mxu0 %v4275
      %4305 = vmatpush.bf16.msra.mxu0 %v4273
      %4306 = vmatpush.bf16.msra.mxu0 %v4271
      %4307 = vmatpush.bf16.msra.mxu0 %v4269
      %4308 = vmatpush.bf16.msra.mxu0 %v4267
      %4309 = vmatpush.bf16.msra.mxu0 %v4265
      %4310 = vmatpush.bf16.msra.mxu0 %v4263
      %4311 = vmatpush.bf16.msra.mxu0 %v4261
      %4312 = vmatmul.bf16.gmra.mxu0 %v4198
      %v4313 = vpop.f32.mrf.mxu0
      %v4314 = vadd.f32 0.0, %v4313
      %v4315 = vpop.f32.mrf.mxu0
      %4316 = vdwg.mxu0
      %4317 = vmatpush.bf16.msra.mxu0 0
      %4318 = vmatpush.bf16.msra.mxu0 0
      %4319 = vmatpush.bf16.msra.mxu0 0
      %4320 = vmatpush.bf16.msra.mxu0 0
      %4321 = vmatpush.bf16.msra.mxu0 0
      %4322 = vmatpush.bf16.msra.mxu0 0
      %4323 = vmatpush.bf16.msra.mxu0 %v4279
      %4324 = vmatpush.bf16.msra.mxu0 %v4277
      %4325 = vmatmul.bf16.gmra.mxu0 %v4302
      %v4326 = vpop.f32.mrf.mxu0
      %v4327 = vadd.f32 %v4314, %v4326
      %v4328 = vpop.f32.mrf.mxu0
      %4329 = vdwg.mxu0
      %4330 = vmatpush.bf16.msra.mxu0 %v4276
      %4331 = vmatpush.bf16.msra.mxu0 %v4274
      %4332 = vmatpush.bf16.msra.mxu0 %v4272
      %4333 = vmatpush.bf16.msra.mxu0 %v4270
      %4334 = vmatpush.bf16.msra.mxu0 %v4268
      %4335 = vmatpush.bf16.msra.mxu0 %v4266
      %4336 = vmatpush.bf16.msra.mxu0 %v4264
      %4337 = vmatpush.bf16.msra.mxu0 %v4262
      %4338 = vmatmul.bf16.gmra.mxu0 %v4198
      %v4339 = vpop.f32.mrf.mxu0
      %v4340 = vadd.f32 0.0, %v4339
      %v4341 = vpop.f32.mrf.mxu0
      %4342 = vdwg.mxu0
      %4343 = vmatpush.bf16.msra.mxu0 0
      %4344 = vmatpush.bf16.msra.mxu0 0
      %4345 = vmatpush.bf16.msra.mxu0 0
      %4346 = vmatpush.bf16.msra.mxu0 0
      %4347 = vmatpush.bf16.msra.mxu0 0
      %4348 = vmatpush.bf16.msra.mxu0 0
      %4349 = vmatpush.bf16.msra.mxu0 %v4280
      %4350 = vmatpush.bf16.msra.mxu0 %v4278
      %4351 = vmatmul.bf16.gmra.mxu0 %v4302
      %v4352 = vpop.f32.mrf.mxu0
      %v4353 = vadd.f32 %v4340, %v4352
      %v4354 = vpop.f32.mrf.mxu0
      %4355 = vdwg.mxu0
      %v4356 = vadd.f32 %v4149, %v4327
      %v4357 = vadd.f32 %v4175, %v4353
      %v4358 = vld [vmem:[%s7 + $0x1e0] sm:$0xff]
      %v4359 = vld [vmem:[%s7 + $0x1e8] sm:$0xff]
      %v4360 = vld [vmem:[%s7 + $0x1f0] sm:$0xff]
      %v4361 = vld [vmem:[%s7 + $0x1f8] sm:$0xff]
      %v4362 = vld [vmem:[%s7 + $0x200] sm:$0xff]
      %v4363 = vld [vmem:[%s7 + $0x208] sm:$0xff]
      %v4364 = vld [vmem:[%s7 + $0x210] sm:$0xff]
      %v4365 = vld [vmem:[%s7 + $0x218] sm:$0xff]
      %v4366 = vld [vmem:[%s7 + $0x220] sm:$0xff]
      %v4367 = vld [vmem:[%s7 + $0x228] sm:$0xff]
      %v4368 = vld [vmem:[%s7 + $0x230] sm:$0xff]
      %v4369 = vld [vmem:[%s7 + $0x238] sm:$0xff]
      %v4370 = vld [vmem:[%s7 + $0x240] sm:$0xff]
      %v4371 = vld [vmem:[%s7 + $0x248] sm:$0xff]
      %v4372 = vld [vmem:[%s7 + $0x250] sm:$0xff]
      %v4373 = vld [vmem:[%s7 + $0x258] sm:$0xff]
      %v4374 = vld [vmem:[%s7 + $0x260] sm:$0xff]
      %v4375 = vld [vmem:[%s7 + $0x268] sm:$0xff]
      %v4376 = vld [vmem:[%s7 + $0x270] sm:$0xff]
      %v4377 = vld [vmem:[%s7 + $0x278] sm:$0xff]
      %v4378 = vrot.slane %v3820, 3
      %v4379 = vrot.slane %v3821, 3
      %v4401 = vunpack.c.l.b16 %v4358
      %v4402 = vunpack.c.h.b16 %v4358
      %v4403 = vunpack.c.l.b16 %v4359
      %v4404 = vunpack.c.h.b16 %v4359
      %v4405 = vunpack.c.l.b16 %v4360
      %v4406 = vunpack.c.h.b16 %v4360
      %v4407 = vunpack.c.l.b16 %v4361
      %v4408 = vunpack.c.h.b16 %v4361
      %v4409 = vunpack.c.l.b16 %v4362
      %v4410 = vunpack.c.h.b16 %v4362
      %v4411 = vunpack.c.l.b16 %v4363
      %v4412 = vunpack.c.h.b16 %v4363
      %v4413 = vunpack.c.l.b16 %v4364
      %v4414 = vunpack.c.h.b16 %v4364
      %v4415 = vunpack.c.l.b16 %v4365
      %v4416 = vunpack.c.h.b16 %v4365
      %v4417 = vunpack.c.l.b16 %v4366
      %v4418 = vunpack.c.h.b16 %v4366
      %v4419 = vunpack.c.l.b16 %v4367
      %v4420 = vunpack.c.h.b16 %v4367
      %v4421 = vunpack.c.l.b16 %v4368
      %v4422 = vunpack.c.h.b16 %v4368
      %v4423 = vunpack.c.l.b16 %v4369
      %v4424 = vunpack.c.h.b16 %v4369
      %v4425 = vunpack.c.l.b16 %v4370
      %v4426 = vunpack.c.h.b16 %v4370
      %v4427 = vunpack.c.l.b16 %v4371
      %v4428 = vunpack.c.h.b16 %v4371
      %v4429 = vunpack.c.l.b16 %v4372
      %v4430 = vunpack.c.h.b16 %v4372
      %v4431 = vunpack.c.l.b16 %v4373
      %v4432 = vunpack.c.h.b16 %v4373
      %v4433 = vunpack.c.l.b16 %v4374
      %v4434 = vunpack.c.h.b16 %v4374
      %v4435 = vunpack.c.l.b16 %v4375
      %v4436 = vunpack.c.h.b16 %v4375
      %v4437 = vunpack.c.l.b16 %v4376
      %v4438 = vunpack.c.h.b16 %v4376
      %v4439 = vunpack.c.l.b16 %v4377
      %v4440 = vunpack.c.h.b16 %v4377
      %v4441 = vpack.c.b16 %v4403, %v4401
      %v4442 = vpack.c.b16 %v4404, %v4402
      %v4443 = vpack.c.b16 %v4407, %v4405
      %v4444 = vpack.c.b16 %v4408, %v4406
      %v4445 = vpack.c.b16 %v4411, %v4409
      %v4446 = vpack.c.b16 %v4412, %v4410
      %v4447 = vpack.c.b16 %v4415, %v4413
      %v4448 = vpack.c.b16 %v4416, %v4414
      %v4449 = vpack.c.b16 %v4419, %v4417
      %v4450 = vpack.c.b16 %v4420, %v4418
      %v4451 = vpack.c.b16 %v4423, %v4421
      %v4452 = vpack.c.b16 %v4424, %v4422
      %v4453 = vpack.c.b16 %v4427, %v4425
      %v4454 = vpack.c.b16 %v4428, %v4426
      %v4455 = vpack.c.b16 %v4431, %v4429
      %v4456 = vpack.c.b16 %v4432, %v4430
      %v4457 = vpack.c.b16 %v4435, %v4433
      %v4458 = vpack.c.b16 %v4436, %v4434
      %v4459 = vpack.c.b16 %v4439, %v4437
      %v4460 = vpack.c.b16 %v4440, %v4438
      %v4482 = vsel %vm3967, %v4379, 0
      %4484 = vmatpush.bf16.msra.mxu0 %v4455
      %4485 = vmatpush.bf16.msra.mxu0 %v4453
      %4486 = vmatpush.bf16.msra.mxu0 %v4451
      %4487 = vmatpush.bf16.msra.mxu0 %v4449
      %4488 = vmatpush.bf16.msra.mxu0 %v4447
      %4489 = vmatpush.bf16.msra.mxu0 %v4445
      %4490 = vmatpush.bf16.msra.mxu0 %v4443
      %4491 = vmatpush.bf16.msra.mxu0 %v4441
      %4492 = vmatmul.bf16.gmra.mxu0 %v4378
      %v4493 = vpop.f32.mrf.mxu0
      %v4494 = vadd.f32 0.0, %v4493
      %v4495 = vpop.f32.mrf.mxu0
      %4496 = vdwg.mxu0
      %4497 = vmatpush.bf16.msra.mxu0 0
      %4498 = vmatpush.bf16.msra.mxu0 0
      %4499 = vmatpush.bf16.msra.mxu0 0
      %4500 = vmatpush.bf16.msra.mxu0 0
      %4501 = vmatpush.bf16.msra.mxu0 0
      %4502 = vmatpush.bf16.msra.mxu0 0
      %4503 = vmatpush.bf16.msra.mxu0 %v4459
      %4504 = vmatpush.bf16.msra.mxu0 %v4457
      %4505 = vmatmul.bf16.gmra.mxu0 %v4482
      %v4506 = vpop.f32.mrf.mxu0
      %v4507 = vadd.f32 %v4494, %v4506
      %v4508 = vpop.f32.mrf.mxu0
      %4509 = vdwg.mxu0
      %4510 = vmatpush.bf16.msra.mxu0 %v4456
      %4511 = vmatpush.bf16.msra.mxu0 %v4454
      %4512 = vmatpush.bf16.msra.mxu0 %v4452
      %4513 = vmatpush.bf16.msra.mxu0 %v4450
      %4514 = vmatpush.bf16.msra.mxu0 %v4448
      %4515 = vmatpush.bf16.msra.mxu0 %v4446
      %4516 = vmatpush.bf16.msra.mxu0 %v4444
      %4517 = vmatpush.bf16.msra.mxu0 %v4442
      %4518 = vmatmul.bf16.gmra.mxu0 %v4378
      %v4519 = vpop.f32.mrf.mxu0
      %v4520 = vadd.f32 0.0, %v4519
      %v4521 = vpop.f32.mrf.mxu0
      %4522 = vdwg.mxu0
      %4523 = vmatpush.bf16.msra.mxu0 0
      %4524 = vmatpush.bf16.msra.mxu0 0
      %4525 = vmatpush.bf16.msra.mxu0 0
      %4526 = vmatpush.bf16.msra.mxu0 0
      %4527 = vmatpush.bf16.msra.mxu0 0
      %4528 = vmatpush.bf16.msra.mxu0 0
      %4529 = vmatpush.bf16.msra.mxu0 %v4460
      %4530 = vmatpush.bf16.msra.mxu0 %v4458
      %4531 = vmatmul.bf16.gmra.mxu0 %v4482
      %v4532 = vpop.f32.mrf.mxu0
      %v4533 = vadd.f32 %v4520, %v4532
      %v4534 = vpop.f32.mrf.mxu0
      %4535 = vdwg.mxu0
      %v4536 = vadd.f32 %v4356, %v4507
      %v4537 = vadd.f32 %v4357, %v4533
      %v4540 = vrot.slane %v3800, 1
      %v4541 = vrot.slane %v3801, 1
      %v4544 = vmax.f32 %v3800, %v4540
      %v4545 = vmax.f32 %v3801, %v4541
      %v4546 = vadd.f32 %v4544, %v3812
      %v4547 = vadd.f32 %v4545, %v3813
      %v4548 = vmax.f32 %v4546, 0.0
      %v4549 = vmax.f32 %v4547, 0.0
      %v4550 = vpack.c.bf16 %v4548, %v4548
      %v4551 = vpack.c.bf16 %v4549, %v4549
      %v4552 = vld [vmem:[%s7 + $0x280] sm:$0xff]
      %v4553 = vld [vmem:[%s7 + $0x288] sm:$0xff]
      %v4554 = vld [vmem:[%s7 + $0x290] sm:$0xff]
      %v4555 = vld [vmem:[%s7 + $0x298] sm:$0xff]
      %v4556 = vld [vmem:[%s7 + $0x2a0] sm:$0xff]
      %v4557 = vld [vmem:[%s7 + $0x2a8] sm:$0xff]
      %v4558 = vld [vmem:[%s7 + $0x2b0] sm:$0xff]
      %v4559 = vld [vmem:[%s7 + $0x2b8] sm:$0xff]
      %v4560 = vld [vmem:[%s7 + $0x2c0] sm:$0xff]
      %v4561 = vld [vmem:[%s7 + $0x2c8] sm:$0xff]
      %v4562 = vld [vmem:[%s7 + $0x2d0] sm:$0xff]
      %v4563 = vld [vmem:[%s7 + $0x2d8] sm:$0xff]
      %v4564 = vld [vmem:[%s7 + $0x2e0] sm:$0xff]
      %v4565 = vld [vmem:[%s7 + $0x2e8] sm:$0xff]
      %v4566 = vld [vmem:[%s7 + $0x2f0] sm:$0xff]
      %v4567 = vld [vmem:[%s7 + $0x2f8] sm:$0xff]
      %v4568 = vld [vmem:[%s7 + $0x300] sm:$0xff]
      %v4569 = vld [vmem:[%s7 + $0x308] sm:$0xff]
      %v4570 = vld [vmem:[%s7 + $0x310] sm:$0xff]
      %v4571 = vld [vmem:[%s7 + $0x318] sm:$0xff]
      %v4592 = vunpack.c.l.b16 %v4552
      %v4593 = vunpack.c.h.b16 %v4552
      %v4594 = vunpack.c.l.b16 %v4553
      %v4595 = vunpack.c.h.b16 %v4553
      %v4596 = vunpack.c.l.b16 %v4554
      %v4597 = vunpack.c.h.b16 %v4554
      %v4598 = vunpack.c.l.b16 %v4555
      %v4599 = vunpack.c.h.b16 %v4555
      %v4600 = vunpack.c.l.b16 %v4556
      %v4601 = vunpack.c.h.b16 %v4556
      %v4602 = vunpack.c.l.b16 %v4557
      %v4603 = vunpack.c.h.b16 %v4557
      %v4604 = vunpack.c.l.b16 %v4558
      %v4605 = vunpack.c.h.b16 %v4558
      %v4606 = vunpack.c.l.b16 %v4559
      %v4607 = vunpack.c.h.b16 %v4559
      %v4608 = vunpack.c.l.b16 %v4560
      %v4609 = vunpack.c.h.b16 %v4560
      %v4610 = vunpack.c.l.b16 %v4561
      %v4611 = vunpack.c.h.b16 %v4561
      %v4612 = vunpack.c.l.b16 %v4562
      %v4613 = vunpack.c.h.b16 %v4562
      %v4614 = vunpack.c.l.b16 %v4563
      %v4615 = vunpack.c.h.b16 %v4563
      %v4616 = vunpack.c.l.b16 %v4564
      %v4617 = vunpack.c.h.b16 %v4564
      %v4618 = vunpack.c.l.b16 %v4565
      %v4619 = vunpack.c.h.b16 %v4565
      %v4620 = vunpack.c.l.b16 %v4566
      %v4621 = vunpack.c.h.b16 %v4566
      %v4622 = vunpack.c.l.b16 %v4567
      %v4623 = vunpack.c.h.b16 %v4567
      %v4624 = vunpack.c.l.b16 %v4568
      %v4625 = vunpack.c.h.b16 %v4568
      %v4626 = vunpack.c.l.b16 %v4569
      %v4627 = vunpack.c.h.b16 %v4569
      %v4628 = vunpack.c.l.b16 %v4570
      %v4629 = vunpack.c.h.b16 %v4570
      %v4630 = vunpack.c.l.b16 %v4571
      %v4631 = vunpack.c.h.b16 %v4571
      %v4632 = vpack.c.b16 %v4594, %v4592
      %v4633 = vpack.c.b16 %v4595, %v4593
      %v4634 = vpack.c.b16 %v4598, %v4596
      %v4635 = vpack.c.b16 %v4599, %v4597
      %v4636 = vpack.c.b16 %v4602, %v4600
      %v4637 = vpack.c.b16 %v4603, %v4601
      %v4638 = vpack.c.b16 %v4606, %v4604
      %v4639 = vpack.c.b16 %v4607, %v4605
      %v4640 = vpack.c.b16 %v4610, %v4608
      %v4641 = vpack.c.b16 %v4611, %v4609
      %v4642 = vpack.c.b16 %v4614, %v4612
      %v4643 = vpack.c.b16 %v4615, %v4613
      %v4644 = vpack.c.b16 %v4618, %v4616
      %v4645 = vpack.c.b16 %v4619, %v4617
      %v4646 = vpack.c.b16 %v4622, %v4620
      %v4647 = vpack.c.b16 %v4623, %v4621
      %v4648 = vpack.c.b16 %v4626, %v4624
      %v4649 = vpack.c.b16 %v4627, %v4625
      %v4650 = vpack.c.b16 %v4630, %v4628
      %v4651 = vpack.c.b16 %v4631, %v4629
      %v4673 = vsel %vm3967, %v4551, 0
      %4675 = vmatpush.bf16.msra.mxu0 %v4646
      %4676 = vmatpush.bf16.msra.mxu0 %v4644
      %4677 = vmatpush.bf16.msra.mxu0 %v4642
      %4678 = vmatpush.bf16.msra.mxu0 %v4640
      %4679 = vmatpush.bf16.msra.mxu0 %v4638
      %4680 = vmatpush.bf16.msra.mxu0 %v4636
      %4681 = vmatpush.bf16.msra.mxu0 %v4634
      %4682 = vmatpush.bf16.msra.mxu0 %v4632
      %4683 = vmatmul.bf16.gmra.mxu0 %v4550
      %v4684 = vpop.f32.mrf.mxu0
      %v4685 = vadd.f32 0.0, %v4684
      %v4686 = vpop.f32.mrf.mxu0
      %4687 = vdwg.mxu0
      %4688 = vmatpush.bf16.msra.mxu0 0
      %4689 = vmatpush.bf16.msra.mxu0 0
      %4690 = vmatpush.bf16.msra.mxu0 0
      %4691 = vmatpush.bf16.msra.mxu0 0
      %4692 = vmatpush.bf16.msra.mxu0 0
      %4693 = vmatpush.bf16.msra.mxu0 0
      %4694 = vmatpush.bf16.msra.mxu0 %v4650
      %4695 = vmatpush.bf16.msra.mxu0 %v4648
      %4696 = vmatmul.bf16.gmra.mxu0 %v4673
      %v4697 = vpop.f32.mrf.mxu0
      %v4698 = vadd.f32 %v4685, %v4697
      %v4699 = vpop.f32.mrf.mxu0
      %4700 = vdwg.mxu0
      %4701 = vmatpush.bf16.msra.mxu0 %v4647
      %4702 = vmatpush.bf16.msra.mxu0 %v4645
      %4703 = vmatpush.bf16.msra.mxu0 %v4643
      %4704 = vmatpush.bf16.msra.mxu0 %v4641
      %4705 = vmatpush.bf16.msra.mxu0 %v4639
      %4706 = vmatpush.bf16.msra.mxu0 %v4637
      %4707 = vmatpush.bf16.msra.mxu0 %v4635
      %4708 = vmatpush.bf16.msra.mxu0 %v4633
      %4709 = vmatmul.bf16.gmra.mxu0 %v4550
      %v4710 = vpop.f32.mrf.mxu0
      %v4711 = vadd.f32 0.0, %v4710
      %v4712 = vpop.f32.mrf.mxu0
      %4713 = vdwg.mxu0
      %4714 = vmatpush.bf16.msra.mxu0 0
      %4715 = vmatpush.bf16.msra.mxu0 0
      %4716 = vmatpush.bf16.msra.mxu0 0
      %4717 = vmatpush.bf16.msra.mxu0 0
      %4718 = vmatpush.bf16.msra.mxu0 0
      %4719 = vmatpush.bf16.msra.mxu0 0
      %4720 = vmatpush.bf16.msra.mxu0 %v4651
      %4721 = vmatpush.bf16.msra.mxu0 %v4649
      %4722 = vmatmul.bf16.gmra.mxu0 %v4673
      %v4723 = vpop.f32.mrf.mxu0
      %v4724 = vadd.f32 %v4711, %v4723
      %v4725 = vpop.f32.mrf.mxu0
      %4726 = vdwg.mxu0
      %v4727 = vadd.f32 %v4536, %v4698
      %v4728 = vadd.f32 %v4537, %v4724
      %v4729 = vld [vmem:[%s8] sm:$0x3]
      %v4731 = vperm.slane %v4729, 0
      %v4732 = vperm.slane %v4729, 1
      %v4735 = vadd.f32 %v4727, %v4731
      %v4736 = vadd.f32 %v4728, %v4732
      %v4737 = vmax.f32 %v4735, 0.0
      %v4738 = vmax.f32 %v4736, 0.0
      %v4739 = vpack.c.bf16 %v4737, %v4737
      %v4740 = vpack.c.bf16 %v4738, %v4738
      %v4741 = vld [vmem:[%s9] sm:$0xff]
      %v4742 = vld [vmem:[%s9 + $0x8] sm:$0xff]
      %v4743 = vld [vmem:[%s9 + $0x10] sm:$0xff]
      %v4744 = vld [vmem:[%s9 + $0x18] sm:$0xff]
      %v4745 = vld [vmem:[%s9 + $0x20] sm:$0xff]
      %v4746 = vld [vmem:[%s9 + $0x28] sm:$0xff]
      %v4747 = vld [vmem:[%s9 + $0x30] sm:$0xff]
      %v4748 = vld [vmem:[%s9 + $0x38] sm:$0xff]
      %v4749 = vld [vmem:[%s9 + $0x40] sm:$0xff]
      %v4750 = vld [vmem:[%s9 + $0x48] sm:$0xff]
      %v4751 = vld [vmem:[%s9 + $0x50] sm:$0xff]
      %v4752 = vld [vmem:[%s9 + $0x58] sm:$0xff]
      %v4753 = vld [vmem:[%s9 + $0x60] sm:$0xff]
      %v4754 = vld [vmem:[%s9 + $0x68] sm:$0xff]
      %v4755 = vld [vmem:[%s9 + $0x70] sm:$0xff]
      %v4756 = vld [vmem:[%s9 + $0x78] sm:$0xff]
      %v4757 = vld [vmem:[%s9 + $0x80] sm:$0xff]
      %v4758 = vld [vmem:[%s9 + $0x88] sm:$0xff]
      %v4759 = vld [vmem:[%s9 + $0x90] sm:$0xff]
      %v4760 = vld [vmem:[%s9 + $0x98] sm:$0xff]
      %v4761 = vld [vmem:[%s9 + $0xa0] sm:$0xff]
      %v4762 = vld [vmem:[%s9 + $0xa8] sm:$0xff]
      %v4763 = vld [vmem:[%s9 + $0xb0] sm:$0xff]
      %v4764 = vld [vmem:[%s9 + $0xb8] sm:$0xff]
      %v4765 = vld [vmem:[%s9 + $0xc0] sm:$0xff]
      %v4766 = vld [vmem:[%s9 + $0xc8] sm:$0xff]
      %v4767 = vld [vmem:[%s9 + $0xd0] sm:$0xff]
      %v4768 = vld [vmem:[%s9 + $0xd8] sm:$0xff]
      %v4769 = vld [vmem:[%s9 + $0xe0] sm:$0xff]
      %v4770 = vld [vmem:[%s9 + $0xe8] sm:$0xff]
      %v4771 = vld [vmem:[%s10] sm:$0x3]
      %v4802 = vunpack.c.l.b16 %v4741
      %v4803 = vunpack.c.h.b16 %v4741
      %v4804 = vunpack.c.l.b16 %v4742
      %v4805 = vunpack.c.h.b16 %v4742
      %v4806 = vunpack.c.l.b16 %v4743
      %v4807 = vunpack.c.h.b16 %v4743
      %v4808 = vunpack.c.l.b16 %v4744
      %v4809 = vunpack.c.h.b16 %v4744
      %v4810 = vunpack.c.l.b16 %v4745
      %v4811 = vunpack.c.h.b16 %v4745
      %v4812 = vunpack.c.l.b16 %v4746
      %v4813 = vunpack.c.h.b16 %v4746
      %v4814 = vunpack.c.l.b16 %v4747
      %v4815 = vunpack.c.h.b16 %v4747
      %v4816 = vunpack.c.l.b16 %v4748
      %v4817 = vunpack.c.h.b16 %v4748
      %v4818 = vunpack.c.l.b16 %v4749
      %v4819 = vunpack.c.h.b16 %v4749
      %v4820 = vunpack.c.l.b16 %v4750
      %v4821 = vunpack.c.h.b16 %v4750
      %v4822 = vunpack.c.l.b16 %v4751
      %v4823 = vunpack.c.h.b16 %v4751
      %v4824 = vunpack.c.l.b16 %v4752
      %v4825 = vunpack.c.h.b16 %v4752
      %v4826 = vunpack.c.l.b16 %v4753
      %v4827 = vunpack.c.h.b16 %v4753
      %v4828 = vunpack.c.l.b16 %v4754
      %v4829 = vunpack.c.h.b16 %v4754
      %v4830 = vunpack.c.l.b16 %v4755
      %v4831 = vunpack.c.h.b16 %v4755
      %v4832 = vunpack.c.l.b16 %v4756
      %v4833 = vunpack.c.h.b16 %v4756
      %v4834 = vunpack.c.l.b16 %v4757
      %v4835 = vunpack.c.h.b16 %v4757
      %v4836 = vunpack.c.l.b16 %v4758
      %v4837 = vunpack.c.h.b16 %v4758
      %v4838 = vunpack.c.l.b16 %v4759
      %v4839 = vunpack.c.h.b16 %v4759
      %v4840 = vunpack.c.l.b16 %v4760
      %v4841 = vunpack.c.h.b16 %v4760
      %v4842 = vunpack.c.l.b16 %v4761
      %v4843 = vunpack.c.h.b16 %v4761
      %v4844 = vunpack.c.l.b16 %v4762
      %v4845 = vunpack.c.h.b16 %v4762
      %v4846 = vunpack.c.l.b16 %v4763
      %v4847 = vunpack.c.h.b16 %v4763
      %v4848 = vunpack.c.l.b16 %v4764
      %v4849 = vunpack.c.h.b16 %v4764
      %v4850 = vunpack.c.l.b16 %v4765
      %v4851 = vunpack.c.h.b16 %v4765
      %v4852 = vunpack.c.l.b16 %v4766
      %v4853 = vunpack.c.h.b16 %v4766
      %v4854 = vunpack.c.l.b16 %v4767
      %v4855 = vunpack.c.h.b16 %v4767
      %v4856 = vunpack.c.l.b16 %v4768
      %v4857 = vunpack.c.h.b16 %v4768
      %v4858 = vunpack.c.l.b16 %v4769
      %v4859 = vunpack.c.h.b16 %v4769
      %v4860 = vunpack.c.l.b16 %v4770
      %v4861 = vunpack.c.h.b16 %v4770
      %v4862 = vpack.c.b16 %v4804, %v4802
      %v4863 = vpack.c.b16 %v4805, %v4803
      %v4864 = vpack.c.b16 %v4808, %v4806
      %v4865 = vpack.c.b16 %v4809, %v4807
      %v4866 = vpack.c.b16 %v4812, %v4810
      %v4867 = vpack.c.b16 %v4813, %v4811
      %v4868 = vpack.c.b16 %v4816, %v4814
      %v4869 = vpack.c.b16 %v4817, %v4815
      %v4870 = vpack.c.b16 %v4820, %v4818
      %v4871 = vpack.c.b16 %v4821, %v4819
      %v4872 = vpack.c.b16 %v4824, %v4822
      %v4873 = vpack.c.b16 %v4825, %v4823
      %v4874 = vpack.c.b16 %v4828, %v4826
      %v4875 = vpack.c.b16 %v4829, %v4827
      %v4876 = vpack.c.b16 %v4832, %v4830
      %v4877 = vpack.c.b16 %v4833, %v4831
      %v4878 = vpack.c.b16 %v4836, %v4834
      %v4879 = vpack.c.b16 %v4837, %v4835
      %v4880 = vpack.c.b16 %v4840, %v4838
      %v4881 = vpack.c.b16 %v4841, %v4839
      %v4882 = vpack.c.b16 %v4844, %v4842
      %v4883 = vpack.c.b16 %v4845, %v4843
      %v4884 = vpack.c.b16 %v4848, %v4846
      %v4885 = vpack.c.b16 %v4849, %v4847
      %v4886 = vpack.c.b16 %v4852, %v4850
      %v4887 = vpack.c.b16 %v4853, %v4851
      %v4888 = vpack.c.b16 %v4856, %v4854
      %v4889 = vpack.c.b16 %v4857, %v4855
      %v4890 = vpack.c.b16 %v4860, %v4858
      %v4891 = vpack.c.b16 %v4861, %v4859
      %v4923 = vperm.slane %v4771, 0
      %v4924 = vperm.slane %v4771, 1
      %vm4927 = vcmask 916480
      %v4929 = vsel %vm4927, %v4740, 0
      %4931 = vmatpush.bf16.msra.mxu0 %v4876
      %4932 = vmatpush.bf16.msra.mxu0 %v4874
      %4933 = vmatpush.bf16.msra.mxu0 %v4872
      %4934 = vmatpush.bf16.msra.mxu0 %v4870
      %4935 = vmatpush.bf16.msra.mxu0 %v4868
      %4936 = vmatpush.bf16.msra.mxu0 %v4866
      %4937 = vmatpush.bf16.msra.mxu0 %v4864
      %4938 = vmatpush.bf16.msra.mxu0 %v4862
      %4939 = vmatmul.bf16.gmra.mxu0 %v4739
      %v4940 = vpop.f32.mrf.mxu0
      %v4941 = vadd.f32 %v4923, %v4940
      %v4942 = vpop.f32.mrf.mxu0
      %4943 = vdwg.mxu0
      %4944 = vmatpush.bf16.msra.mxu0 0
      %4945 = vmatpush.bf16.msra.mxu0 %v4890
      %4946 = vmatpush.bf16.msra.mxu0 %v4888
      %4947 = vmatpush.bf16.msra.mxu0 %v4886
      %4948 = vmatpush.bf16.msra.mxu0 %v4884
      %4949 = vmatpush.bf16.msra.mxu0 %v4882
      %4950 = vmatpush.bf16.msra.mxu0 %v4880
      %4951 = vmatpush.bf16.msra.mxu0 %v4878
      %4952 = vmatmul.bf16.gmra.mxu0 %v4929
      %v4953 = vpop.f32.mrf.mxu0
      %v4954 = vadd.f32 %v4941, %v4953
      %v4955 = vpop.f32.mrf.mxu0
      %4956 = vdwg.mxu0
      %4957 = vmatpush.bf16.msra.mxu0 %v4877
      %4958 = vmatpush.bf16.msra.mxu0 %v4875
      %4959 = vmatpush.bf16.msra.mxu0 %v4873
      %4960 = vmatpush.bf16.msra.mxu0 %v4871
      %4961 = vmatpush.bf16.msra.mxu0 %v4869
      %4962 = vmatpush.bf16.msra.mxu0 %v4867
      %4963 = vmatpush.bf16.msra.mxu0 %v4865
      %4964 = vmatpush.bf16.msra.mxu0 %v4863
      %4965 = vmatmul.bf16.gmra.mxu0 %v4739
      %v4966 = vpop.f32.mrf.mxu0
      %v4967 = vadd.f32 %v4924, %v4966
      %v4968 = vpop.f32.mrf.mxu0
      %4969 = vdwg.mxu0
      %4970 = vmatpush.bf16.msra.mxu0 0
      %4971 = vmatpush.bf16.msra.mxu0 %v4891
      %4972 = vmatpush.bf16.msra.mxu0 %v4889
      %4973 = vmatpush.bf16.msra.mxu0 %v4887
      %4974 = vmatpush.bf16.msra.mxu0 %v4885
      %4975 = vmatpush.bf16.msra.mxu0 %v4883
      %4976 = vmatpush.bf16.msra.mxu0 %v4881
      %4977 = vmatpush.bf16.msra.mxu0 %v4879
      %4978 = vmatmul.bf16.gmra.mxu0 %v4929
      %v4979 = vpop.f32.mrf.mxu0
      %v4980 = vadd.f32 %v4967, %v4979
      %v4981 = vpop.f32.mrf.mxu0
      %4982 = vdwg.mxu0
      %v4983 = vmax.f32 %v4954, 0.0
      %v4984 = vmax.f32 %v4980, 0.0
      %v4985 = vpack.c.bf16 %v4983, %v4983
      %v4986 = vpack.c.bf16 %v4984, %v4984
      %v4987 = vld [vmem:[%s11] sm:$0xf]
      %v4988 = vld [vmem:[%s11 + $0x4] sm:$0xf]
      %v4989 = vld [vmem:[%s11 + $0x8] sm:$0xf]
      %v4990 = vld [vmem:[%s11 + $0xc] sm:$0xf]
      %v4991 = vld [vmem:[%s11 + $0x10] sm:$0xf]
      %v4992 = vld [vmem:[%s11 + $0x14] sm:$0xf]
      %v4993 = vld [vmem:[%s11 + $0x18] sm:$0xf]
      %v4994 = vld [vmem:[%s11 + $0x1c] sm:$0xf]
      %v4995 = vld [vmem:[%s11 + $0x20] sm:$0xf]
      %v4996 = vld [vmem:[%s11 + $0x24] sm:$0xf]
      %v4997 = vld [vmem:[%s11 + $0x28] sm:$0xf]
      %v4998 = vld [vmem:[%s11 + $0x2c] sm:$0xf]
      %v4999 = vld [vmem:[%s11 + $0x30] sm:$0xf]
      %v5000 = vld [vmem:[%s11 + $0x34] sm:$0xf]
      %v5001 = vld [vmem:[%s11 + $0x38] sm:$0xf]
      %v5002 = vld [vmem:[%s11 + $0x3c] sm:$0xf]
      %v5003 = vld [vmem:[%s11 + $0x40] sm:$0xf]
      %v5004 = vld [vmem:[%s11 + $0x44] sm:$0xf]
      %v5005 = vld [vmem:[%s11 + $0x48] sm:$0xf]
      %v5006 = vld [vmem:[%s11 + $0x4c] sm:$0xf]
      %v5007 = vld [vmem:[%s11 + $0x50] sm:$0xf]
      %v5008 = vld [vmem:[%s12] sm:$0x1]
      %v5030 = vunpack.c.l.b16 %v4987
      %v5031 = vunpack.c.l.b16 %v4988
      %v5032 = vunpack.c.l.b16 %v4989
      %v5033 = vunpack.c.l.b16 %v4990
      %v5034 = vunpack.c.l.b16 %v4991
      %v5035 = vunpack.c.l.b16 %v4992
      %v5036 = vunpack.c.l.b16 %v4993
      %v5037 = vunpack.c.l.b16 %v4994
      %v5038 = vunpack.c.l.b16 %v4995
      %v5039 = vunpack.c.l.b16 %v4996
      %v5040 = vunpack.c.l.b16 %v4997
      %v5041 = vunpack.c.l.b16 %v4998
      %v5042 = vunpack.c.l.b16 %v4999
      %v5043 = vunpack.c.l.b16 %v5000
      %v5044 = vunpack.c.l.b16 %v5001
      %v5045 = vunpack.c.l.b16 %v5002
      %v5046 = vunpack.c.l.b16 %v5003
      %v5047 = vunpack.c.l.b16 %v5004
      %v5048 = vunpack.c.l.b16 %v5005
      %v5049 = vunpack.c.l.b16 %v5006
      %v5050 = vunpack.c.l.b16 %v5007
      %v5051 = vpack.c.b16 %v5031, %v5030
      %v5052 = vpack.c.b16 %v5033, %v5032
      %v5053 = vpack.c.b16 %v5035, %v5034
      %v5054 = vpack.c.b16 %v5037, %v5036
      %v5055 = vpack.c.b16 %v5039, %v5038
      %v5056 = vpack.c.b16 %v5041, %v5040
      %v5057 = vpack.c.b16 %v5043, %v5042
      %v5058 = vpack.c.b16 %v5045, %v5044
      %v5059 = vpack.c.b16 %v5047, %v5046
      %v5060 = vpack.c.b16 %v5049, %v5048
      %v5061 = vpack.c.b16 %v5050, %v5050
      %v5073 = vsel %vm2024, %v4986, 0
      %v5076 = vsel %vm2028, %v5061, 0
      %5078 = vmatpush.bf16.msra.mxu0 %v5058
      %5079 = vmatpush.bf16.msra.mxu0 %v5057
      %5080 = vmatpush.bf16.msra.mxu0 %v5056
      %5081 = vmatpush.bf16.msra.mxu0 %v5055
      %5082 = vmatpush.bf16.msra.mxu0 %v5054
      %5083 = vmatpush.bf16.msra.mxu0 %v5053
      %5084 = vmatpush.bf16.msra.mxu0 %v5052
      %5085 = vmatpush.bf16.msra.mxu0 %v5051
      %5086 = vmatmul.bf16.gmra.mxu0 %v4985
      %v5087 = vpop.f32.mrf.mxu0
      %v5088 = vadd.f32 %v5008, %v5087
      %v5089 = vpop.f32.mrf.mxu0
      %5090 = vdwg.mxu0
      %5091 = vmatpush.bf16.msra.mxu0 0
      %5092 = vmatpush.bf16.msra.mxu0 0
      %5093 = vmatpush.bf16.msra.mxu0 0
      %5094 = vmatpush.bf16.msra.mxu0 0
      %5095 = vmatpush.bf16.msra.mxu0 0
      %5096 = vmatpush.bf16.msra.mxu0 %v5076
      %5097 = vmatpush.bf16.msra.mxu0 %v5060
      %5098 = vmatpush.bf16.msra.mxu0 %v5059
      %5099 = vmatmul.bf16.gmra.mxu0 %v5073
      %v5100 = vpop.f32.mrf.mxu0
      %v5101 = vadd.f32 %v5088, %v5100
      %v5102 = vpop.f32.mrf.mxu0
      %5103 = vdwg.mxu0
      %vm5104 = vcmask 319488
      %5105 = vst.msk [vmem:[%s436] sm:$0x1] %vm5104, %v5101
      %p5106 = scmp.lt.s32.totalorder %s24, 1
      %s5107 = scalar_select %p5106, %s24, 1
      %s5108 = scalar_lea.vmem %s13, %s5107
      // Predicated region
      $region73: #{packed_net_forward.1} parent=71 // pred_check
        %p5109 = pneg %p320
      $region74: #{packed_net_forward.1} parent=71 // pred_check_branch
        %5111 = sbr.rel (%p5109) target = $region76
      $region75: #{packed_net_forward.1} parent=71 // pred_region
        _
      $region76: #{packed_net_forward.1} parent=71 // pred_fallthru
        _
    $region72: #{packed_net_forward.1} parent=5 // pred_fallthru
      _
    %p5112 = scmp.le.s32.totalorder 2, %s19
    // Predicated region
    $region77: #{packed_net_forward.1} parent=5 // pred_check
      %p5113 = pneg %p5112
    $region78: #{packed_net_forward.1} parent=5 // pred_check_branch
      %5115 = sbr.rel (%p5113) target = $region80
    $region79: #{packed_net_forward.1} parent=5 // pred_region
      %s5116 = ssub.s32 %s19, 2
      // Predicated region
      $region81: #{packed_net_forward.1} parent=79 // pred_check
        %p5117 = pneg %p326
      $region82: #{packed_net_forward.1} parent=79 // pred_check_branch
        %5119 = sbr.rel (%p5117) target = $region84
      $region83: #{packed_net_forward.1} parent=79 // pred_region
        %p5120 = scmp.lt.s32.totalorder %s25, 1
        %s5121 = scalar_select %p5120, %s25, 1
        %s5122 = scalar_lea.vmem %s13, %s5121
      $region84: #{packed_net_forward.1} parent=79 // pred_fallthru
        _
    $region80: #{packed_net_forward.1} parent=5 // pred_fallthru
      _
  $region6: #{packed_net_forward.1} parent=0 // loop_footer
    %s23 = sadd.s32 1, %s19
  $region7: #{packed_net_forward.1} parent=0 // loop_footer_branch
    %18 = sbr.rel target = $region3
  $region8: #{packed_net_forward.1} parent=0 // loop_exit
    _

</llo_original>
